<compile_context>
chip_gen: v6e
topology: v6e:2x2x1
jax: 0.10.0
libtpu: 0.0.40
codegen_flags: <defaults>
</compile_context>

<pallas_src>
import functools

import jax
import jax.numpy as jnp
from jax import lax
from jax.experimental import pallas as pl
from jax.experimental.pallas import tpu as pltpu


# ---------- exact-ish GELU (erf via Abramowitz-Stegun 7.1.26) ----------------
_ERF_P = 0.3275911
_ERF_A = (0.254829592, -0.284496736, 1.421413741, -1.453152027, 1.061405429)


def _erf(x):
    a = jnp.abs(x)
    t = pl.reciprocal(1.0 + _ERF_P * a, approx=False)
    a1, a2, a3, a4, a5 = _ERF_A
    poly = t * (a1 + t * (a2 + t * (a3 + t * (a4 + t * a5))))
    r = 1.0 - poly * jnp.exp(-a * a)
    return jnp.where(x < 0.0, -r, r)


def _gelu_exact(x):
    # PyTorch F.gelu default (erf formulation); |error| < ~2e-7 absolute.
    return 0.5 * x * (1.0 + _erf(x * 0.7071067811865476))


# ------------------------------- kernel --------------------------------------
def ffn_kernel(x_ref, win_ref, bin_ref, wdw_ref, bdw_ref, wout_ref, bout_ref,
               o_ref, *, H, W):
    N = H * W
    x = x_ref[0]                                       # (N, C), input dtype
    c2 = bin_ref.shape[1]                              # 2 * hidden
    hid = c2 // 2

    # project_in: both gate halves fused into one MXU matmul, f32 accumulation.
    y = jnp.dot(x, win_ref[...], preferred_element_type=jnp.float32)
    y = y + bin_ref[...]                               # (N, 2*hid) f32

    # depthwise 3x3 conv (padding=1) as 9 shift-and-add taps on flat (N, C2).
    col = lax.broadcasted_iota(jnp.int32, (N, 1), 0) % W
    wdw = wdw_ref[...]                                 # (9, 2*hid) f32
    acc = jnp.zeros_like(y)
    for ky in range(3):
        for kx in range(3):
            dy, dx = ky - 1, kx - 1
            s = dy * W + dx                            # linear source offset
            if s > 0:
                z = jnp.concatenate(
                    [y[s:, :], jnp.zeros((s, c2), jnp.float32)], axis=0)
            elif s < 0:
                z = jnp.concatenate(
                    [jnp.zeros((-s, c2), jnp.float32), y[:N + s, :]], axis=0)
            else:
                z = y
            # mask horizontal taps that wrapped across a row boundary
            if dx == 1:
                z = jnp.where(col < (W - 1), z, 0.0)
            elif dx == -1:
                z = jnp.where(col > 0, z, 0.0)
            acc = acc + z * wdw[ky * 3 + kx:ky * 3 + kx + 1, :]
    dwc = acc + bdw_ref[...]                           # (N, 2*hid) f32

    # gated GELU (f32 elementwise math)
    g = _gelu_exact(dwc[:, :hid]) * dwc[:, hid:]       # (N, hid) f32

    # project_out: 1x1 conv matmul, f32 accumulation, cast to output dtype.
    out = jnp.dot(g.astype(x.dtype), wout_ref[...],
                  preferred_element_type=jnp.float32)
    out = out + bout_ref[...]
    o_ref[0] = out.astype(o_ref.dtype)


# ------------------------------- wrapper --------------------------------------
def feedforward_forward(x, w_in, b_in, w_dw, b_dw, w_out, b_out):
    """x: (B, C, H, W). Conv weights in PyTorch layout:
       w_in (2*hid, C, 1, 1), b_in (2*hid,), w_dw (2*hid, 1, 3, 3), b_dw (2*hid,),
       w_out (C, hid, 1, 1), b_out (C,)."""
    b, c, h, w = x.shape
    n = h * w
    c2 = w_in.shape[0]
    hid = c2 // 2
    dt = x.dtype

    # NHWC-flat layout: spatial on sublanes, channels on lanes.
    x_flat = jnp.transpose(x, (0, 2, 3, 1)).reshape(b, n, c)

    w_in_t = jnp.transpose(w_in.reshape(c2, c)).astype(dt)            # (C, 2*hid)
    b_in2 = b_in.reshape(1, c2).astype(jnp.float32)
    w_dw9 = jnp.transpose(w_dw.reshape(c2, 9)).astype(jnp.float32)    # (9, 2*hid)
    b_dw2 = b_dw.reshape(1, c2).astype(jnp.float32)
    w_out_t = jnp.transpose(w_out.reshape(c, hid)).astype(dt)         # (hid, C)
    b_out2 = b_out.reshape(1, c).astype(jnp.float32)

    # Raise scoped VMEM above the (16/32 MiB) defaults, but cap at 48 MiB so it
    # also fits v7x's 64 MiB physical VMEM.
    per_step = (4 * n * c * x.dtype.itemsize        # double-buffered x/out blocks
                + 12 * n * c2 * 4                   # in-kernel f32 intermediates
                + (c * c2 + 9 * c2 + hid * c + 2 * c2 + c) * 4)  # resident weights
    vmem_limit = int(min(max(per_step, 32 * 1024 * 1024), 48 * 1024 * 1024))

    kernel = functools.partial(ffn_kernel, H=h, W=w)

    out = pl.pallas_call(
        kernel,
        out_shape=jax.ShapeDtypeStruct((b, n, c), dt),
        grid_spec=pltpu.PrefetchScalarGridSpec(
            num_scalar_prefetch=0,
            grid=(b,),
            in_specs=[
                pl.BlockSpec((1, n, c), lambda i: (i, 0, 0)),
                # constant block indices -> weights stay resident across batch
                pl.BlockSpec((c, c2), lambda i: (0, 0)),
                pl.BlockSpec((1, c2), lambda i: (0, 0)),
                pl.BlockSpec((9, c2), lambda i: (0, 0)),
                pl.BlockSpec((1, c2), lambda i: (0, 0)),
                pl.BlockSpec((hid, c), lambda i: (0, 0)),
                pl.BlockSpec((1, c), lambda i: (0, 0)),
            ],
            out_specs=pl.BlockSpec((1, n, c), lambda i: (i, 0, 0)),
        ),
        compiler_params=pltpu.CompilerParams(
            dimension_semantics=("parallel",),
            vmem_limit_bytes=vmem_limit,
        ),
    )(x_flat, w_in_t, b_in2, w_dw9, b_dw2, w_out_t, b_out2)

    return jnp.transpose(out.reshape(b, h, w, c), (0, 3, 1, 2))


# ------------------------------ reference -------------------------------------
def feedforward_reference(x, w_in, b_in, w_dw, b_dw, w_out, b_out):
    """Pure-JAX replica of the PyTorch FeedForward.forward, for validation."""
    c2 = w_in.shape[0]
    hid = c2 // 2
    dn = ("NCHW", "OIHW", "NCHW")
    y = lax.conv_general_dilated(x, w_in, (1, 1), "VALID", dimension_numbers=dn,
                                 precision=lax.Precision.HIGHEST)
    y = y + b_in.reshape(1, c2, 1, 1)
    dw = lax.conv_general_dilated(y, w_dw, (1, 1), ((1, 1), (1, 1)),
                                  dimension_numbers=dn, feature_group_count=c2,
                                  precision=lax.Precision.HIGHEST)
    dw = dw + b_dw.reshape(1, c2, 1, 1)
    x1, x2 = dw[:, :hid], dw[:, hid:]
    g = jax.nn.gelu(x1, approximate=False) * x2
    out = lax.conv_general_dilated(g, w_out, (1, 1), "VALID", dimension_numbers=dn,
                                   precision=lax.Precision.HIGHEST)
    return out + b_out.reshape(1, -1, 1, 1)


if __name__ == "__main__":
    key = jax.random.PRNGKey(0)
    B, dim, H, W = 2, 4, 16, 16
    ffn_expansion_factor = 2.0
    bias = True
    hidden = int(dim * ffn_expansion_factor)
    c2 = hidden * 2

    ks = jax.random.split(key, 7)
    x = jax.random.normal(ks[0], (B, dim, H, W), dtype=jnp.float32)

    # PyTorch Conv2d default init: U(-1/sqrt(fan_in), 1/sqrt(fan_in)).
    b1 = 1.0 / float(jnp.sqrt(dim * 1 * 1))
    w_in = jax.random.uniform(ks[1], (c2, dim, 1, 1), jnp.float32, -b1, b1)
    b_in = (jax.random.uniform(ks[2], (c2,), jnp.float32, -b1, b1)
            if bias else jnp.zeros((c2,), jnp.float32))

    b2 = 1.0 / float(jnp.sqrt(1 * 3 * 3))          # groups=c2 -> fan_in = 9
    w_dw = jax.random.uniform(ks[3], (c2, 1, 3, 3), jnp.float32, -b2, b2)
    b_dw = (jax.random.uniform(ks[4], (c2,), jnp.float32, -b2, b2)
            if bias else jnp.zeros((c2,), jnp.float32))

    b3 = 1.0 / float(jnp.sqrt(hidden * 1 * 1))
    w_out = jax.random.uniform(ks[5], (dim, hidden, 1, 1), jnp.float32, -b3, b3)
    b_out = (jax.random.uniform(ks[6], (dim,), jnp.float32, -b3, b3)
             if bias else jnp.zeros((dim,), jnp.float32))

    out = feedforward_forward(x, w_in, b_in, w_dw, b_dw, w_out, b_out)
    out = jax.block_until_ready(out)

    ref = feedforward_reference(x, w_in, b_in, w_dw, b_dw, w_out, b_out)
    assert out.shape == (B, dim, H, W)
    max_err = float(jnp.max(jnp.abs(out - ref)))
    assert jnp.allclose(out, ref, atol=2e-5, rtol=2e-5), max_err

    print("KERNEL_OK")
</pallas_src>

<mosaic_0001>
module attributes {stable_mosaic.version = 11 : i64} {
  func.func @ffn_kernel(%arg0: i32, %arg1: memref<1x256x4xf32, #tpu.memory_space<vmem>>, %arg2: memref<4x16xf32, #tpu.memory_space<vmem>>, %arg3: memref<1x16xf32, #tpu.memory_space<vmem>>, %arg4: memref<9x16xf32, #tpu.memory_space<vmem>>, %arg5: memref<1x16xf32, #tpu.memory_space<vmem>>, %arg6: memref<8x4xf32, #tpu.memory_space<vmem>>, %arg7: memref<1x4xf32, #tpu.memory_space<vmem>>, %arg8: memref<1x256x4xf32, #tpu.memory_space<vmem>>) attributes {dimension_semantics = [#tpu.dimension_semantics<parallel>], iteration_bounds = array<i64: 2>, scalar_prefetch = 0 : i64, scratch_operands = 0 : i64, tpu.core_type = #tpu.core_type<tc>, window_params = [{transform_indices = @transform_0, window_bounds = array<i64: 1, 256, 4>}, {pipeline_mode = #tpu.pipeline_mode<synchronous>, transform_indices = @transform_1, window_bounds = array<i64: 4, 16>}, {pipeline_mode = #tpu.pipeline_mode<synchronous>, transform_indices = @transform_2, window_bounds = array<i64: 1, 16>}, {pipeline_mode = #tpu.pipeline_mode<synchronous>, transform_indices = @transform_3, window_bounds = array<i64: 9, 16>}, {pipeline_mode = #tpu.pipeline_mode<synchronous>, transform_indices = @transform_4, window_bounds = array<i64: 1, 16>}, {pipeline_mode = #tpu.pipeline_mode<synchronous>, transform_indices = @transform_5, window_bounds = array<i64: 8, 4>}, {pipeline_mode = #tpu.pipeline_mode<synchronous>, transform_indices = @transform_6, window_bounds = array<i64: 1, 4>}, {transform_indices = @transform_7, window_bounds = array<i64: 1, 256, 4>}]} {
    %c0 = arith.constant 0 : index
    %c0_0 = arith.constant 0 : index
    %c0_1 = arith.constant 0 : index
    %0 = vector.load %arg1[%c0, %c0_0, %c0_1] : memref<1x256x4xf32, #tpu.memory_space<vmem>>, vector<1x256x4xf32>
    %1 = vector.shape_cast %0 : vector<1x256x4xf32> to vector<256x4xf32>
    %c0_2 = arith.constant 0 : index
    %c0_3 = arith.constant 0 : index
    %2 = vector.load %arg2[%c0_2, %c0_3] : memref<4x16xf32, #tpu.memory_space<vmem>>, vector<4x16xf32>
    %cst = arith.constant dense<0.000000e+00> : vector<256x16xf32>
    %3 = tpu.matmul %1, %2, %cst {dimension_numbers = #tpu.dot_dimension_numbers<[1], [0], [0], [1], [0, 0, 1, 1], [], []>} : vector<256x4xf32>, vector<4x16xf32>, vector<256x16xf32> -> vector<256x16xf32>
    %c0_4 = arith.constant 0 : index
    %c0_5 = arith.constant 0 : index
    %4 = vector.load %arg3[%c0_4, %c0_5] : memref<1x16xf32, #tpu.memory_space<vmem>>, vector<1x16xf32>
    %5 = vector.broadcast %4 : vector<1x16xf32> to vector<256x16xf32>
    %6 = arith.addf %3, %5 : vector<256x16xf32>
    %7 = tpu.iota {dimensions = array<i32: 0>} : vector<256x1xi32>
    %c16_i32 = arith.constant 16 : i32
    %c0_i32 = arith.constant 0 : i32
    %8 = arith.cmpi eq, %c16_i32, %c0_i32 : i32
    %c1_i32 = arith.constant 1 : i32
    %9 = arith.select %8, %c1_i32, %c16_i32 : i32
    %10 = vector.broadcast %9 : i32 to vector<256x1xi32>
    %11 = arith.remsi %7, %10 : vector<256x1xi32>
    %c0_i32_6 = arith.constant 0 : i32
    %12 = vector.broadcast %c0_i32_6 : i32 to vector<256x1xi32>
    %13 = arith.cmpi ne, %11, %12 : vector<256x1xi32>
    %c0_i32_7 = arith.constant 0 : i32
    %14 = vector.broadcast %c0_i32_7 : i32 to vector<256x1xi32>
    %15 = arith.cmpi slt, %11, %14 : vector<256x1xi32>
    %c0_i32_8 = arith.constant 0 : i32
    %16 = arith.cmpi slt, %9, %c0_i32_8 : i32
    %17 = vector.broadcast %16 : i1 to vector<256x1xi1>
    %18 = vector.broadcast %17 : vector<256x1xi1> to vector<256x1xi1>
    %19 = arith.xori %15, %18 : vector<256x1xi1>
    %20 = arith.andi %19, %13 : vector<256x1xi1>
    %21 = vector.broadcast %9 : i32 to vector<256x1xi32>
    %22 = arith.addi %11, %21 : vector<256x1xi32>
    %23 = arith.select %20, %22, %11 : vector<256x1xi1>, vector<256x1xi32>
    %c0_9 = arith.constant 0 : index
    %c0_10 = arith.constant 0 : index
    %24 = vector.load %arg4[%c0_9, %c0_10] : memref<9x16xf32, #tpu.memory_space<vmem>>, vector<9x16xf32>
    %cst_11 = arith.constant 0.000000e+00 : f32
    %25 = vector.broadcast %cst_11 : f32 to vector<256x16xf32>
    %cst_12 = arith.constant 0.000000e+00 : f32
    %26 = vector.broadcast %cst_12 : f32 to vector<17x16xf32>
    %27 = vector.extract_strided_slice %6 {offsets = [0, 0], sizes = [239, 16], strides = [1, 1]} : vector<256x16xf32> to vector<239x16xf32>
    %28 = tpu.concatenate %26, %27 in 0 : vector<17x16xf32>, vector<239x16xf32> -> vector<256x16xf32>
    %c0_i32_13 = arith.constant 0 : i32
    %29 = vector.broadcast %c0_i32_13 : i32 to vector<256x1xi32>
    %30 = arith.cmpi sgt, %23, %29 : vector<256x1xi32>
    %cst_14 = arith.constant 0.000000e+00 : f32
    %31 = vector.shape_cast %30 : vector<256x1xi1> to vector<256x1xi1>
    %32 = vector.broadcast %31 : vector<256x1xi1> to vector<256x16xi1>
    %33 = vector.broadcast %cst_14 : f32 to vector<256x16xf32>
    %34 = arith.select %32, %28, %33 : vector<256x16xi1>, vector<256x16xf32>
    %35 = vector.extract_strided_slice %24 {offsets = [0, 0], sizes = [1, 16], strides = [1, 1]} : vector<9x16xf32> to vector<1x16xf32>
    %36 = vector.broadcast %35 : vector<1x16xf32> to vector<256x16xf32>
    %37 = arith.mulf %34, %36 : vector<256x16xf32>
    %38 = arith.addf %25, %37 : vector<256x16xf32>
    %cst_15 = arith.constant 0.000000e+00 : f32
    %39 = vector.broadcast %cst_15 : f32 to vector<16x16xf32>
    %40 = vector.extract_strided_slice %6 {offsets = [0, 0], sizes = [240, 16], strides = [1, 1]} : vector<256x16xf32> to vector<240x16xf32>
    %41 = tpu.concatenate %39, %40 in 0 : vector<16x16xf32>, vector<240x16xf32> -> vector<256x16xf32>
    %42 = vector.extract_strided_slice %24 {offsets = [1, 0], sizes = [1, 16], strides = [1, 1]} : vector<9x16xf32> to vector<1x16xf32>
    %43 = vector.broadcast %42 : vector<1x16xf32> to vector<256x16xf32>
    %44 = arith.mulf %41, %43 : vector<256x16xf32>
    %45 = arith.addf %38, %44 : vector<256x16xf32>
    %cst_16 = arith.constant 0.000000e+00 : f32
    %46 = vector.broadcast %cst_16 : f32 to vector<15x16xf32>
    %47 = vector.extract_strided_slice %6 {offsets = [0, 0], sizes = [241, 16], strides = [1, 1]} : vector<256x16xf32> to vector<241x16xf32>
    %48 = tpu.concatenate %46, %47 in 0 : vector<15x16xf32>, vector<241x16xf32> -> vector<256x16xf32>
    %c15_i32 = arith.constant 15 : i32
    %49 = vector.broadcast %c15_i32 : i32 to vector<256x1xi32>
    %50 = arith.cmpi slt, %23, %49 : vector<256x1xi32>
    %cst_17 = arith.constant 0.000000e+00 : f32
    %51 = vector.shape_cast %50 : vector<256x1xi1> to vector<256x1xi1>
    %52 = vector.broadcast %51 : vector<256x1xi1> to vector<256x16xi1>
    %53 = vector.broadcast %cst_17 : f32 to vector<256x16xf32>
    %54 = arith.select %52, %48, %53 : vector<256x16xi1>, vector<256x16xf32>
    %55 = vector.extract_strided_slice %24 {offsets = [2, 0], sizes = [1, 16], strides = [1, 1]} : vector<9x16xf32> to vector<1x16xf32>
    %56 = vector.broadcast %55 : vector<1x16xf32> to vector<256x16xf32>
    %57 = arith.mulf %54, %56 : vector<256x16xf32>
    %58 = arith.addf %45, %57 : vector<256x16xf32>
    %cst_18 = arith.constant 0.000000e+00 : f32
    %59 = vector.broadcast %cst_18 : f32 to vector<1x16xf32>
    %60 = vector.extract_strided_slice %6 {offsets = [0, 0], sizes = [255, 16], strides = [1, 1]} : vector<256x16xf32> to vector<255x16xf32>
    %61 = tpu.concatenate %59, %60 in 0 : vector<1x16xf32>, vector<255x16xf32> -> vector<256x16xf32>
    %c0_i32_19 = arith.constant 0 : i32
    %62 = vector.broadcast %c0_i32_19 : i32 to vector<256x1xi32>
    %63 = arith.cmpi sgt, %23, %62 : vector<256x1xi32>
    %cst_20 = arith.constant 0.000000e+00 : f32
    %64 = vector.shape_cast %63 : vector<256x1xi1> to vector<256x1xi1>
    %65 = vector.broadcast %64 : vector<256x1xi1> to vector<256x16xi1>
    %66 = vector.broadcast %cst_20 : f32 to vector<256x16xf32>
    %67 = arith.select %65, %61, %66 : vector<256x16xi1>, vector<256x16xf32>
    %68 = vector.extract_strided_slice %24 {offsets = [3, 0], sizes = [1, 16], strides = [1, 1]} : vector<9x16xf32> to vector<1x16xf32>
    %69 = vector.broadcast %68 : vector<1x16xf32> to vector<256x16xf32>
    %70 = arith.mulf %67, %69 : vector<256x16xf32>
    %71 = arith.addf %58, %70 : vector<256x16xf32>
    %72 = vector.extract_strided_slice %24 {offsets = [4, 0], sizes = [1, 16], strides = [1, 1]} : vector<9x16xf32> to vector<1x16xf32>
    %73 = vector.broadcast %72 : vector<1x16xf32> to vector<256x16xf32>
    %74 = arith.mulf %6, %73 : vector<256x16xf32>
    %75 = arith.addf %71, %74 : vector<256x16xf32>
    %76 = vector.extract_strided_slice %6 {offsets = [1, 0], sizes = [255, 16], strides = [1, 1]} : vector<256x16xf32> to vector<255x16xf32>
    %cst_21 = arith.constant 0.000000e+00 : f32
    %77 = vector.broadcast %cst_21 : f32 to vector<1x16xf32>
    %78 = tpu.concatenate %76, %77 in 0 : vector<255x16xf32>, vector<1x16xf32> -> vector<256x16xf32>
    %c15_i32_22 = arith.constant 15 : i32
    %79 = vector.broadcast %c15_i32_22 : i32 to vector<256x1xi32>
    %80 = arith.cmpi slt, %23, %79 : vector<256x1xi32>
    %cst_23 = arith.constant 0.000000e+00 : f32
    %81 = vector.shape_cast %80 : vector<256x1xi1> to vector<256x1xi1>
    %82 = vector.broadcast %81 : vector<256x1xi1> to vector<256x16xi1>
    %83 = vector.broadcast %cst_23 : f32 to vector<256x16xf32>
    %84 = arith.select %82, %78, %83 : vector<256x16xi1>, vector<256x16xf32>
    %85 = vector.extract_strided_slice %24 {offsets = [5, 0], sizes = [1, 16], strides = [1, 1]} : vector<9x16xf32> to vector<1x16xf32>
    %86 = vector.broadcast %85 : vector<1x16xf32> to vector<256x16xf32>
    %87 = arith.mulf %84, %86 : vector<256x16xf32>
    %88 = arith.addf %75, %87 : vector<256x16xf32>
    %89 = vector.extract_strided_slice %6 {offsets = [15, 0], sizes = [241, 16], strides = [1, 1]} : vector<256x16xf32> to vector<241x16xf32>
    %cst_24 = arith.constant 0.000000e+00 : f32
    %90 = vector.broadcast %cst_24 : f32 to vector<15x16xf32>
    %91 = tpu.concatenate %89, %90 in 0 : vector<241x16xf32>, vector<15x16xf32> -> vector<256x16xf32>
    %c0_i32_25 = arith.constant 0 : i32
    %92 = vector.broadcast %c0_i32_25 : i32 to vector<256x1xi32>
    %93 = arith.cmpi sgt, %23, %92 : vector<256x1xi32>
    %cst_26 = arith.constant 0.000000e+00 : f32
    %94 = vector.shape_cast %93 : vector<256x1xi1> to vector<256x1xi1>
    %95 = vector.broadcast %94 : vector<256x1xi1> to vector<256x16xi1>
    %96 = vector.broadcast %cst_26 : f32 to vector<256x16xf32>
    %97 = arith.select %95, %91, %96 : vector<256x16xi1>, vector<256x16xf32>
    %98 = vector.extract_strided_slice %24 {offsets = [6, 0], sizes = [1, 16], strides = [1, 1]} : vector<9x16xf32> to vector<1x16xf32>
    %99 = vector.broadcast %98 : vector<1x16xf32> to vector<256x16xf32>
    %100 = arith.mulf %97, %99 : vector<256x16xf32>
    %101 = arith.addf %88, %100 : vector<256x16xf32>
    %102 = vector.extract_strided_slice %6 {offsets = [16, 0], sizes = [240, 16], strides = [1, 1]} : vector<256x16xf32> to vector<240x16xf32>
    %cst_27 = arith.constant 0.000000e+00 : f32
    %103 = vector.broadcast %cst_27 : f32 to vector<16x16xf32>
    %104 = tpu.concatenate %102, %103 in 0 : vector<240x16xf32>, vector<16x16xf32> -> vector<256x16xf32>
    %105 = vector.extract_strided_slice %24 {offsets = [7, 0], sizes = [1, 16], strides = [1, 1]} : vector<9x16xf32> to vector<1x16xf32>
    %106 = vector.broadcast %105 : vector<1x16xf32> to vector<256x16xf32>
    %107 = arith.mulf %104, %106 : vector<256x16xf32>
    %108 = arith.addf %101, %107 : vector<256x16xf32>
    %109 = vector.extract_strided_slice %6 {offsets = [17, 0], sizes = [239, 16], strides = [1, 1]} : vector<256x16xf32> to vector<239x16xf32>
    %cst_28 = arith.constant 0.000000e+00 : f32
    %110 = vector.broadcast %cst_28 : f32 to vector<17x16xf32>
    %111 = tpu.concatenate %109, %110 in 0 : vector<239x16xf32>, vector<17x16xf32> -> vector<256x16xf32>
    %c15_i32_29 = arith.constant 15 : i32
    %112 = vector.broadcast %c15_i32_29 : i32 to vector<256x1xi32>
    %113 = arith.cmpi slt, %23, %112 : vector<256x1xi32>
    %cst_30 = arith.constant 0.000000e+00 : f32
    %114 = vector.shape_cast %113 : vector<256x1xi1> to vector<256x1xi1>
    %115 = vector.broadcast %114 : vector<256x1xi1> to vector<256x16xi1>
    %116 = vector.broadcast %cst_30 : f32 to vector<256x16xf32>
    %117 = arith.select %115, %111, %116 : vector<256x16xi1>, vector<256x16xf32>
    %118 = vector.extract_strided_slice %24 {offsets = [8, 0], sizes = [1, 16], strides = [1, 1]} : vector<9x16xf32> to vector<1x16xf32>
    %119 = vector.broadcast %118 : vector<1x16xf32> to vector<256x16xf32>
    %120 = arith.mulf %117, %119 : vector<256x16xf32>
    %121 = arith.addf %108, %120 : vector<256x16xf32>
    %c0_31 = arith.constant 0 : index
    %c0_32 = arith.constant 0 : index
    %122 = vector.load %arg5[%c0_31, %c0_32] : memref<1x16xf32, #tpu.memory_space<vmem>>, vector<1x16xf32>
    %123 = vector.broadcast %122 : vector<1x16xf32> to vector<256x16xf32>
    %124 = arith.addf %121, %123 : vector<256x16xf32>
    %125 = vector.extract_strided_slice %124 {offsets = [0, 0], sizes = [256, 8], strides = [1, 1]} : vector<256x16xf32> to vector<256x8xf32>
    %cst_33 = arith.constant 5.000000e-01 : f32
    %126 = vector.broadcast %cst_33 : f32 to vector<256x8xf32>
    %127 = arith.mulf %126, %125 : vector<256x8xf32>
    %cst_34 = arith.constant 0.707106769 : f32
    %128 = vector.broadcast %cst_34 : f32 to vector<256x8xf32>
    %129 = arith.mulf %125, %128 : vector<256x8xf32>
    %130 = math.absf %129 : vector<256x8xf32>
    %cst_35 = arith.constant 0.327591091 : f32
    %131 = vector.broadcast %cst_35 : f32 to vector<256x8xf32>
    %132 = arith.mulf %131, %130 : vector<256x8xf32>
    %cst_36 = arith.constant 1.000000e+00 : f32
    %133 = vector.broadcast %cst_36 : f32 to vector<256x8xf32>
    %134 = arith.addf %133, %132 : vector<256x8xf32>
    %135 = tpu.reciprocal %134 : vector<256x8xf32> -> vector<256x8xf32>
    %cst_37 = arith.constant 1.06140542 : f32
    %136 = vector.broadcast %cst_37 : f32 to vector<256x8xf32>
    %137 = arith.mulf %135, %136 : vector<256x8xf32>
    %cst_38 = arith.constant -1.45315206 : f32
    %138 = vector.broadcast %cst_38 : f32 to vector<256x8xf32>
    %139 = arith.addf %138, %137 : vector<256x8xf32>
    %140 = arith.mulf %135, %139 : vector<256x8xf32>
    %cst_39 = arith.constant 1.42141378 : f32
    %141 = vector.broadcast %cst_39 : f32 to vector<256x8xf32>
    %142 = arith.addf %141, %140 : vector<256x8xf32>
    %143 = arith.mulf %135, %142 : vector<256x8xf32>
    %cst_40 = arith.constant -0.284496725 : f32
    %144 = vector.broadcast %cst_40 : f32 to vector<256x8xf32>
    %145 = arith.addf %144, %143 : vector<256x8xf32>
    %146 = arith.mulf %135, %145 : vector<256x8xf32>
    %cst_41 = arith.constant 0.254829586 : f32
    %147 = vector.broadcast %cst_41 : f32 to vector<256x8xf32>
    %148 = arith.addf %147, %146 : vector<256x8xf32>
    %149 = arith.mulf %135, %148 : vector<256x8xf32>
    %cst_42 = arith.constant 0.000000e+00 : f32
    %150 = vector.broadcast %cst_42 : f32 to vector<256x8xf32>
    %151 = arith.subf %150, %130 : vector<256x8xf32>
    %152 = arith.mulf %151, %130 : vector<256x8xf32>
    %153 = math.exp %152 : vector<256x8xf32>
    %154 = arith.mulf %149, %153 : vector<256x8xf32>
    %cst_43 = arith.constant 1.000000e+00 : f32
    %155 = vector.broadcast %cst_43 : f32 to vector<256x8xf32>
    %156 = arith.subf %155, %154 : vector<256x8xf32>
    %cst_44 = arith.constant 0.000000e+00 : f32
    %157 = vector.broadcast %cst_44 : f32 to vector<256x8xf32>
    %158 = arith.cmpf olt, %129, %157 : vector<256x8xf32>
    %cst_45 = arith.constant 0.000000e+00 : f32
    %159 = vector.broadcast %cst_45 : f32 to vector<256x8xf32>
    %160 = arith.subf %159, %156 : vector<256x8xf32>
    %161 = arith.select %158, %160, %156 : vector<256x8xi1>, vector<256x8xf32>
    %cst_46 = arith.constant 1.000000e+00 : f32
    %162 = vector.broadcast %cst_46 : f32 to vector<256x8xf32>
    %163 = arith.addf %162, %161 : vector<256x8xf32>
    %164 = arith.mulf %127, %163 : vector<256x8xf32>
    %165 = vector.extract_strided_slice %124 {offsets = [0, 8], sizes = [256, 8], strides = [1, 1]} : vector<256x16xf32> to vector<256x8xf32>
    %166 = arith.mulf %164, %165 : vector<256x8xf32>
    %c0_47 = arith.constant 0 : index
    %c0_48 = arith.constant 0 : index
    %167 = vector.load %arg6[%c0_47, %c0_48] : memref<8x4xf32, #tpu.memory_space<vmem>>, vector<8x4xf32>
    %cst_49 = arith.constant dense<0.000000e+00> : vector<256x4xf32>
    %168 = tpu.matmul %166, %167, %cst_49 {dimension_numbers = #tpu.dot_dimension_numbers<[1], [0], [0], [1], [0, 0, 1, 1], [], []>} : vector<256x8xf32>, vector<8x4xf32>, vector<256x4xf32> -> vector<256x4xf32>
    %c0_50 = arith.constant 0 : index
    %c0_51 = arith.constant 0 : index
    %169 = vector.load %arg7[%c0_50, %c0_51] : memref<1x4xf32, #tpu.memory_space<vmem>>, vector<1x4xf32>
    %170 = vector.broadcast %169 : vector<1x4xf32> to vector<256x4xf32>
    %171 = arith.addf %168, %170 : vector<256x4xf32>
    %c0_52 = arith.constant 0 : index
    %c0_53 = arith.constant 0 : index
    %c0_54 = arith.constant 0 : index
    %172 = vector.load %arg8[%c0_52, %c0_53, %c0_54] : memref<1x256x4xf32, #tpu.memory_space<vmem>>, vector<1x256x4xf32>
    %173 = vector.shape_cast %172 : vector<1x256x4xf32> to vector<256x4xf32>
    %174 = vector.shape_cast %171 : vector<256x4xf32> to vector<1x256x4xf32>
    tpu.vector_store %arg8[%c0_52, %c0_53, %c0_54], %174 {strides = array<i32>} : memref<1x256x4xf32, #tpu.memory_space<vmem>>, vector<1x256x4xf32>,
    return
  }
  func.func @transform_0(%arg0: i32) -> (i32, i32, i32) {
    %c0_i32 = arith.constant 0 : i32
    %c0_i32_0 = arith.constant 0 : i32
    %c0_i32_1 = arith.constant 0 : i32
    return %arg0, %c0_i32, %c0_i32_0 : i32, i32, i32
  }
  func.func @transform_1(%arg0: i32) -> (i32, i32) {
    %c0_i32 = arith.constant 0 : i32
    %c0_i32_0 = arith.constant 0 : i32
    %c0_i32_1 = arith.constant 0 : i32
    return %c0_i32, %c0_i32_0 : i32, i32
  }
  func.func @transform_2(%arg0: i32) -> (i32, i32) {
    %c0_i32 = arith.constant 0 : i32
    %c0_i32_0 = arith.constant 0 : i32
    %c0_i32_1 = arith.constant 0 : i32
    return %c0_i32, %c0_i32_0 : i32, i32
  }
  func.func @transform_3(%arg0: i32) -> (i32, i32) {
    %c0_i32 = arith.constant 0 : i32
    %c0_i32_0 = arith.constant 0 : i32
    %c0_i32_1 = arith.constant 0 : i32
    return %c0_i32, %c0_i32_0 : i32, i32
  }
  func.func @transform_4(%arg0: i32) -> (i32, i32) {
    %c0_i32 = arith.constant 0 : i32
    %c0_i32_0 = arith.constant 0 : i32
    %c0_i32_1 = arith.constant 0 : i32
    return %c0_i32, %c0_i32_0 : i32, i32
  }
  func.func @transform_5(%arg0: i32) -> (i32, i32) {
    %c0_i32 = arith.constant 0 : i32
    %c0_i32_0 = arith.constant 0 : i32
    %c0_i32_1 = arith.constant 0 : i32
    return %c0_i32, %c0_i32_0 : i32, i32
  }
  func.func @transform_6(%arg0: i32) -> (i32, i32) {
    %c0_i32 = arith.constant 0 : i32
    %c0_i32_0 = arith.constant 0 : i32
    %c0_i32_1 = arith.constant 0 : i32
    return %c0_i32, %c0_i32_0 : i32, i32
  }
  func.func @transform_7(%arg0: i32) -> (i32, i32, i32) {
    %c0_i32 = arith.constant 0 : i32
    %c0_i32_0 = arith.constant 0 : i32
    %c0_i32_1 = arith.constant 0 : i32
    return %arg0, %c0_i32, %c0_i32_0 : i32, i32, i32
  }
}

</mosaic_0001>

<llo_original>
// kernel: tpu_custom_call.1
$region0: #{tpu_custom_call.1}
  #allocation0 [shape = 'u32[]', space=smem, size = 0x4, offset = 0x4, fixed_abs, tag = 'smem constant byte address 0x4 - core index']
  #allocation1 [shape = 'u32[144,128]{1,0:T(1,128)}', space=vmem, size = 0x12000, scoped, tag = 'internal scratch']
  %s0 = inlined_call_operand.vmem [shape: f32[2,256,4], index: 0, kind: input, shape index: {}]
  %s1 = inlined_call_operand.vmem [shape: f32[4,16], index: 1, kind: input, shape index: {}]
  %s2 = inlined_call_operand.vmem [shape: f32[1,16], index: 2, kind: input, shape index: {}]
  %s3 = inlined_call_operand.vmem [shape: f32[9,16], index: 3, kind: input, shape index: {}]
  %s4 = inlined_call_operand.vmem [shape: f32[1,16], index: 4, kind: input, shape index: {}]
  %s5 = inlined_call_operand.vmem [shape: f32[8,4], index: 5, kind: input, shape index: {}]
  %s6 = inlined_call_operand.vmem [shape: f32[1,4], index: 6, kind: input, shape index: {}]
  %s7 = inlined_call_operand.vmem [shape: f32[2,256,4], index: 7, kind: output, shape index: {}]
  %s8 = sld [smem:[#allocation0]]
  $region61: #{tpu_custom_call.1} parent=0
    _
  %s10 = ssub.s32 1, %s8
  %s11 = scalar_select 0, %s10, %s8
  loop: start=0, step=1, limit=4
  $region2: #{tpu_custom_call.1} parent=0 // loop_pre_header
    _
  $region3: #{tpu_custom_call.1} parent=0 // loop_header
    %s13 = sphi 0, %s17
    %p14 = scmp.ge.s32.totalorder %s13, 4
    %s23 = sphi 0, %s25
    %s26 = sphi 0, %s23
    %s27 = sphi 0, %s26
    %s43 = sphi 0, %s27
    %s47 = sphi 0, %s47
    %s49 = sphi 0, %s47
    %s50 = sphi 0, %s49
    %s64 = sphi 0, %s50
    %s68 = sphi 0, %s68
    %s70 = sphi 0, %s68
    %s71 = sphi 0, %s70
    %s85 = sphi 0, %s71
    %s89 = sphi 0, %s89
    %s91 = sphi 0, %s89
    %s92 = sphi 0, %s91
    %s106 = sphi 0, %s92
    %s110 = sphi 0, %s110
    %s112 = sphi 0, %s110
    %s113 = sphi 0, %s112
    %s127 = sphi 0, %s113
    %s131 = sphi 0, %s131
    %s133 = sphi 0, %s131
    %s134 = sphi 0, %s133
    %s148 = sphi 0, %s134
    %s152 = sphi 0, %s152
    %s154 = sphi 0, %s152
    %s155 = sphi 0, %s154
    %s169 = sphi 0, %s155
    %s175 = sphi 0, %s177
    %s178 = sphi 0, %s175
    %s179 = sphi 0, %s178
    %s195 = sphi 0, %s179
  $region4: #{tpu_custom_call.1} parent=0 // loop_header_branch
    %16 = sbr.rel (%p14) target = $region8
  $region5: #{tpu_custom_call.1} parent=0 // loop_body
    %s18 = ssub.s32 %s13, 1
    %s19 = ssub.s32 %s13, 2
    %s20 = sadd.s32 %s13, 1
    %s21 = ssub.s32 %s13, %s20
    %p22 = scmp.eq.s32.totalorder %s21, 0
    %s24 = sadd.s32 %s23, 1
    %s25 = scalar_select %p22, %s23, %s24
    %p28 = pneg %p22
    %p29 = scmp.eq.s32.totalorder %s13, 1
    %p30 = por %p28, %p29
    %p31 = scmp.ne.s32.totalorder %s23, %s26
    %p32 = scmp.eq.s32.totalorder %s13, 0
    %p33 = por %p31, %p32
    %p34 = scmp.ne.s32.totalorder %s23, %s26
    %p35 = scmp.eq.s32.totalorder %s18, 1
    %p36 = por %p34, %p35
    %p37 = scmp.ne.s32.totalorder %s26, %s27
    %p38 = scmp.eq.s32.totalorder %s18, 0
    %p39 = por %p37, %p38
    %p40 = scmp.ne.s32.totalorder %s26, %s27
    %p41 = scmp.eq.s32.totalorder %s19, 1
    %p42 = por %p40, %p41
    %p44 = scmp.ne.s32.totalorder %s27, %s43
    %p45 = scmp.eq.s32.totalorder %s19, 0
    %p46 = por %p44, %p45
    %s48 = sadd.s32 %s47, 1
    %p51 = scmp.eq.s32.totalorder %s13, 1
    %p52 = scmp.ne.s32.totalorder %s47, %s49
    %p53 = scmp.eq.s32.totalorder %s13, 0
    %p54 = por %p52, %p53
    %p55 = scmp.ne.s32.totalorder %s47, %s49
    %p56 = scmp.eq.s32.totalorder %s18, 1
    %p57 = por %p55, %p56
    %p58 = scmp.ne.s32.totalorder %s49, %s50
    %p59 = scmp.eq.s32.totalorder %s18, 0
    %p60 = por %p58, %p59
    %p61 = scmp.ne.s32.totalorder %s49, %s50
    %p62 = scmp.eq.s32.totalorder %s19, 1
    %p63 = por %p61, %p62
    %p65 = scmp.ne.s32.totalorder %s50, %s64
    %p66 = scmp.eq.s32.totalorder %s19, 0
    %p67 = por %p65, %p66
    %s69 = sadd.s32 %s68, 1
    %p72 = scmp.eq.s32.totalorder %s13, 1
    %p73 = scmp.ne.s32.totalorder %s68, %s70
    %p74 = scmp.eq.s32.totalorder %s13, 0
    %p75 = por %p73, %p74
    %p76 = scmp.ne.s32.totalorder %s68, %s70
    %p77 = scmp.eq.s32.totalorder %s18, 1
    %p78 = por %p76, %p77
    %p79 = scmp.ne.s32.totalorder %s70, %s71
    %p80 = scmp.eq.s32.totalorder %s18, 0
    %p81 = por %p79, %p80
    %p82 = scmp.ne.s32.totalorder %s70, %s71
    %p83 = scmp.eq.s32.totalorder %s19, 1
    %p84 = por %p82, %p83
    %p86 = scmp.ne.s32.totalorder %s71, %s85
    %p87 = scmp.eq.s32.totalorder %s19, 0
    %p88 = por %p86, %p87
    %s90 = sadd.s32 %s89, 1
    %p93 = scmp.eq.s32.totalorder %s13, 1
    %p94 = scmp.ne.s32.totalorder %s89, %s91
    %p95 = scmp.eq.s32.totalorder %s13, 0
    %p96 = por %p94, %p95
    %p97 = scmp.ne.s32.totalorder %s89, %s91
    %p98 = scmp.eq.s32.totalorder %s18, 1
    %p99 = por %p97, %p98
    %p100 = scmp.ne.s32.totalorder %s91, %s92
    %p101 = scmp.eq.s32.totalorder %s18, 0
    %p102 = por %p100, %p101
    %p103 = scmp.ne.s32.totalorder %s91, %s92
    %p104 = scmp.eq.s32.totalorder %s19, 1
    %p105 = por %p103, %p104
    %p107 = scmp.ne.s32.totalorder %s92, %s106
    %p108 = scmp.eq.s32.totalorder %s19, 0
    %p109 = por %p107, %p108
    %s111 = sadd.s32 %s110, 1
    %p114 = scmp.eq.s32.totalorder %s13, 1
    %p115 = scmp.ne.s32.totalorder %s110, %s112
    %p116 = scmp.eq.s32.totalorder %s13, 0
    %p117 = por %p115, %p116
    %p118 = scmp.ne.s32.totalorder %s110, %s112
    %p119 = scmp.eq.s32.totalorder %s18, 1
    %p120 = por %p118, %p119
    %p121 = scmp.ne.s32.totalorder %s112, %s113
    %p122 = scmp.eq.s32.totalorder %s18, 0
    %p123 = por %p121, %p122
    %p124 = scmp.ne.s32.totalorder %s112, %s113
    %p125 = scmp.eq.s32.totalorder %s19, 1
    %p126 = por %p124, %p125
    %p128 = scmp.ne.s32.totalorder %s113, %s127
    %p129 = scmp.eq.s32.totalorder %s19, 0
    %p130 = por %p128, %p129
    %s132 = sadd.s32 %s131, 1
    %p135 = scmp.eq.s32.totalorder %s13, 1
    %p136 = scmp.ne.s32.totalorder %s131, %s133
    %p137 = scmp.eq.s32.totalorder %s13, 0
    %p138 = por %p136, %p137
    %p139 = scmp.ne.s32.totalorder %s131, %s133
    %p140 = scmp.eq.s32.totalorder %s18, 1
    %p141 = por %p139, %p140
    %p142 = scmp.ne.s32.totalorder %s133, %s134
    %p143 = scmp.eq.s32.totalorder %s18, 0
    %p144 = por %p142, %p143
    %p145 = scmp.ne.s32.totalorder %s133, %s134
    %p146 = scmp.eq.s32.totalorder %s19, 1
    %p147 = por %p145, %p146
    %p149 = scmp.ne.s32.totalorder %s134, %s148
    %p150 = scmp.eq.s32.totalorder %s19, 0
    %p151 = por %p149, %p150
    %s153 = sadd.s32 %s152, 1
    %p156 = scmp.eq.s32.totalorder %s13, 1
    %p157 = scmp.ne.s32.totalorder %s152, %s154
    %p158 = scmp.eq.s32.totalorder %s13, 0
    %p159 = por %p157, %p158
    %p160 = scmp.ne.s32.totalorder %s152, %s154
    %p161 = scmp.eq.s32.totalorder %s18, 1
    %p162 = por %p160, %p161
    %p163 = scmp.ne.s32.totalorder %s154, %s155
    %p164 = scmp.eq.s32.totalorder %s18, 0
    %p165 = por %p163, %p164
    %p166 = scmp.ne.s32.totalorder %s154, %s155
    %p167 = scmp.eq.s32.totalorder %s19, 1
    %p168 = por %p166, %p167
    %p170 = scmp.ne.s32.totalorder %s155, %s169
    %p171 = scmp.eq.s32.totalorder %s19, 0
    %p172 = por %p170, %p171
    %s173 = ssub.s32 %s13, %s20
    %p174 = scmp.eq.s32.totalorder %s173, 0
    %s176 = sadd.s32 %s175, 1
    %s177 = scalar_select %p174, %s175, %s176
    %p180 = pneg %p174
    %p181 = scmp.eq.s32.totalorder %s13, 1
    %p182 = por %p180, %p181
    %p183 = scmp.ne.s32.totalorder %s175, %s178
    %p184 = scmp.eq.s32.totalorder %s13, 0
    %p185 = por %p183, %p184
    %p186 = scmp.ne.s32.totalorder %s175, %s178
    %p187 = scmp.eq.s32.totalorder %s18, 1
    %p188 = por %p186, %p187
    %p189 = scmp.ne.s32.totalorder %s178, %s179
    %p190 = scmp.eq.s32.totalorder %s18, 0
    %p191 = por %p189, %p190
    %p192 = scmp.ne.s32.totalorder %s178, %s179
    %p193 = scmp.eq.s32.totalorder %s19, 1
    %p194 = por %p192, %p193
    %p196 = scmp.ne.s32.totalorder %s179, %s195
    %p197 = scmp.eq.s32.totalorder %s19, 0
    %p198 = por %p196, %p197
    %p199 = scmp.le.s32.totalorder 1, %s13
    %p200 = scmp.lt.s32.totalorder %s13, 3
    %p201 = pnand %p199, %p200
    %p202 = pneg %p201
    // Predicated region
    $region9: #{tpu_custom_call.1} parent=5 // pred_check
      _
    $region10: #{tpu_custom_call.1} parent=5 // pred_check_branch
      %204 = sbr.rel (%p201) target = $region12
    $region11: #{tpu_custom_call.1} parent=5 // pred_region
      %s205 = ssub.s32 %s13, 1
      // Predicated region
      $region13: #{tpu_custom_call.1} parent=11 // pred_check
        %p206 = pneg %p60
      $region14: #{tpu_custom_call.1} parent=11 // pred_check_branch
        %208 = sbr.rel (%p206) target = $region16
      $region15: #{tpu_custom_call.1} parent=11 // pred_region
        _
      $region16: #{tpu_custom_call.1} parent=11 // pred_fallthru
        _
      // Predicated region
      $region17: #{tpu_custom_call.1} parent=11 // pred_check
        %p209 = pneg %p81
      $region18: #{tpu_custom_call.1} parent=11 // pred_check_branch
        %211 = sbr.rel (%p209) target = $region20
      $region19: #{tpu_custom_call.1} parent=11 // pred_region
        _
      $region20: #{tpu_custom_call.1} parent=11 // pred_fallthru
        _
      // Predicated region
      $region21: #{tpu_custom_call.1} parent=11 // pred_check
        %p212 = pneg %p102
      $region22: #{tpu_custom_call.1} parent=11 // pred_check_branch
        %214 = sbr.rel (%p212) target = $region24
      $region23: #{tpu_custom_call.1} parent=11 // pred_region
        _
      $region24: #{tpu_custom_call.1} parent=11 // pred_fallthru
        _
      // Predicated region
      $region25: #{tpu_custom_call.1} parent=11 // pred_check
        %p215 = pneg %p123
      $region26: #{tpu_custom_call.1} parent=11 // pred_check_branch
        %217 = sbr.rel (%p215) target = $region28
      $region27: #{tpu_custom_call.1} parent=11 // pred_region
        _
      $region28: #{tpu_custom_call.1} parent=11 // pred_fallthru
        _
      // Predicated region
      $region29: #{tpu_custom_call.1} parent=11 // pred_check
        %p218 = pneg %p144
      $region30: #{tpu_custom_call.1} parent=11 // pred_check_branch
        %220 = sbr.rel (%p218) target = $region32
      $region31: #{tpu_custom_call.1} parent=11 // pred_region
        _
      $region32: #{tpu_custom_call.1} parent=11 // pred_fallthru
        _
      // Predicated region
      $region33: #{tpu_custom_call.1} parent=11 // pred_check
        %p221 = pneg %p165
      $region34: #{tpu_custom_call.1} parent=11 // pred_check_branch
        %223 = sbr.rel (%p221) target = $region36
      $region35: #{tpu_custom_call.1} parent=11 // pred_region
        _
      $region36: #{tpu_custom_call.1} parent=11 // pred_fallthru
        _
    $region12: #{tpu_custom_call.1} parent=5 // pred_fallthru
      _
    %p224 = scmp.lt.s32.totalorder %s13, 2
    // Predicated region
    $region37: #{tpu_custom_call.1} parent=5 // pred_check
      %p225 = pneg %p224
    $region38: #{tpu_custom_call.1} parent=5 // pred_check_branch
      %227 = sbr.rel (%p225) target = $region40
    $region39: #{tpu_custom_call.1} parent=5 // pred_region
      // Predicated region
      $region41: #{tpu_custom_call.1} parent=39 // pred_check
        %p228 = pneg %p33
      $region42: #{tpu_custom_call.1} parent=39 // pred_check_branch
        %230 = sbr.rel (%p228) target = $region44
      $region43: #{tpu_custom_call.1} parent=39 // pred_region
        %p231 = scmp.lt.s32.totalorder %s13, 1
        %s232 = scalar_select %p231, %s13, 1
        %s233 = smul.addr %s232, 32
        %s234 = smul.addr %s233, 8
        %s235 = scalar_lea.vmem %s0, %s234
      $region44: #{tpu_custom_call.1} parent=39 // pred_fallthru
        _
    $region40: #{tpu_custom_call.1} parent=5 // pred_fallthru
      _
    %p236 = scmp.le.s32.totalorder 1, %s13
    %p237 = scmp.lt.s32.totalorder %s13, 3
    %p238 = pnand %p236, %p237
    %p239 = pneg %p238
    // Predicated region
    $region45: #{tpu_custom_call.1} parent=5 // pred_check
      _
    $region46: #{tpu_custom_call.1} parent=5 // pred_check_branch
      %241 = sbr.rel (%p238) target = $region48
    $region47: #{tpu_custom_call.1} parent=5 // pred_region
      %s242 = ssub.s32 %s13, 1
      %p243 = scmp.lt.s32.totalorder %s18, 1
      %s244 = scalar_select %p243, %s18, 1
      %s245 = smul.addr %s244, 32
      %s246 = smul.addr %s245, 8
      %s247 = scalar_lea.vmem %s0, %s246
      %p248 = pneg %p39
      %p249 = pneg %p36
      %p250 = pneg %p60
      %p251 = pneg %p57
      %p252 = pneg %p81
      %p253 = pneg %p78
      %p254 = pneg %p102
      %p255 = pneg %p99
      %p256 = pneg %p123
      %p257 = pneg %p120
      %p258 = pneg %p144
      %p259 = pneg %p141
      %p260 = pneg %p165
      %p261 = pneg %p162
      %p262 = pneg %p191
      %p263 = pneg %p188
      %p264 = scmp.lt.s32.totalorder %s18, 1
      %s265 = scalar_select %p264, %s18, 1
      %s266 = smul.addr %s265, 32
      %s267 = smul.addr %s266, 8
      %s268 = scalar_lea.vmem %s7, %s267
      %p269 = scmp.lt.s32.totalorder %s18, 1
      %s270 = scalar_select %p269, %s18, 1
      %s271 = smul.addr %s270, 32
      %s272 = smul.addr %s271, 8
      %s273 = scalar_lea.vmem %s0, %s272
      %p274 = scmp.lt.s32.totalorder %s18, 1
      %s275 = scalar_select %p274, %s18, 1
      %s276 = smul.addr %s275, 32
      %s277 = smul.addr %s276, 8
      %s278 = scalar_lea.vmem %s7, %s277
      %v279 = vld [vmem:[%s273] sm:$0xff]
      %v280 = vld [vmem:[%s273 + $0x8] sm:$0xff]
      %v281 = vld [vmem:[%s273 + $0x10] sm:$0xff]
      %v282 = vld [vmem:[%s273 + $0x18] sm:$0xff]
      %v283 = vld [vmem:[%s273 + $0x20] sm:$0xff]
      %v284 = vld [vmem:[%s273 + $0x28] sm:$0xff]
      %v285 = vld [vmem:[%s273 + $0x30] sm:$0xff]
      %v286 = vld [vmem:[%s273 + $0x38] sm:$0xff]
      %v287 = vld [vmem:[%s273 + $0x40] sm:$0xff]
      %v288 = vld [vmem:[%s273 + $0x48] sm:$0xff]
      %v289 = vld [vmem:[%s273 + $0x50] sm:$0xff]
      %v290 = vld [vmem:[%s273 + $0x58] sm:$0xff]
      %v291 = vld [vmem:[%s273 + $0x60] sm:$0xff]
      %v292 = vld [vmem:[%s273 + $0x68] sm:$0xff]
      %v293 = vld [vmem:[%s273 + $0x70] sm:$0xff]
      %v294 = vld [vmem:[%s273 + $0x78] sm:$0xff]
      %v295 = vld [vmem:[%s273 + $0x80] sm:$0xff]
      %v296 = vld [vmem:[%s273 + $0x88] sm:$0xff]
      %v297 = vld [vmem:[%s273 + $0x90] sm:$0xff]
      %v298 = vld [vmem:[%s273 + $0x98] sm:$0xff]
      %v299 = vld [vmem:[%s273 + $0xa0] sm:$0xff]
      %v300 = vld [vmem:[%s273 + $0xa8] sm:$0xff]
      %v301 = vld [vmem:[%s273 + $0xb0] sm:$0xff]
      %v302 = vld [vmem:[%s273 + $0xb8] sm:$0xff]
      %v303 = vld [vmem:[%s273 + $0xc0] sm:$0xff]
      %v304 = vld [vmem:[%s273 + $0xc8] sm:$0xff]
      %v305 = vld [vmem:[%s273 + $0xd0] sm:$0xff]
      %v306 = vld [vmem:[%s273 + $0xd8] sm:$0xff]
      %v307 = vld [vmem:[%s273 + $0xe0] sm:$0xff]
      %v308 = vld [vmem:[%s273 + $0xe8] sm:$0xff]
      %v309 = vld [vmem:[%s273 + $0xf0] sm:$0xff]
      %v310 = vld [vmem:[%s273 + $0xf8] sm:$0xff]
      %v311 = vld [vmem:[%s1] sm:$0xf]
      %v312 = vld [vmem:[%s2] sm:$0x1]
      %v314 = vlaneseq
      %v315 = vshrl.u32 %v314, 7
      %v316 = vsub.s32 0, %v315
      %v317 = vrot.slane %v312, %v316
      %vm319 = vcmask 31744
      %v321 = vsel %vm319, %v279, 0
      %v324 = vsel %vm319, %v280, 0
      %v327 = vsel %vm319, %v281, 0
      %v330 = vsel %vm319, %v282, 0
      %v333 = vsel %vm319, %v283, 0
      %v336 = vsel %vm319, %v284, 0
      %v339 = vsel %vm319, %v285, 0
      %v342 = vsel %vm319, %v286, 0
      %v345 = vsel %vm319, %v287, 0
      %v348 = vsel %vm319, %v288, 0
      %v351 = vsel %vm319, %v289, 0
      %v354 = vsel %vm319, %v290, 0
      %v357 = vsel %vm319, %v291, 0
      %v360 = vsel %vm319, %v292, 0
      %v363 = vsel %vm319, %v293, 0
      %v366 = vsel %vm319, %v294, 0
      %v369 = vsel %vm319, %v295, 0
      %v372 = vsel %vm319, %v296, 0
      %v375 = vsel %vm319, %v297, 0
      %v378 = vsel %vm319, %v298, 0
      %v381 = vsel %vm319, %v299, 0
      %v384 = vsel %vm319, %v300, 0
      %v387 = vsel %vm319, %v301, 0
      %v390 = vsel %vm319, %v302, 0
      %v393 = vsel %vm319, %v303, 0
      %v396 = vsel %vm319, %v304, 0
      %v399 = vsel %vm319, %v305, 0
      %v402 = vsel %vm319, %v306, 0
      %v405 = vsel %vm319, %v307, 0
      %v408 = vsel %vm319, %v308, 0
      %v411 = vsel %vm319, %v309, 0
      %v414 = vsel %vm319, %v310, 0
      %vm416 = vcmask 1043456
      %v418 = vsel %vm416, %v311, 0
      %420 = vmatprep.subr.mxu0 0.0
      %421 = vmatpush1.msra.mxu0 0.0
      %422 = vmatprep.subr.mxu0 0.0
      %423 = vmatpush1.msra.mxu0 0.0
      %424 = vmatprep.subr.mxu0 0.0
      %425 = vmatpush1.msra.mxu0 0.0
      %426 = vmatprep.subr.mxu0 0.0
      %427 = vmatpush1.msra.mxu0 0.0
      %428 = vmatprep.subr.mxu0 0.0
      %429 = vmatpush1.msra.mxu0 0.0
      %430 = vmatprep.subr.mxu0 0.0
      %431 = vmatpush1.msra.mxu0 0.0
      %432 = vmatprep.subr.mxu0 0.0
      %433 = vmatpush1.msra.mxu0 0.0
      %434 = vmatprep.subr.mxu0 0.0
      %435 = vmatpush1.msra.mxu0 0.0
      %436 = vmatprep.subr.mxu0 0.0
      %437 = vmatpush1.msra.mxu0 0.0
      %438 = vmatprep.subr.mxu0 0.0
      %439 = vmatpush1.msra.mxu0 0.0
      %440 = vmatprep.subr.mxu0 0.0
      %441 = vmatpush1.msra.mxu0 0.0
      %442 = vmatprep.subr.mxu0 0.0
      %443 = vmatpush1.msra.mxu0 0.0
      %444 = vmatprep.subr.mxu0 0.0
      %445 = vmatpush1.msra.mxu0 0.0
      %446 = vmatprep.subr.mxu0 0.0
      %447 = vmatpush1.msra.mxu0 0.0
      %448 = vmatprep.subr.mxu0 0.0
      %449 = vmatpush1.msra.mxu0 0.0
      %450 = vmatprep.subr.mxu0 0.0
      %451 = vmatpush1.msra.mxu0 %v418
      %452 = vmatprep.subr.mxu0 0.0
      %453 = vmatpush2.msra.mxu0 0.0
      %454 = vmatprep.subr.mxu0 0.0
      %455 = vmatpush2.msra.mxu0 0.0
      %456 = vmatprep.subr.mxu0 0.0
      %457 = vmatpush2.msra.mxu0 0.0
      %458 = vmatprep.subr.mxu0 0.0
      %459 = vmatpush2.msra.mxu0 0.0
      %460 = vmatprep.subr.mxu0 0.0
      %461 = vmatpush2.msra.mxu0 0.0
      %462 = vmatprep.subr.mxu0 0.0
      %463 = vmatpush2.msra.mxu0 0.0
      %464 = vmatprep.subr.mxu0 0.0
      %465 = vmatpush2.msra.mxu0 0.0
      %466 = vmatprep.subr.mxu0 0.0
      %467 = vmatpush2.msra.mxu0 0.0
      %468 = vmatprep.subr.mxu0 0.0
      %469 = vmatpush2.msra.mxu0 0.0
      %470 = vmatprep.subr.mxu0 0.0
      %471 = vmatpush2.msra.mxu0 0.0
      %472 = vmatprep.subr.mxu0 0.0
      %473 = vmatpush2.msra.mxu0 0.0
      %474 = vmatprep.subr.mxu0 0.0
      %475 = vmatpush2.msra.mxu0 0.0
      %476 = vmatprep.subr.mxu0 0.0
      %477 = vmatpush2.msra.mxu0 0.0
      %478 = vmatprep.subr.mxu0 0.0
      %479 = vmatpush2.msra.mxu0 0.0
      %480 = vmatprep.subr.mxu0 0.0
      %481 = vmatpush2.msra.mxu0 0.0
      %482 = vmatprep.subr.mxu0 0.0
      %483 = vmatpush2.msra.mxu0 0.0
      %484 = vmatprep.mubr.f32.mxu0 0.0
      %485 = vmatmul.mubr.f32.gmra.mxu0 %v321
      %v486 = vpop.f32.mrf.mxu0
      %v487 = vadd.f32 %v317, %v486
      %v488 = vpop.f32.mrf.mxu0
      %489 = vmatprep.mubr.f32.mxu0 0.0
      %490 = vmatmul.mubr.f32.gmra.mxu0 %v324
      %v491 = vpop.f32.mrf.mxu0
      %v492 = vadd.f32 %v317, %v491
      %v493 = vpop.f32.mrf.mxu0
      %494 = vmatprep.mubr.f32.mxu0 0.0
      %495 = vmatmul.mubr.f32.gmra.mxu0 %v327
      %v496 = vpop.f32.mrf.mxu0
      %v497 = vadd.f32 %v317, %v496
      %v498 = vpop.f32.mrf.mxu0
      %499 = vmatprep.mubr.f32.mxu0 0.0
      %500 = vmatmul.mubr.f32.gmra.mxu0 %v330
      %v501 = vpop.f32.mrf.mxu0
      %v502 = vadd.f32 %v317, %v501
      %v503 = vpop.f32.mrf.mxu0
      %504 = vmatprep.mubr.f32.mxu0 0.0
      %505 = vmatmul.mubr.f32.gmra.mxu0 %v333
      %v506 = vpop.f32.mrf.mxu0
      %v507 = vadd.f32 %v317, %v506
      %v508 = vpop.f32.mrf.mxu0
      %509 = vmatprep.mubr.f32.mxu0 0.0
      %510 = vmatmul.mubr.f32.gmra.mxu0 %v336
      %v511 = vpop.f32.mrf.mxu0
      %v512 = vadd.f32 %v317, %v511
      %v513 = vpop.f32.mrf.mxu0
      %514 = vmatprep.mubr.f32.mxu0 0.0
      %515 = vmatmul.mubr.f32.gmra.mxu0 %v339
      %v516 = vpop.f32.mrf.mxu0
      %v517 = vadd.f32 %v317, %v516
      %v518 = vpop.f32.mrf.mxu0
      %519 = vmatprep.mubr.f32.mxu0 0.0
      %520 = vmatmul.mubr.f32.gmra.mxu0 %v342
      %v521 = vpop.f32.mrf.mxu0
      %v522 = vadd.f32 %v317, %v521
      %v523 = vpop.f32.mrf.mxu0
      %524 = vmatprep.mubr.f32.mxu0 0.0
      %525 = vmatmul.mubr.f32.gmra.mxu0 %v345
      %v526 = vpop.f32.mrf.mxu0
      %v527 = vadd.f32 %v317, %v526
      %v528 = vpop.f32.mrf.mxu0
      %529 = vmatprep.mubr.f32.mxu0 0.0
      %530 = vmatmul.mubr.f32.gmra.mxu0 %v348
      %v531 = vpop.f32.mrf.mxu0
      %v532 = vadd.f32 %v317, %v531
      %v533 = vpop.f32.mrf.mxu0
      %534 = vmatprep.mubr.f32.mxu0 0.0
      %535 = vmatmul.mubr.f32.gmra.mxu0 %v351
      %v536 = vpop.f32.mrf.mxu0
      %v537 = vadd.f32 %v317, %v536
      %v538 = vpop.f32.mrf.mxu0
      %539 = vmatprep.mubr.f32.mxu0 0.0
      %540 = vmatmul.mubr.f32.gmra.mxu0 %v354
      %v541 = vpop.f32.mrf.mxu0
      %v542 = vadd.f32 %v317, %v541
      %v543 = vpop.f32.mrf.mxu0
      %544 = vmatprep.mubr.f32.mxu0 0.0
      %545 = vmatmul.mubr.f32.gmra.mxu0 %v357
      %v546 = vpop.f32.mrf.mxu0
      %v547 = vadd.f32 %v317, %v546
      %v548 = vpop.f32.mrf.mxu0
      %549 = vmatprep.mubr.f32.mxu0 0.0
      %550 = vmatmul.mubr.f32.gmra.mxu0 %v360
      %v551 = vpop.f32.mrf.mxu0
      %v552 = vadd.f32 %v317, %v551
      %v553 = vpop.f32.mrf.mxu0
      %554 = vmatprep.mubr.f32.mxu0 0.0
      %555 = vmatmul.mubr.f32.gmra.mxu0 %v363
      %v556 = vpop.f32.mrf.mxu0
      %v557 = vadd.f32 %v317, %v556
      %v558 = vpop.f32.mrf.mxu0
      %559 = vmatprep.mubr.f32.mxu0 0.0
      %560 = vmatmul.mubr.f32.gmra.mxu0 %v366
      %v561 = vpop.f32.mrf.mxu0
      %v562 = vadd.f32 %v317, %v561
      %v563 = vpop.f32.mrf.mxu0
      %564 = vmatprep.mubr.f32.mxu0 0.0
      %565 = vmatmul.mubr.f32.gmra.mxu0 %v369
      %v566 = vpop.f32.mrf.mxu0
      %v567 = vadd.f32 %v317, %v566
      %v568 = vpop.f32.mrf.mxu0
      %569 = vmatprep.mubr.f32.mxu0 0.0
      %570 = vmatmul.mubr.f32.gmra.mxu0 %v372
      %v571 = vpop.f32.mrf.mxu0
      %v572 = vadd.f32 %v317, %v571
      %v573 = vpop.f32.mrf.mxu0
      %574 = vmatprep.mubr.f32.mxu0 0.0
      %575 = vmatmul.mubr.f32.gmra.mxu0 %v375
      %v576 = vpop.f32.mrf.mxu0
      %v577 = vadd.f32 %v317, %v576
      %v578 = vpop.f32.mrf.mxu0
      %579 = vmatprep.mubr.f32.mxu0 0.0
      %580 = vmatmul.mubr.f32.gmra.mxu0 %v378
      %v581 = vpop.f32.mrf.mxu0
      %v582 = vadd.f32 %v317, %v581
      %v583 = vpop.f32.mrf.mxu0
      %584 = vmatprep.mubr.f32.mxu0 0.0
      %585 = vmatmul.mubr.f32.gmra.mxu0 %v381
      %v586 = vpop.f32.mrf.mxu0
      %v587 = vadd.f32 %v317, %v586
      %v588 = vpop.f32.mrf.mxu0
      %589 = vmatprep.mubr.f32.mxu0 0.0
      %590 = vmatmul.mubr.f32.gmra.mxu0 %v384
      %v591 = vpop.f32.mrf.mxu0
      %v592 = vadd.f32 %v317, %v591
      %v593 = vpop.f32.mrf.mxu0
      %594 = vmatprep.mubr.f32.mxu0 0.0
      %595 = vmatmul.mubr.f32.gmra.mxu0 %v387
      %v596 = vpop.f32.mrf.mxu0
      %v597 = vadd.f32 %v317, %v596
      %v598 = vpop.f32.mrf.mxu0
      %599 = vmatprep.mubr.f32.mxu0 0.0
      %600 = vmatmul.mubr.f32.gmra.mxu0 %v390
      %v601 = vpop.f32.mrf.mxu0
      %v602 = vadd.f32 %v317, %v601
      %v603 = vpop.f32.mrf.mxu0
      %604 = vmatprep.mubr.f32.mxu0 0.0
      %605 = vmatmul.mubr.f32.gmra.mxu0 %v393
      %v606 = vpop.f32.mrf.mxu0
      %v607 = vadd.f32 %v317, %v606
      %v608 = vpop.f32.mrf.mxu0
      %609 = vmatprep.mubr.f32.mxu0 0.0
      %610 = vmatmul.mubr.f32.gmra.mxu0 %v396
      %v611 = vpop.f32.mrf.mxu0
      %v612 = vadd.f32 %v317, %v611
      %v613 = vpop.f32.mrf.mxu0
      %614 = vmatprep.mubr.f32.mxu0 0.0
      %615 = vmatmul.mubr.f32.gmra.mxu0 %v399
      %v616 = vpop.f32.mrf.mxu0
      %v617 = vadd.f32 %v317, %v616
      %v618 = vpop.f32.mrf.mxu0
      %619 = vmatprep.mubr.f32.mxu0 0.0
      %620 = vmatmul.mubr.f32.gmra.mxu0 %v402
      %v621 = vpop.f32.mrf.mxu0
      %v622 = vadd.f32 %v317, %v621
      %v623 = vpop.f32.mrf.mxu0
      %624 = vmatprep.mubr.f32.mxu0 0.0
      %625 = vmatmul.mubr.f32.gmra.mxu0 %v405
      %v626 = vpop.f32.mrf.mxu0
      %v627 = vadd.f32 %v317, %v626
      %v628 = vpop.f32.mrf.mxu0
      %629 = vmatprep.mubr.f32.mxu0 0.0
      %630 = vmatmul.mubr.f32.gmra.mxu0 %v408
      %v631 = vpop.f32.mrf.mxu0
      %v632 = vadd.f32 %v317, %v631
      %v633 = vpop.f32.mrf.mxu0
      %634 = vmatprep.mubr.f32.mxu0 0.0
      %635 = vmatmul.mubr.f32.gmra.mxu0 %v411
      %v636 = vpop.f32.mrf.mxu0
      %v637 = vadd.f32 %v317, %v636
      %v638 = vpop.f32.mrf.mxu0
      %639 = vmatprep.mubr.f32.mxu0 0.0
      %640 = vmatmul.mubr.f32.gmra.mxu0 %v414
      %v641 = vpop.f32.mrf.mxu0
      %v642 = vadd.f32 %v317, %v641
      %v643 = vpop.f32.mrf.mxu0
      %644 = vdwg.mxu0
      %v645 = vlaneseq
      %v646 = vshrl.u32 %v645, 7
      %v647 = vadd.s32 %v646, 8
      %v648 = vadd.s32 %v646, 16
      %v649 = vadd.s32 %v646, 24
      %v650 = vadd.s32 %v646, 32
      %v651 = vadd.s32 %v646, 40
      %v652 = vadd.s32 %v646, 48
      %v653 = vadd.s32 %v646, 56
      %v654 = vadd.s32 %v646, 64
      %v655 = vadd.s32 %v646, 72
      %v656 = vadd.s32 %v646, 80
      %v657 = vadd.s32 %v646, 88
      %v658 = vadd.s32 %v646, 96
      %v659 = vadd.s32 %v646, 104
      %v660 = vadd.s32 %v646, 112
      %v661 = vadd.s32 %v646, 120
      %v662 = vadd.s32 %v646, 128
      %v663 = vadd.s32 %v646, 136
      %v664 = vadd.s32 %v646, 144
      %v665 = vadd.s32 %v646, 152
      %v666 = vadd.s32 %v646, 160
      %v667 = vadd.s32 %v646, 168
      %v668 = vadd.s32 %v646, 176
      %v669 = vadd.s32 %v646, 184
      %v670 = vadd.s32 %v646, 192
      %v671 = vadd.s32 %v646, 200
      %v672 = vadd.s32 %v646, 208
      %v673 = vadd.s32 %v646, 216
      %v674 = vadd.s32 %v646, 224
      %v675 = vadd.s32 %v646, 232
      %v676 = vadd.s32 %v646, 240
      %v677 = vadd.s32 %v646, 248
      %vm678 = vcmp.lt.s32.totalorder %v646, 0
      %v679 = vsub.s32 0, %v646
      %v680 = vsel %vm678, %v679, %v646
      %v681 = vshrl.u32 %v680, 4
      %v682 = vand.u32 %v680, 15
      %v683 = vsub.s32 0, %v682
      %v684 = vsel %vm678, %v683, %v682
      %vm685 = vcmp.lt.s32.totalorder %v647, 0
      %v686 = vsub.s32 0, %v647
      %v687 = vsel %vm685, %v686, %v647
      %v688 = vshrl.u32 %v687, 4
      %v689 = vand.u32 %v687, 15
      %v690 = vsub.s32 0, %v689
      %v691 = vsel %vm685, %v690, %v689
      %vm692 = vcmp.lt.s32.totalorder %v648, 0
      %v693 = vsub.s32 0, %v648
      %v694 = vsel %vm692, %v693, %v648
      %v695 = vshrl.u32 %v694, 4
      %v696 = vand.u32 %v694, 15
      %v697 = vsub.s32 0, %v696
      %v698 = vsel %vm692, %v697, %v696
      %vm699 = vcmp.lt.s32.totalorder %v649, 0
      %v700 = vsub.s32 0, %v649
      %v701 = vsel %vm699, %v700, %v649
      %v702 = vshrl.u32 %v701, 4
      %v703 = vand.u32 %v701, 15
      %v704 = vsub.s32 0, %v703
      %v705 = vsel %vm699, %v704, %v703
      %vm706 = vcmp.lt.s32.totalorder %v650, 0
      %v707 = vsub.s32 0, %v650
      %v708 = vsel %vm706, %v707, %v650
      %v709 = vshrl.u32 %v708, 4
      %v710 = vand.u32 %v708, 15
      %v711 = vsub.s32 0, %v710
      %v712 = vsel %vm706, %v711, %v710
      %vm713 = vcmp.lt.s32.totalorder %v651, 0
      %v714 = vsub.s32 0, %v651
      %v715 = vsel %vm713, %v714, %v651
      %v716 = vshrl.u32 %v715, 4
      %v717 = vand.u32 %v715, 15
      %v718 = vsub.s32 0, %v717
      %v719 = vsel %vm713, %v718, %v717
      %vm720 = vcmp.lt.s32.totalorder %v652, 0
      %v721 = vsub.s32 0, %v652
      %v722 = vsel %vm720, %v721, %v652
      %v723 = vshrl.u32 %v722, 4
      %v724 = vand.u32 %v722, 15
      %v725 = vsub.s32 0, %v724
      %v726 = vsel %vm720, %v725, %v724
      %vm727 = vcmp.lt.s32.totalorder %v653, 0
      %v728 = vsub.s32 0, %v653
      %v729 = vsel %vm727, %v728, %v653
      %v730 = vshrl.u32 %v729, 4
      %v731 = vand.u32 %v729, 15
      %v732 = vsub.s32 0, %v731
      %v733 = vsel %vm727, %v732, %v731
      %vm734 = vcmp.lt.s32.totalorder %v654, 0
      %v735 = vsub.s32 0, %v654
      %v736 = vsel %vm734, %v735, %v654
      %v737 = vshrl.u32 %v736, 4
      %v738 = vand.u32 %v736, 15
      %v739 = vsub.s32 0, %v738
      %v740 = vsel %vm734, %v739, %v738
      %vm741 = vcmp.lt.s32.totalorder %v655, 0
      %v742 = vsub.s32 0, %v655
      %v743 = vsel %vm741, %v742, %v655
      %v744 = vshrl.u32 %v743, 4
      %v745 = vand.u32 %v743, 15
      %v746 = vsub.s32 0, %v745
      %v747 = vsel %vm741, %v746, %v745
      %vm748 = vcmp.lt.s32.totalorder %v656, 0
      %v749 = vsub.s32 0, %v656
      %v750 = vsel %vm748, %v749, %v656
      %v751 = vshrl.u32 %v750, 4
      %v752 = vand.u32 %v750, 15
      %v753 = vsub.s32 0, %v752
      %v754 = vsel %vm748, %v753, %v752
      %vm755 = vcmp.lt.s32.totalorder %v657, 0
      %v756 = vsub.s32 0, %v657
      %v757 = vsel %vm755, %v756, %v657
      %v758 = vshrl.u32 %v757, 4
      %v759 = vand.u32 %v757, 15
      %v760 = vsub.s32 0, %v759
      %v761 = vsel %vm755, %v760, %v759
      %vm762 = vcmp.lt.s32.totalorder %v658, 0
      %v763 = vsub.s32 0, %v658
      %v764 = vsel %vm762, %v763, %v658
      %v765 = vshrl.u32 %v764, 4
      %v766 = vand.u32 %v764, 15
      %v767 = vsub.s32 0, %v766
      %v768 = vsel %vm762, %v767, %v766
      %vm769 = vcmp.lt.s32.totalorder %v659, 0
      %v770 = vsub.s32 0, %v659
      %v771 = vsel %vm769, %v770, %v659
      %v772 = vshrl.u32 %v771, 4
      %v773 = vand.u32 %v771, 15
      %v774 = vsub.s32 0, %v773
      %v775 = vsel %vm769, %v774, %v773
      %vm776 = vcmp.lt.s32.totalorder %v660, 0
      %v777 = vsub.s32 0, %v660
      %v778 = vsel %vm776, %v777, %v660
      %v779 = vshrl.u32 %v778, 4
      %v780 = vand.u32 %v778, 15
      %v781 = vsub.s32 0, %v780
      %v782 = vsel %vm776, %v781, %v780
      %vm783 = vcmp.lt.s32.totalorder %v661, 0
      %v784 = vsub.s32 0, %v661
      %v785 = vsel %vm783, %v784, %v661
      %v786 = vshrl.u32 %v785, 4
      %v787 = vand.u32 %v785, 15
      %v788 = vsub.s32 0, %v787
      %v789 = vsel %vm783, %v788, %v787
      %vm790 = vcmp.lt.s32.totalorder %v662, 0
      %v791 = vsub.s32 0, %v662
      %v792 = vsel %vm790, %v791, %v662
      %v793 = vshrl.u32 %v792, 4
      %v794 = vand.u32 %v792, 15
      %v795 = vsub.s32 0, %v794
      %v796 = vsel %vm790, %v795, %v794
      %vm797 = vcmp.lt.s32.totalorder %v663, 0
      %v798 = vsub.s32 0, %v663
      %v799 = vsel %vm797, %v798, %v663
      %v800 = vshrl.u32 %v799, 4
      %v801 = vand.u32 %v799, 15
      %v802 = vsub.s32 0, %v801
      %v803 = vsel %vm797, %v802, %v801
      %vm804 = vcmp.lt.s32.totalorder %v664, 0
      %v805 = vsub.s32 0, %v664
      %v806 = vsel %vm804, %v805, %v664
      %v807 = vshrl.u32 %v806, 4
      %v808 = vand.u32 %v806, 15
      %v809 = vsub.s32 0, %v808
      %v810 = vsel %vm804, %v809, %v808
      %vm811 = vcmp.lt.s32.totalorder %v665, 0
      %v812 = vsub.s32 0, %v665
      %v813 = vsel %vm811, %v812, %v665
      %v814 = vshrl.u32 %v813, 4
      %v815 = vand.u32 %v813, 15
      %v816 = vsub.s32 0, %v815
      %v817 = vsel %vm811, %v816, %v815
      %vm818 = vcmp.lt.s32.totalorder %v666, 0
      %v819 = vsub.s32 0, %v666
      %v820 = vsel %vm818, %v819, %v666
      %v821 = vshrl.u32 %v820, 4
      %v822 = vand.u32 %v820, 15
      %v823 = vsub.s32 0, %v822
      %v824 = vsel %vm818, %v823, %v822
      %vm825 = vcmp.lt.s32.totalorder %v667, 0
      %v826 = vsub.s32 0, %v667
      %v827 = vsel %vm825, %v826, %v667
      %v828 = vshrl.u32 %v827, 4
      %v829 = vand.u32 %v827, 15
      %v830 = vsub.s32 0, %v829
      %v831 = vsel %vm825, %v830, %v829
      %vm832 = vcmp.lt.s32.totalorder %v668, 0
      %v833 = vsub.s32 0, %v668
      %v834 = vsel %vm832, %v833, %v668
      %v835 = vshrl.u32 %v834, 4
      %v836 = vand.u32 %v834, 15
      %v837 = vsub.s32 0, %v836
      %v838 = vsel %vm832, %v837, %v836
      %vm839 = vcmp.lt.s32.totalorder %v669, 0
      %v840 = vsub.s32 0, %v669
      %v841 = vsel %vm839, %v840, %v669
      %v842 = vshrl.u32 %v841, 4
      %v843 = vand.u32 %v841, 15
      %v844 = vsub.s32 0, %v843
      %v845 = vsel %vm839, %v844, %v843
      %vm846 = vcmp.lt.s32.totalorder %v670, 0
      %v847 = vsub.s32 0, %v670
      %v848 = vsel %vm846, %v847, %v670
      %v849 = vshrl.u32 %v848, 4
      %v850 = vand.u32 %v848, 15
      %v851 = vsub.s32 0, %v850
      %v852 = vsel %vm846, %v851, %v850
      %vm853 = vcmp.lt.s32.totalorder %v671, 0
      %v854 = vsub.s32 0, %v671
      %v855 = vsel %vm853, %v854, %v671
      %v856 = vshrl.u32 %v855, 4
      %v857 = vand.u32 %v855, 15
      %v858 = vsub.s32 0, %v857
      %v859 = vsel %vm853, %v858, %v857
      %vm860 = vcmp.lt.s32.totalorder %v672, 0
      %v861 = vsub.s32 0, %v672
      %v862 = vsel %vm860, %v861, %v672
      %v863 = vshrl.u32 %v862, 4
      %v864 = vand.u32 %v862, 15
      %v865 = vsub.s32 0, %v864
      %v866 = vsel %vm860, %v865, %v864
      %vm867 = vcmp.lt.s32.totalorder %v673, 0
      %v868 = vsub.s32 0, %v673
      %v869 = vsel %vm867, %v868, %v673
      %v870 = vshrl.u32 %v869, 4
      %v871 = vand.u32 %v869, 15
      %v872 = vsub.s32 0, %v871
      %v873 = vsel %vm867, %v872, %v871
      %vm874 = vcmp.lt.s32.totalorder %v674, 0
      %v875 = vsub.s32 0, %v674
      %v876 = vsel %vm874, %v875, %v674
      %v877 = vshrl.u32 %v876, 4
      %v878 = vand.u32 %v876, 15
      %v879 = vsub.s32 0, %v878
      %v880 = vsel %vm874, %v879, %v878
      %vm881 = vcmp.lt.s32.totalorder %v675, 0
      %v882 = vsub.s32 0, %v675
      %v883 = vsel %vm881, %v882, %v675
      %v884 = vshrl.u32 %v883, 4
      %v885 = vand.u32 %v883, 15
      %v886 = vsub.s32 0, %v885
      %v887 = vsel %vm881, %v886, %v885
      %vm888 = vcmp.lt.s32.totalorder %v676, 0
      %v889 = vsub.s32 0, %v676
      %v890 = vsel %vm888, %v889, %v676
      %v891 = vshrl.u32 %v890, 4
      %v892 = vand.u32 %v890, 15
      %v893 = vsub.s32 0, %v892
      %v894 = vsel %vm888, %v893, %v892
      %vm895 = vcmp.lt.s32.totalorder %v677, 0
      %v896 = vsub.s32 0, %v677
      %v897 = vsel %vm895, %v896, %v677
      %v898 = vshrl.u32 %v897, 4
      %v899 = vand.u32 %v897, 15
      %v900 = vsub.s32 0, %v899
      %v901 = vsel %vm895, %v900, %v899
      %vm902 = vcmp.ne.s32.totalorder %v684, 0
      %vm903 = vcmp.ne.s32.totalorder %v691, 0
      %vm904 = vcmp.ne.s32.totalorder %v698, 0
      %vm905 = vcmp.ne.s32.totalorder %v705, 0
      %vm906 = vcmp.ne.s32.totalorder %v712, 0
      %vm907 = vcmp.ne.s32.totalorder %v719, 0
      %vm908 = vcmp.ne.s32.totalorder %v726, 0
      %vm909 = vcmp.ne.s32.totalorder %v733, 0
      %vm910 = vcmp.ne.s32.totalorder %v740, 0
      %vm911 = vcmp.ne.s32.totalorder %v747, 0
      %vm912 = vcmp.ne.s32.totalorder %v754, 0
      %vm913 = vcmp.ne.s32.totalorder %v761, 0
      %vm914 = vcmp.ne.s32.totalorder %v768, 0
      %vm915 = vcmp.ne.s32.totalorder %v775, 0
      %vm916 = vcmp.ne.s32.totalorder %v782, 0
      %vm917 = vcmp.ne.s32.totalorder %v789, 0
      %vm918 = vcmp.ne.s32.totalorder %v796, 0
      %vm919 = vcmp.ne.s32.totalorder %v803, 0
      %vm920 = vcmp.ne.s32.totalorder %v810, 0
      %vm921 = vcmp.ne.s32.totalorder %v817, 0
      %vm922 = vcmp.ne.s32.totalorder %v824, 0
      %vm923 = vcmp.ne.s32.totalorder %v831, 0
      %vm924 = vcmp.ne.s32.totalorder %v838, 0
      %vm925 = vcmp.ne.s32.totalorder %v845, 0
      %vm926 = vcmp.ne.s32.totalorder %v852, 0
      %vm927 = vcmp.ne.s32.totalorder %v859, 0
      %vm928 = vcmp.ne.s32.totalorder %v866, 0
      %vm929 = vcmp.ne.s32.totalorder %v873, 0
      %vm930 = vcmp.ne.s32.totalorder %v880, 0
      %vm931 = vcmp.ne.s32.totalorder %v887, 0
      %vm932 = vcmp.ne.s32.totalorder %v894, 0
      %vm933 = vcmp.ne.s32.totalorder %v901, 0
      %vm934 = vcmp.lt.s32.totalorder %v684, 0
      %vm935 = vcmp.lt.s32.totalorder %v691, 0
      %vm936 = vcmp.lt.s32.totalorder %v698, 0
      %vm937 = vcmp.lt.s32.totalorder %v705, 0
      %vm938 = vcmp.lt.s32.totalorder %v712, 0
      %vm939 = vcmp.lt.s32.totalorder %v719, 0
      %vm940 = vcmp.lt.s32.totalorder %v726, 0
      %vm941 = vcmp.lt.s32.totalorder %v733, 0
      %vm942 = vcmp.lt.s32.totalorder %v740, 0
      %vm943 = vcmp.lt.s32.totalorder %v747, 0
      %vm944 = vcmp.lt.s32.totalorder %v754, 0
      %vm945 = vcmp.lt.s32.totalorder %v761, 0
      %vm946 = vcmp.lt.s32.totalorder %v768, 0
      %vm947 = vcmp.lt.s32.totalorder %v775, 0
      %vm948 = vcmp.lt.s32.totalorder %v782, 0
      %vm949 = vcmp.lt.s32.totalorder %v789, 0
      %vm950 = vcmp.lt.s32.totalorder %v796, 0
      %vm951 = vcmp.lt.s32.totalorder %v803, 0
      %vm952 = vcmp.lt.s32.totalorder %v810, 0
      %vm953 = vcmp.lt.s32.totalorder %v817, 0
      %vm954 = vcmp.lt.s32.totalorder %v824, 0
      %vm955 = vcmp.lt.s32.totalorder %v831, 0
      %vm956 = vcmp.lt.s32.totalorder %v838, 0
      %vm957 = vcmp.lt.s32.totalorder %v845, 0
      %vm958 = vcmp.lt.s32.totalorder %v852, 0
      %vm959 = vcmp.lt.s32.totalorder %v859, 0
      %vm960 = vcmp.lt.s32.totalorder %v866, 0
      %vm961 = vcmp.lt.s32.totalorder %v873, 0
      %vm962 = vcmp.lt.s32.totalorder %v880, 0
      %vm963 = vcmp.lt.s32.totalorder %v887, 0
      %vm964 = vcmp.lt.s32.totalorder %v894, 0
      %vm965 = vcmp.lt.s32.totalorder %v901, 0
      %vm966 = vmand %vm934, %vm902
      %vm967 = vmand %vm935, %vm903
      %vm968 = vmand %vm936, %vm904
      %vm969 = vmand %vm937, %vm905
      %vm970 = vmand %vm938, %vm906
      %vm971 = vmand %vm939, %vm907
      %vm972 = vmand %vm940, %vm908
      %vm973 = vmand %vm941, %vm909
      %vm974 = vmand %vm942, %vm910
      %vm975 = vmand %vm943, %vm911
      %vm976 = vmand %vm944, %vm912
      %vm977 = vmand %vm945, %vm913
      %vm978 = vmand %vm946, %vm914
      %vm979 = vmand %vm947, %vm915
      %vm980 = vmand %vm948, %vm916
      %vm981 = vmand %vm949, %vm917
      %vm982 = vmand %vm950, %vm918
      %vm983 = vmand %vm951, %vm919
      %vm984 = vmand %vm952, %vm920
      %vm985 = vmand %vm953, %vm921
      %vm986 = vmand %vm954, %vm922
      %vm987 = vmand %vm955, %vm923
      %vm988 = vmand %vm956, %vm924
      %vm989 = vmand %vm957, %vm925
      %vm990 = vmand %vm958, %vm926
      %vm991 = vmand %vm959, %vm927
      %vm992 = vmand %vm960, %vm928
      %vm993 = vmand %vm961, %vm929
      %vm994 = vmand %vm962, %vm930
      %vm995 = vmand %vm963, %vm931
      %vm996 = vmand %vm964, %vm932
      %vm997 = vmand %vm965, %vm933
      %v998 = vadd.s32 %v684, 16
      %v999 = vadd.s32 %v691, 16
      %v1000 = vadd.s32 %v698, 16
      %v1001 = vadd.s32 %v705, 16
      %v1002 = vadd.s32 %v712, 16
      %v1003 = vadd.s32 %v719, 16
      %v1004 = vadd.s32 %v726, 16
      %v1005 = vadd.s32 %v733, 16
      %v1006 = vadd.s32 %v740, 16
      %v1007 = vadd.s32 %v747, 16
      %v1008 = vadd.s32 %v754, 16
      %v1009 = vadd.s32 %v761, 16
      %v1010 = vadd.s32 %v768, 16
      %v1011 = vadd.s32 %v775, 16
      %v1012 = vadd.s32 %v782, 16
      %v1013 = vadd.s32 %v789, 16
      %v1014 = vadd.s32 %v796, 16
      %v1015 = vadd.s32 %v803, 16
      %v1016 = vadd.s32 %v810, 16
      %v1017 = vadd.s32 %v817, 16
      %v1018 = vadd.s32 %v824, 16
      %v1019 = vadd.s32 %v831, 16
      %v1020 = vadd.s32 %v838, 16
      %v1021 = vadd.s32 %v845, 16
      %v1022 = vadd.s32 %v852, 16
      %v1023 = vadd.s32 %v859, 16
      %v1024 = vadd.s32 %v866, 16
      %v1025 = vadd.s32 %v873, 16
      %v1026 = vadd.s32 %v880, 16
      %v1027 = vadd.s32 %v887, 16
      %v1028 = vadd.s32 %v894, 16
      %v1029 = vadd.s32 %v901, 16
      %v1030 = vsel %vm966, %v998, %v684
      %v1031 = vsel %vm967, %v999, %v691
      %v1032 = vsel %vm968, %v1000, %v698
      %v1033 = vsel %vm969, %v1001, %v705
      %v1034 = vsel %vm970, %v1002, %v712
      %v1035 = vsel %vm971, %v1003, %v719
      %v1036 = vsel %vm972, %v1004, %v726
      %v1037 = vsel %vm973, %v1005, %v733
      %v1038 = vsel %vm974, %v1006, %v740
      %v1039 = vsel %vm975, %v1007, %v747
      %v1040 = vsel %vm976, %v1008, %v754
      %v1041 = vsel %vm977, %v1009, %v761
      %v1042 = vsel %vm978, %v1010, %v768
      %v1043 = vsel %vm979, %v1011, %v775
      %v1044 = vsel %vm980, %v1012, %v782
      %v1045 = vsel %vm981, %v1013, %v789
      %v1046 = vsel %vm982, %v1014, %v796
      %v1047 = vsel %vm983, %v1015, %v803
      %v1048 = vsel %vm984, %v1016, %v810
      %v1049 = vsel %vm985, %v1017, %v817
      %v1050 = vsel %vm986, %v1018, %v824
      %v1051 = vsel %vm987, %v1019, %v831
      %v1052 = vsel %vm988, %v1020, %v838
      %v1053 = vsel %vm989, %v1021, %v845
      %v1054 = vsel %vm990, %v1022, %v852
      %v1055 = vsel %vm991, %v1023, %v859
      %v1056 = vsel %vm992, %v1024, %v866
      %v1057 = vsel %vm993, %v1025, %v873
      %v1058 = vsel %vm994, %v1026, %v880
      %v1059 = vsel %vm995, %v1027, %v887
      %v1060 = vsel %vm996, %v1028, %v894
      %v1061 = vsel %vm997, %v1029, %v901
      %v1062 = vld [vmem:[%s3] sm:$0xff]
      %v1063 = vld [vmem:[%s3 + $0x8] sm:$0x1]
      %vm1094 = vcmask 1040384
      %v1095 = vrot.slane %v487, 7
      %v1096 = vrot.slane %v492, 7
      %v1097 = vsel %vm1094, %v1095, %v1096
      %v1098 = vrot.slane %v497, 7
      %v1099 = vsel %vm1094, %v1096, %v1098
      %v1100 = vrot.slane %v502, 7
      %v1101 = vsel %vm1094, %v1098, %v1100
      %v1102 = vrot.slane %v507, 7
      %v1103 = vsel %vm1094, %v1100, %v1102
      %v1104 = vrot.slane %v512, 7
      %v1105 = vsel %vm1094, %v1102, %v1104
      %v1106 = vrot.slane %v517, 7
      %v1107 = vsel %vm1094, %v1104, %v1106
      %v1108 = vrot.slane %v522, 7
      %v1109 = vsel %vm1094, %v1106, %v1108
      %v1110 = vrot.slane %v527, 7
      %v1111 = vsel %vm1094, %v1108, %v1110
      %v1112 = vrot.slane %v532, 7
      %v1113 = vsel %vm1094, %v1110, %v1112
      %v1114 = vrot.slane %v537, 7
      %v1115 = vsel %vm1094, %v1112, %v1114
      %v1116 = vrot.slane %v542, 7
      %v1117 = vsel %vm1094, %v1114, %v1116
      %v1118 = vrot.slane %v547, 7
      %v1119 = vsel %vm1094, %v1116, %v1118
      %v1120 = vrot.slane %v552, 7
      %v1121 = vsel %vm1094, %v1118, %v1120
      %v1122 = vrot.slane %v557, 7
      %v1123 = vsel %vm1094, %v1120, %v1122
      %v1124 = vrot.slane %v562, 7
      %v1125 = vsel %vm1094, %v1122, %v1124
      %v1126 = vrot.slane %v567, 7
      %v1127 = vsel %vm1094, %v1124, %v1126
      %v1128 = vrot.slane %v572, 7
      %v1129 = vsel %vm1094, %v1126, %v1128
      %v1130 = vrot.slane %v577, 7
      %v1131 = vsel %vm1094, %v1128, %v1130
      %v1132 = vrot.slane %v582, 7
      %v1133 = vsel %vm1094, %v1130, %v1132
      %v1134 = vrot.slane %v587, 7
      %v1135 = vsel %vm1094, %v1132, %v1134
      %v1136 = vrot.slane %v592, 7
      %v1137 = vsel %vm1094, %v1134, %v1136
      %v1138 = vrot.slane %v597, 7
      %v1139 = vsel %vm1094, %v1136, %v1138
      %v1140 = vrot.slane %v602, 7
      %v1141 = vsel %vm1094, %v1138, %v1140
      %v1142 = vrot.slane %v607, 7
      %v1143 = vsel %vm1094, %v1140, %v1142
      %v1144 = vrot.slane %v612, 7
      %v1145 = vsel %vm1094, %v1142, %v1144
      %v1146 = vrot.slane %v617, 7
      %v1147 = vsel %vm1094, %v1144, %v1146
      %v1148 = vrot.slane %v622, 7
      %v1149 = vsel %vm1094, %v1146, %v1148
      %v1150 = vrot.slane %v627, 7
      %v1151 = vsel %vm1094, %v1148, %v1150
      %v1152 = vrot.slane %v632, 7
      %v1153 = vsel %vm1094, %v1150, %v1152
      %v1184 = vsel %vm1094, 0.0, %v1095
      %vm1185 = vcmp.gt.s32.totalorder %v1030, 0
      %vm1186 = vcmp.gt.s32.totalorder %v1031, 0
      %vm1187 = vcmp.gt.s32.totalorder %v1032, 0
      %vm1188 = vcmp.gt.s32.totalorder %v1033, 0
      %vm1189 = vcmp.gt.s32.totalorder %v1034, 0
      %vm1190 = vcmp.gt.s32.totalorder %v1035, 0
      %vm1191 = vcmp.gt.s32.totalorder %v1036, 0
      %vm1192 = vcmp.gt.s32.totalorder %v1037, 0
      %vm1193 = vcmp.gt.s32.totalorder %v1038, 0
      %vm1194 = vcmp.gt.s32.totalorder %v1039, 0
      %vm1195 = vcmp.gt.s32.totalorder %v1040, 0
      %vm1196 = vcmp.gt.s32.totalorder %v1041, 0
      %vm1197 = vcmp.gt.s32.totalorder %v1042, 0
      %vm1198 = vcmp.gt.s32.totalorder %v1043, 0
      %vm1199 = vcmp.gt.s32.totalorder %v1044, 0
      %vm1200 = vcmp.gt.s32.totalorder %v1045, 0
      %vm1201 = vcmp.gt.s32.totalorder %v1046, 0
      %vm1202 = vcmp.gt.s32.totalorder %v1047, 0
      %vm1203 = vcmp.gt.s32.totalorder %v1048, 0
      %vm1204 = vcmp.gt.s32.totalorder %v1049, 0
      %vm1205 = vcmp.gt.s32.totalorder %v1050, 0
      %vm1206 = vcmp.gt.s32.totalorder %v1051, 0
      %vm1207 = vcmp.gt.s32.totalorder %v1052, 0
      %vm1208 = vcmp.gt.s32.totalorder %v1053, 0
      %vm1209 = vcmp.gt.s32.totalorder %v1054, 0
      %vm1210 = vcmp.gt.s32.totalorder %v1055, 0
      %vm1211 = vcmp.gt.s32.totalorder %v1056, 0
      %vm1212 = vcmp.gt.s32.totalorder %v1057, 0
      %vm1213 = vcmp.gt.s32.totalorder %v1058, 0
      %vm1214 = vcmp.gt.s32.totalorder %v1059, 0
      %vm1215 = vcmp.gt.s32.totalorder %v1060, 0
      %vm1216 = vcmp.gt.s32.totalorder %v1061, 0
      %v1217 = vsel %vm1185, 1, 0
      %v1218 = vsel %vm1186, 1, 0
      %v1219 = vsel %vm1187, 1, 0
      %v1220 = vsel %vm1188, 1, 0
      %v1221 = vsel %vm1189, 1, 0
      %v1222 = vsel %vm1190, 1, 0
      %v1223 = vsel %vm1191, 1, 0
      %v1224 = vsel %vm1192, 1, 0
      %v1225 = vsel %vm1193, 1, 0
      %v1226 = vsel %vm1194, 1, 0
      %v1227 = vsel %vm1195, 1, 0
      %v1228 = vsel %vm1196, 1, 0
      %v1229 = vsel %vm1197, 1, 0
      %v1230 = vsel %vm1198, 1, 0
      %v1231 = vsel %vm1199, 1, 0
      %v1232 = vsel %vm1200, 1, 0
      %v1233 = vsel %vm1201, 1, 0
      %v1234 = vsel %vm1202, 1, 0
      %v1235 = vsel %vm1203, 1, 0
      %v1236 = vsel %vm1204, 1, 0
      %v1237 = vsel %vm1205, 1, 0
      %v1238 = vsel %vm1206, 1, 0
      %v1239 = vsel %vm1207, 1, 0
      %v1240 = vsel %vm1208, 1, 0
      %v1241 = vsel %vm1209, 1, 0
      %v1242 = vsel %vm1210, 1, 0
      %v1243 = vsel %vm1211, 1, 0
      %v1244 = vsel %vm1212, 1, 0
      %v1245 = vsel %vm1213, 1, 0
      %v1246 = vsel %vm1214, 1, 0
      %v1247 = vsel %vm1215, 1, 0
      %v1248 = vsel %vm1216, 1, 0
      %vm1249 = vcmp.eq.s32.totalorder %v1217, 1
      %vm1250 = vcmp.eq.s32.totalorder %v1218, 1
      %vm1251 = vcmp.eq.s32.totalorder %v1219, 1
      %vm1252 = vcmp.eq.s32.totalorder %v1220, 1
      %vm1253 = vcmp.eq.s32.totalorder %v1221, 1
      %vm1254 = vcmp.eq.s32.totalorder %v1222, 1
      %vm1255 = vcmp.eq.s32.totalorder %v1223, 1
      %vm1256 = vcmp.eq.s32.totalorder %v1224, 1
      %vm1257 = vcmp.eq.s32.totalorder %v1225, 1
      %vm1258 = vcmp.eq.s32.totalorder %v1226, 1
      %vm1259 = vcmp.eq.s32.totalorder %v1227, 1
      %vm1260 = vcmp.eq.s32.totalorder %v1228, 1
      %vm1261 = vcmp.eq.s32.totalorder %v1229, 1
      %vm1262 = vcmp.eq.s32.totalorder %v1230, 1
      %vm1263 = vcmp.eq.s32.totalorder %v1231, 1
      %vm1264 = vcmp.eq.s32.totalorder %v1232, 1
      %vm1265 = vcmp.eq.s32.totalorder %v1233, 1
      %vm1266 = vcmp.eq.s32.totalorder %v1234, 1
      %vm1267 = vcmp.eq.s32.totalorder %v1235, 1
      %vm1268 = vcmp.eq.s32.totalorder %v1236, 1
      %vm1269 = vcmp.eq.s32.totalorder %v1237, 1
      %vm1270 = vcmp.eq.s32.totalorder %v1238, 1
      %vm1271 = vcmp.eq.s32.totalorder %v1239, 1
      %vm1272 = vcmp.eq.s32.totalorder %v1240, 1
      %vm1273 = vcmp.eq.s32.totalorder %v1241, 1
      %vm1274 = vcmp.eq.s32.totalorder %v1242, 1
      %vm1275 = vcmp.eq.s32.totalorder %v1243, 1
      %vm1276 = vcmp.eq.s32.totalorder %v1244, 1
      %vm1277 = vcmp.eq.s32.totalorder %v1245, 1
      %vm1278 = vcmp.eq.s32.totalorder %v1246, 1
      %vm1279 = vcmp.eq.s32.totalorder %v1247, 1
      %vm1280 = vcmp.eq.s32.totalorder %v1248, 1
      %v1281 = vsel %vm1251, %v1184, 0.0
      %v1282 = vsel %vm1252, %v1097, 0.0
      %v1283 = vsel %vm1253, %v1099, 0.0
      %v1284 = vsel %vm1254, %v1101, 0.0
      %v1285 = vsel %vm1255, %v1103, 0.0
      %v1286 = vsel %vm1256, %v1105, 0.0
      %v1287 = vsel %vm1257, %v1107, 0.0
      %v1288 = vsel %vm1258, %v1109, 0.0
      %v1289 = vsel %vm1259, %v1111, 0.0
      %v1290 = vsel %vm1260, %v1113, 0.0
      %v1291 = vsel %vm1261, %v1115, 0.0
      %v1292 = vsel %vm1262, %v1117, 0.0
      %v1293 = vsel %vm1263, %v1119, 0.0
      %v1294 = vsel %vm1264, %v1121, 0.0
      %v1295 = vsel %vm1265, %v1123, 0.0
      %v1296 = vsel %vm1266, %v1125, 0.0
      %v1297 = vsel %vm1267, %v1127, 0.0
      %v1298 = vsel %vm1268, %v1129, 0.0
      %v1299 = vsel %vm1269, %v1131, 0.0
      %v1300 = vsel %vm1270, %v1133, 0.0
      %v1301 = vsel %vm1271, %v1135, 0.0
      %v1302 = vsel %vm1272, %v1137, 0.0
      %v1303 = vsel %vm1273, %v1139, 0.0
      %v1304 = vsel %vm1274, %v1141, 0.0
      %v1305 = vsel %vm1275, %v1143, 0.0
      %v1306 = vsel %vm1276, %v1145, 0.0
      %v1307 = vsel %vm1277, %v1147, 0.0
      %v1308 = vsel %vm1278, %v1149, 0.0
      %v1309 = vsel %vm1279, %v1151, 0.0
      %v1310 = vsel %vm1280, %v1153, 0.0
      %v1311 = vlaneseq
      %v1312 = vshrl.u32 %v1311, 7
      %v1313 = vsub.s32 0, %v1312
      %v1314 = vrot.slane %v1062, %v1313
      %v1315 = vmul.f32 %v1314, 0.0
      %v1316 = vmul.f32 %v1281, %v1314
      %v1317 = vmul.f32 %v1282, %v1314
      %v1318 = vmul.f32 %v1283, %v1314
      %v1319 = vmul.f32 %v1284, %v1314
      %v1320 = vmul.f32 %v1285, %v1314
      %v1321 = vmul.f32 %v1286, %v1314
      %v1322 = vmul.f32 %v1287, %v1314
      %v1323 = vmul.f32 %v1288, %v1314
      %v1324 = vmul.f32 %v1289, %v1314
      %v1325 = vmul.f32 %v1290, %v1314
      %v1326 = vmul.f32 %v1291, %v1314
      %v1327 = vmul.f32 %v1292, %v1314
      %v1328 = vmul.f32 %v1293, %v1314
      %v1329 = vmul.f32 %v1294, %v1314
      %v1330 = vmul.f32 %v1295, %v1314
      %v1331 = vmul.f32 %v1296, %v1314
      %v1332 = vmul.f32 %v1297, %v1314
      %v1333 = vmul.f32 %v1298, %v1314
      %v1334 = vmul.f32 %v1299, %v1314
      %v1335 = vmul.f32 %v1300, %v1314
      %v1336 = vmul.f32 %v1301, %v1314
      %v1337 = vmul.f32 %v1302, %v1314
      %v1338 = vmul.f32 %v1303, %v1314
      %v1339 = vmul.f32 %v1304, %v1314
      %v1340 = vmul.f32 %v1305, %v1314
      %v1341 = vmul.f32 %v1306, %v1314
      %v1342 = vmul.f32 %v1307, %v1314
      %v1343 = vmul.f32 %v1308, %v1314
      %v1344 = vmul.f32 %v1309, %v1314
      %v1345 = vmul.f32 %v1310, %v1314
      %v1346 = vadd.f32 %v1315, 0.0
      %v1347 = vadd.f32 %v1316, 0.0
      %v1348 = vadd.f32 %v1317, 0.0
      %v1349 = vadd.f32 %v1318, 0.0
      %v1350 = vadd.f32 %v1319, 0.0
      %v1351 = vadd.f32 %v1320, 0.0
      %v1352 = vadd.f32 %v1321, 0.0
      %v1353 = vadd.f32 %v1322, 0.0
      %v1354 = vadd.f32 %v1323, 0.0
      %v1355 = vadd.f32 %v1324, 0.0
      %v1356 = vadd.f32 %v1325, 0.0
      %v1357 = vadd.f32 %v1326, 0.0
      %v1358 = vadd.f32 %v1327, 0.0
      %v1359 = vadd.f32 %v1328, 0.0
      %v1360 = vadd.f32 %v1329, 0.0
      %v1361 = vadd.f32 %v1330, 0.0
      %v1362 = vadd.f32 %v1331, 0.0
      %v1363 = vadd.f32 %v1332, 0.0
      %v1364 = vadd.f32 %v1333, 0.0
      %v1365 = vadd.f32 %v1334, 0.0
      %v1366 = vadd.f32 %v1335, 0.0
      %v1367 = vadd.f32 %v1336, 0.0
      %v1368 = vadd.f32 %v1337, 0.0
      %v1369 = vadd.f32 %v1338, 0.0
      %v1370 = vadd.f32 %v1339, 0.0
      %v1371 = vadd.f32 %v1340, 0.0
      %v1372 = vadd.f32 %v1341, 0.0
      %v1373 = vadd.f32 %v1342, 0.0
      %v1374 = vadd.f32 %v1343, 0.0
      %v1375 = vadd.f32 %v1344, 0.0
      %v1376 = vadd.f32 %v1345, 0.0
      %v1377 = vlaneseq
      %v1378 = vshrl.u32 %v1377, 7
      %v1379 = vsub.s32 1, %v1378
      %v1380 = vrot.slane %v1062, %v1379
      %v1381 = vmul.f32 %v1380, 0.0
      %v1382 = vmul.f32 %v487, %v1380
      %v1383 = vmul.f32 %v492, %v1380
      %v1384 = vmul.f32 %v497, %v1380
      %v1385 = vmul.f32 %v502, %v1380
      %v1386 = vmul.f32 %v507, %v1380
      %v1387 = vmul.f32 %v512, %v1380
      %v1388 = vmul.f32 %v517, %v1380
      %v1389 = vmul.f32 %v522, %v1380
      %v1390 = vmul.f32 %v527, %v1380
      %v1391 = vmul.f32 %v532, %v1380
      %v1392 = vmul.f32 %v537, %v1380
      %v1393 = vmul.f32 %v542, %v1380
      %v1394 = vmul.f32 %v547, %v1380
      %v1395 = vmul.f32 %v552, %v1380
      %v1396 = vmul.f32 %v557, %v1380
      %v1397 = vmul.f32 %v562, %v1380
      %v1398 = vmul.f32 %v567, %v1380
      %v1399 = vmul.f32 %v572, %v1380
      %v1400 = vmul.f32 %v577, %v1380
      %v1401 = vmul.f32 %v582, %v1380
      %v1402 = vmul.f32 %v587, %v1380
      %v1403 = vmul.f32 %v592, %v1380
      %v1404 = vmul.f32 %v597, %v1380
      %v1405 = vmul.f32 %v602, %v1380
      %v1406 = vmul.f32 %v607, %v1380
      %v1407 = vmul.f32 %v612, %v1380
      %v1408 = vmul.f32 %v617, %v1380
      %v1409 = vmul.f32 %v622, %v1380
      %v1410 = vmul.f32 %v627, %v1380
      %v1411 = vmul.f32 %v632, %v1380
      %v1412 = vadd.f32 %v1346, %v1381
      %v1413 = vadd.f32 %v1347, %v1382
      %v1414 = vadd.f32 %v1348, %v1383
      %v1415 = vadd.f32 %v1349, %v1384
      %v1416 = vadd.f32 %v1350, %v1385
      %v1417 = vadd.f32 %v1351, %v1386
      %v1418 = vadd.f32 %v1352, %v1387
      %v1419 = vadd.f32 %v1353, %v1388
      %v1420 = vadd.f32 %v1354, %v1389
      %v1421 = vadd.f32 %v1355, %v1390
      %v1422 = vadd.f32 %v1356, %v1391
      %v1423 = vadd.f32 %v1357, %v1392
      %v1424 = vadd.f32 %v1358, %v1393
      %v1425 = vadd.f32 %v1359, %v1394
      %v1426 = vadd.f32 %v1360, %v1395
      %v1427 = vadd.f32 %v1361, %v1396
      %v1428 = vadd.f32 %v1362, %v1397
      %v1429 = vadd.f32 %v1363, %v1398
      %v1430 = vadd.f32 %v1364, %v1399
      %v1431 = vadd.f32 %v1365, %v1400
      %v1432 = vadd.f32 %v1366, %v1401
      %v1433 = vadd.f32 %v1367, %v1402
      %v1434 = vadd.f32 %v1368, %v1403
      %v1435 = vadd.f32 %v1369, %v1404
      %v1436 = vadd.f32 %v1370, %v1405
      %v1437 = vadd.f32 %v1371, %v1406
      %v1438 = vadd.f32 %v1372, %v1407
      %v1439 = vadd.f32 %v1373, %v1408
      %v1440 = vadd.f32 %v1374, %v1409
      %v1441 = vadd.f32 %v1375, %v1410
      %v1442 = vadd.f32 %v1376, %v1411
      %vm1444 = vcmask 1046528
      %v1445 = vrot.slane %v487, 1
      %v1446 = vrot.slane %v492, 1
      %v1447 = vsel %vm1444, %v1445, %v1446
      %v1448 = vrot.slane %v497, 1
      %v1449 = vsel %vm1444, %v1446, %v1448
      %v1450 = vrot.slane %v502, 1
      %v1451 = vsel %vm1444, %v1448, %v1450
      %v1452 = vrot.slane %v507, 1
      %v1453 = vsel %vm1444, %v1450, %v1452
      %v1454 = vrot.slane %v512, 1
      %v1455 = vsel %vm1444, %v1452, %v1454
      %v1456 = vrot.slane %v517, 1
      %v1457 = vsel %vm1444, %v1454, %v1456
      %v1458 = vrot.slane %v522, 1
      %v1459 = vsel %vm1444, %v1456, %v1458
      %v1460 = vrot.slane %v527, 1
      %v1461 = vsel %vm1444, %v1458, %v1460
      %v1462 = vrot.slane %v532, 1
      %v1463 = vsel %vm1444, %v1460, %v1462
      %v1464 = vrot.slane %v537, 1
      %v1465 = vsel %vm1444, %v1462, %v1464
      %v1466 = vrot.slane %v542, 1
      %v1467 = vsel %vm1444, %v1464, %v1466
      %v1468 = vrot.slane %v547, 1
      %v1469 = vsel %vm1444, %v1466, %v1468
      %v1470 = vrot.slane %v552, 1
      %v1471 = vsel %vm1444, %v1468, %v1470
      %v1472 = vrot.slane %v557, 1
      %v1473 = vsel %vm1444, %v1470, %v1472
      %v1474 = vrot.slane %v562, 1
      %v1475 = vsel %vm1444, %v1472, %v1474
      %v1476 = vrot.slane %v567, 1
      %v1477 = vsel %vm1444, %v1474, %v1476
      %v1478 = vrot.slane %v572, 1
      %v1479 = vsel %vm1444, %v1476, %v1478
      %v1480 = vrot.slane %v577, 1
      %v1481 = vsel %vm1444, %v1478, %v1480
      %v1482 = vrot.slane %v582, 1
      %v1483 = vsel %vm1444, %v1480, %v1482
      %v1484 = vrot.slane %v587, 1
      %v1485 = vsel %vm1444, %v1482, %v1484
      %v1486 = vrot.slane %v592, 1
      %v1487 = vsel %vm1444, %v1484, %v1486
      %v1488 = vrot.slane %v597, 1
      %v1489 = vsel %vm1444, %v1486, %v1488
      %v1490 = vrot.slane %v602, 1
      %v1491 = vsel %vm1444, %v1488, %v1490
      %v1492 = vrot.slane %v607, 1
      %v1493 = vsel %vm1444, %v1490, %v1492
      %v1494 = vrot.slane %v612, 1
      %v1495 = vsel %vm1444, %v1492, %v1494
      %v1496 = vrot.slane %v617, 1
      %v1497 = vsel %vm1444, %v1494, %v1496
      %v1498 = vrot.slane %v622, 1
      %v1499 = vsel %vm1444, %v1496, %v1498
      %v1500 = vrot.slane %v627, 1
      %v1501 = vsel %vm1444, %v1498, %v1500
      %v1502 = vrot.slane %v632, 1
      %v1503 = vsel %vm1444, %v1500, %v1502
      %v1504 = vrot.slane %v637, 1
      %v1505 = vsel %vm1444, %v1502, %v1504
      %v1537 = vsel %vm1444, 0.0, %v1445
      %vm1538 = vcmp.lt.s32.totalorder %v1030, 15
      %vm1539 = vcmp.lt.s32.totalorder %v1031, 15
      %vm1540 = vcmp.lt.s32.totalorder %v1032, 15
      %vm1541 = vcmp.lt.s32.totalorder %v1033, 15
      %vm1542 = vcmp.lt.s32.totalorder %v1034, 15
      %vm1543 = vcmp.lt.s32.totalorder %v1035, 15
      %vm1544 = vcmp.lt.s32.totalorder %v1036, 15
      %vm1545 = vcmp.lt.s32.totalorder %v1037, 15
      %vm1546 = vcmp.lt.s32.totalorder %v1038, 15
      %vm1547 = vcmp.lt.s32.totalorder %v1039, 15
      %vm1548 = vcmp.lt.s32.totalorder %v1040, 15
      %vm1549 = vcmp.lt.s32.totalorder %v1041, 15
      %vm1550 = vcmp.lt.s32.totalorder %v1042, 15
      %vm1551 = vcmp.lt.s32.totalorder %v1043, 15
      %vm1552 = vcmp.lt.s32.totalorder %v1044, 15
      %vm1553 = vcmp.lt.s32.totalorder %v1045, 15
      %vm1554 = vcmp.lt.s32.totalorder %v1046, 15
      %vm1555 = vcmp.lt.s32.totalorder %v1047, 15
      %vm1556 = vcmp.lt.s32.totalorder %v1048, 15
      %vm1557 = vcmp.lt.s32.totalorder %v1049, 15
      %vm1558 = vcmp.lt.s32.totalorder %v1050, 15
      %vm1559 = vcmp.lt.s32.totalorder %v1051, 15
      %vm1560 = vcmp.lt.s32.totalorder %v1052, 15
      %vm1561 = vcmp.lt.s32.totalorder %v1053, 15
      %vm1562 = vcmp.lt.s32.totalorder %v1054, 15
      %vm1563 = vcmp.lt.s32.totalorder %v1055, 15
      %vm1564 = vcmp.lt.s32.totalorder %v1056, 15
      %vm1565 = vcmp.lt.s32.totalorder %v1057, 15
      %vm1566 = vcmp.lt.s32.totalorder %v1058, 15
      %vm1567 = vcmp.lt.s32.totalorder %v1059, 15
      %vm1568 = vcmp.lt.s32.totalorder %v1060, 15
      %vm1569 = vcmp.lt.s32.totalorder %v1061, 15
      %v1570 = vsel %vm1538, 1, 0
      %v1571 = vsel %vm1539, 1, 0
      %v1572 = vsel %vm1540, 1, 0
      %v1573 = vsel %vm1541, 1, 0
      %v1574 = vsel %vm1542, 1, 0
      %v1575 = vsel %vm1543, 1, 0
      %v1576 = vsel %vm1544, 1, 0
      %v1577 = vsel %vm1545, 1, 0
      %v1578 = vsel %vm1546, 1, 0
      %v1579 = vsel %vm1547, 1, 0
      %v1580 = vsel %vm1548, 1, 0
      %v1581 = vsel %vm1549, 1, 0
      %v1582 = vsel %vm1550, 1, 0
      %v1583 = vsel %vm1551, 1, 0
      %v1584 = vsel %vm1552, 1, 0
      %v1585 = vsel %vm1553, 1, 0
      %v1586 = vsel %vm1554, 1, 0
      %v1587 = vsel %vm1555, 1, 0
      %v1588 = vsel %vm1556, 1, 0
      %v1589 = vsel %vm1557, 1, 0
      %v1590 = vsel %vm1558, 1, 0
      %v1591 = vsel %vm1559, 1, 0
      %v1592 = vsel %vm1560, 1, 0
      %v1593 = vsel %vm1561, 1, 0
      %v1594 = vsel %vm1562, 1, 0
      %v1595 = vsel %vm1563, 1, 0
      %v1596 = vsel %vm1564, 1, 0
      %v1597 = vsel %vm1565, 1, 0
      %v1598 = vsel %vm1566, 1, 0
      %v1599 = vsel %vm1567, 1, 0
      %v1600 = vsel %vm1568, 1, 0
      %v1601 = vsel %vm1569, 1, 0
      %vm1602 = vcmp.eq.s32.totalorder %v1570, 1
      %vm1603 = vcmp.eq.s32.totalorder %v1571, 1
      %vm1604 = vcmp.eq.s32.totalorder %v1572, 1
      %vm1605 = vcmp.eq.s32.totalorder %v1573, 1
      %vm1606 = vcmp.eq.s32.totalorder %v1574, 1
      %vm1607 = vcmp.eq.s32.totalorder %v1575, 1
      %vm1608 = vcmp.eq.s32.totalorder %v1576, 1
      %vm1609 = vcmp.eq.s32.totalorder %v1577, 1
      %vm1610 = vcmp.eq.s32.totalorder %v1578, 1
      %vm1611 = vcmp.eq.s32.totalorder %v1579, 1
      %vm1612 = vcmp.eq.s32.totalorder %v1580, 1
      %vm1613 = vcmp.eq.s32.totalorder %v1581, 1
      %vm1614 = vcmp.eq.s32.totalorder %v1582, 1
      %vm1615 = vcmp.eq.s32.totalorder %v1583, 1
      %vm1616 = vcmp.eq.s32.totalorder %v1584, 1
      %vm1617 = vcmp.eq.s32.totalorder %v1585, 1
      %vm1618 = vcmp.eq.s32.totalorder %v1586, 1
      %vm1619 = vcmp.eq.s32.totalorder %v1587, 1
      %vm1620 = vcmp.eq.s32.totalorder %v1588, 1
      %vm1621 = vcmp.eq.s32.totalorder %v1589, 1
      %vm1622 = vcmp.eq.s32.totalorder %v1590, 1
      %vm1623 = vcmp.eq.s32.totalorder %v1591, 1
      %vm1624 = vcmp.eq.s32.totalorder %v1592, 1
      %vm1625 = vcmp.eq.s32.totalorder %v1593, 1
      %vm1626 = vcmp.eq.s32.totalorder %v1594, 1
      %vm1627 = vcmp.eq.s32.totalorder %v1595, 1
      %vm1628 = vcmp.eq.s32.totalorder %v1596, 1
      %vm1629 = vcmp.eq.s32.totalorder %v1597, 1
      %vm1630 = vcmp.eq.s32.totalorder %v1598, 1
      %vm1631 = vcmp.eq.s32.totalorder %v1599, 1
      %vm1632 = vcmp.eq.s32.totalorder %v1600, 1
      %vm1633 = vcmp.eq.s32.totalorder %v1601, 1
      %v1634 = vsel %vm1603, %v1537, 0.0
      %v1635 = vsel %vm1604, %v1447, 0.0
      %v1636 = vsel %vm1605, %v1449, 0.0
      %v1637 = vsel %vm1606, %v1451, 0.0
      %v1638 = vsel %vm1607, %v1453, 0.0
      %v1639 = vsel %vm1608, %v1455, 0.0
      %v1640 = vsel %vm1609, %v1457, 0.0
      %v1641 = vsel %vm1610, %v1459, 0.0
      %v1642 = vsel %vm1611, %v1461, 0.0
      %v1643 = vsel %vm1612, %v1463, 0.0
      %v1644 = vsel %vm1613, %v1465, 0.0
      %v1645 = vsel %vm1614, %v1467, 0.0
      %v1646 = vsel %vm1615, %v1469, 0.0
      %v1647 = vsel %vm1616, %v1471, 0.0
      %v1648 = vsel %vm1617, %v1473, 0.0
      %v1649 = vsel %vm1618, %v1475, 0.0
      %v1650 = vsel %vm1619, %v1477, 0.0
      %v1651 = vsel %vm1620, %v1479, 0.0
      %v1652 = vsel %vm1621, %v1481, 0.0
      %v1653 = vsel %vm1622, %v1483, 0.0
      %v1654 = vsel %vm1623, %v1485, 0.0
      %v1655 = vsel %vm1624, %v1487, 0.0
      %v1656 = vsel %vm1625, %v1489, 0.0
      %v1657 = vsel %vm1626, %v1491, 0.0
      %v1658 = vsel %vm1627, %v1493, 0.0
      %v1659 = vsel %vm1628, %v1495, 0.0
      %v1660 = vsel %vm1629, %v1497, 0.0
      %v1661 = vsel %vm1630, %v1499, 0.0
      %v1662 = vsel %vm1631, %v1501, 0.0
      %v1663 = vsel %vm1632, %v1503, 0.0
      %v1664 = vsel %vm1633, %v1505, 0.0
      %v1665 = vlaneseq
      %v1666 = vshrl.u32 %v1665, 7
      %v1667 = vsub.s32 2, %v1666
      %v1668 = vrot.slane %v1062, %v1667
      %v1669 = vmul.f32 %v1668, 0.0
      %v1670 = vmul.f32 %v1634, %v1668
      %v1671 = vmul.f32 %v1635, %v1668
      %v1672 = vmul.f32 %v1636, %v1668
      %v1673 = vmul.f32 %v1637, %v1668
      %v1674 = vmul.f32 %v1638, %v1668
      %v1675 = vmul.f32 %v1639, %v1668
      %v1676 = vmul.f32 %v1640, %v1668
      %v1677 = vmul.f32 %v1641, %v1668
      %v1678 = vmul.f32 %v1642, %v1668
      %v1679 = vmul.f32 %v1643, %v1668
      %v1680 = vmul.f32 %v1644, %v1668
      %v1681 = vmul.f32 %v1645, %v1668
      %v1682 = vmul.f32 %v1646, %v1668
      %v1683 = vmul.f32 %v1647, %v1668
      %v1684 = vmul.f32 %v1648, %v1668
      %v1685 = vmul.f32 %v1649, %v1668
      %v1686 = vmul.f32 %v1650, %v1668
      %v1687 = vmul.f32 %v1651, %v1668
      %v1688 = vmul.f32 %v1652, %v1668
      %v1689 = vmul.f32 %v1653, %v1668
      %v1690 = vmul.f32 %v1654, %v1668
      %v1691 = vmul.f32 %v1655, %v1668
      %v1692 = vmul.f32 %v1656, %v1668
      %v1693 = vmul.f32 %v1657, %v1668
      %v1694 = vmul.f32 %v1658, %v1668
      %v1695 = vmul.f32 %v1659, %v1668
      %v1696 = vmul.f32 %v1660, %v1668
      %v1697 = vmul.f32 %v1661, %v1668
      %v1698 = vmul.f32 %v1662, %v1668
      %v1699 = vmul.f32 %v1663, %v1668
      %v1700 = vmul.f32 %v1664, %v1668
      %v1701 = vadd.f32 %v1412, %v1669
      %v1702 = vadd.f32 %v1412, %v1670
      %v1703 = vadd.f32 %v1413, %v1671
      %v1704 = vadd.f32 %v1414, %v1672
      %v1705 = vadd.f32 %v1415, %v1673
      %v1706 = vadd.f32 %v1416, %v1674
      %v1707 = vadd.f32 %v1417, %v1675
      %v1708 = vadd.f32 %v1418, %v1676
      %v1709 = vadd.f32 %v1419, %v1677
      %v1710 = vadd.f32 %v1420, %v1678
      %v1711 = vadd.f32 %v1421, %v1679
      %v1712 = vadd.f32 %v1422, %v1680
      %v1713 = vadd.f32 %v1423, %v1681
      %v1714 = vadd.f32 %v1424, %v1682
      %v1715 = vadd.f32 %v1425, %v1683
      %v1716 = vadd.f32 %v1426, %v1684
      %v1717 = vadd.f32 %v1427, %v1685
      %v1718 = vadd.f32 %v1428, %v1686
      %v1719 = vadd.f32 %v1429, %v1687
      %v1720 = vadd.f32 %v1430, %v1688
      %v1721 = vadd.f32 %v1431, %v1689
      %v1722 = vadd.f32 %v1432, %v1690
      %v1723 = vadd.f32 %v1433, %v1691
      %v1724 = vadd.f32 %v1434, %v1692
      %v1725 = vadd.f32 %v1435, %v1693
      %v1726 = vadd.f32 %v1436, %v1694
      %v1727 = vadd.f32 %v1437, %v1695
      %v1728 = vadd.f32 %v1438, %v1696
      %v1729 = vadd.f32 %v1439, %v1697
      %v1730 = vadd.f32 %v1440, %v1698
      %v1731 = vadd.f32 %v1441, %v1699
      %v1732 = vadd.f32 %v1442, %v1700
      %v1734 = vrot.slane %v637, 7
      %v1735 = vsel %vm1094, %v1152, %v1734
      %v1736 = vrot.slane %v642, 7
      %v1737 = vsel %vm1094, %v1734, %v1736
      %v1740 = vsel %vm1249, %v1184, 0.0
      %v1741 = vsel %vm1250, %v1097, 0.0
      %v1742 = vsel %vm1251, %v1099, 0.0
      %v1743 = vsel %vm1252, %v1101, 0.0
      %v1744 = vsel %vm1253, %v1103, 0.0
      %v1745 = vsel %vm1254, %v1105, 0.0
      %v1746 = vsel %vm1255, %v1107, 0.0
      %v1747 = vsel %vm1256, %v1109, 0.0
      %v1748 = vsel %vm1257, %v1111, 0.0
      %v1749 = vsel %vm1258, %v1113, 0.0
      %v1750 = vsel %vm1259, %v1115, 0.0
      %v1751 = vsel %vm1260, %v1117, 0.0
      %v1752 = vsel %vm1261, %v1119, 0.0
      %v1753 = vsel %vm1262, %v1121, 0.0
      %v1754 = vsel %vm1263, %v1123, 0.0
      %v1755 = vsel %vm1264, %v1125, 0.0
      %v1756 = vsel %vm1265, %v1127, 0.0
      %v1757 = vsel %vm1266, %v1129, 0.0
      %v1758 = vsel %vm1267, %v1131, 0.0
      %v1759 = vsel %vm1268, %v1133, 0.0
      %v1760 = vsel %vm1269, %v1135, 0.0
      %v1761 = vsel %vm1270, %v1137, 0.0
      %v1762 = vsel %vm1271, %v1139, 0.0
      %v1763 = vsel %vm1272, %v1141, 0.0
      %v1764 = vsel %vm1273, %v1143, 0.0
      %v1765 = vsel %vm1274, %v1145, 0.0
      %v1766 = vsel %vm1275, %v1147, 0.0
      %v1767 = vsel %vm1276, %v1149, 0.0
      %v1768 = vsel %vm1277, %v1151, 0.0
      %v1769 = vsel %vm1278, %v1153, 0.0
      %v1770 = vsel %vm1279, %v1735, 0.0
      %v1771 = vsel %vm1280, %v1737, 0.0
      %v1772 = vlaneseq
      %v1773 = vshrl.u32 %v1772, 7
      %v1774 = vsub.s32 3, %v1773
      %v1775 = vrot.slane %v1062, %v1774
      %v1776 = vmul.f32 %v1740, %v1775
      %v1777 = vmul.f32 %v1741, %v1775
      %v1778 = vmul.f32 %v1742, %v1775
      %v1779 = vmul.f32 %v1743, %v1775
      %v1780 = vmul.f32 %v1744, %v1775
      %v1781 = vmul.f32 %v1745, %v1775
      %v1782 = vmul.f32 %v1746, %v1775
      %v1783 = vmul.f32 %v1747, %v1775
      %v1784 = vmul.f32 %v1748, %v1775
      %v1785 = vmul.f32 %v1749, %v1775
      %v1786 = vmul.f32 %v1750, %v1775
      %v1787 = vmul.f32 %v1751, %v1775
      %v1788 = vmul.f32 %v1752, %v1775
      %v1789 = vmul.f32 %v1753, %v1775
      %v1790 = vmul.f32 %v1754, %v1775
      %v1791 = vmul.f32 %v1755, %v1775
      %v1792 = vmul.f32 %v1756, %v1775
      %v1793 = vmul.f32 %v1757, %v1775
      %v1794 = vmul.f32 %v1758, %v1775
      %v1795 = vmul.f32 %v1759, %v1775
      %v1796 = vmul.f32 %v1760, %v1775
      %v1797 = vmul.f32 %v1761, %v1775
      %v1798 = vmul.f32 %v1762, %v1775
      %v1799 = vmul.f32 %v1763, %v1775
      %v1800 = vmul.f32 %v1764, %v1775
      %v1801 = vmul.f32 %v1765, %v1775
      %v1802 = vmul.f32 %v1766, %v1775
      %v1803 = vmul.f32 %v1767, %v1775
      %v1804 = vmul.f32 %v1768, %v1775
      %v1805 = vmul.f32 %v1769, %v1775
      %v1806 = vmul.f32 %v1770, %v1775
      %v1807 = vmul.f32 %v1771, %v1775
      %v1808 = vadd.f32 %v1701, %v1776
      %v1809 = vadd.f32 %v1702, %v1777
      %v1810 = vadd.f32 %v1703, %v1778
      %v1811 = vadd.f32 %v1704, %v1779
      %v1812 = vadd.f32 %v1705, %v1780
      %v1813 = vadd.f32 %v1706, %v1781
      %v1814 = vadd.f32 %v1707, %v1782
      %v1815 = vadd.f32 %v1708, %v1783
      %v1816 = vadd.f32 %v1709, %v1784
      %v1817 = vadd.f32 %v1710, %v1785
      %v1818 = vadd.f32 %v1711, %v1786
      %v1819 = vadd.f32 %v1712, %v1787
      %v1820 = vadd.f32 %v1713, %v1788
      %v1821 = vadd.f32 %v1714, %v1789
      %v1822 = vadd.f32 %v1715, %v1790
      %v1823 = vadd.f32 %v1716, %v1791
      %v1824 = vadd.f32 %v1717, %v1792
      %v1825 = vadd.f32 %v1718, %v1793
      %v1826 = vadd.f32 %v1719, %v1794
      %v1827 = vadd.f32 %v1720, %v1795
      %v1828 = vadd.f32 %v1721, %v1796
      %v1829 = vadd.f32 %v1722, %v1797
      %v1830 = vadd.f32 %v1723, %v1798
      %v1831 = vadd.f32 %v1724, %v1799
      %v1832 = vadd.f32 %v1725, %v1800
      %v1833 = vadd.f32 %v1726, %v1801
      %v1834 = vadd.f32 %v1727, %v1802
      %v1835 = vadd.f32 %v1728, %v1803
      %v1836 = vadd.f32 %v1729, %v1804
      %v1837 = vadd.f32 %v1730, %v1805
      %v1838 = vadd.f32 %v1731, %v1806
      %v1839 = vadd.f32 %v1732, %v1807
      %v1840 = vlaneseq
      %v1841 = vshrl.u32 %v1840, 7
      %v1842 = vsub.s32 4, %v1841
      %v1843 = vrot.slane %v1062, %v1842
      %v1844 = vmul.f32 %v487, %v1843
      %v1845 = vmul.f32 %v492, %v1843
      %v1846 = vmul.f32 %v497, %v1843
      %v1847 = vmul.f32 %v502, %v1843
      %v1848 = vmul.f32 %v507, %v1843
      %v1849 = vmul.f32 %v512, %v1843
      %v1850 = vmul.f32 %v517, %v1843
      %v1851 = vmul.f32 %v522, %v1843
      %v1852 = vmul.f32 %v527, %v1843
      %v1853 = vmul.f32 %v532, %v1843
      %v1854 = vmul.f32 %v537, %v1843
      %v1855 = vmul.f32 %v542, %v1843
      %v1856 = vmul.f32 %v547, %v1843
      %v1857 = vmul.f32 %v552, %v1843
      %v1858 = vmul.f32 %v557, %v1843
      %v1859 = vmul.f32 %v562, %v1843
      %v1860 = vmul.f32 %v567, %v1843
      %v1861 = vmul.f32 %v572, %v1843
      %v1862 = vmul.f32 %v577, %v1843
      %v1863 = vmul.f32 %v582, %v1843
      %v1864 = vmul.f32 %v587, %v1843
      %v1865 = vmul.f32 %v592, %v1843
      %v1866 = vmul.f32 %v597, %v1843
      %v1867 = vmul.f32 %v602, %v1843
      %v1868 = vmul.f32 %v607, %v1843
      %v1869 = vmul.f32 %v612, %v1843
      %v1870 = vmul.f32 %v617, %v1843
      %v1871 = vmul.f32 %v622, %v1843
      %v1872 = vmul.f32 %v627, %v1843
      %v1873 = vmul.f32 %v632, %v1843
      %v1874 = vmul.f32 %v637, %v1843
      %v1875 = vmul.f32 %v642, %v1843
      %v1876 = vadd.f32 %v1808, %v1844
      %v1877 = vadd.f32 %v1809, %v1845
      %v1878 = vadd.f32 %v1810, %v1846
      %v1879 = vadd.f32 %v1811, %v1847
      %v1880 = vadd.f32 %v1812, %v1848
      %v1881 = vadd.f32 %v1813, %v1849
      %v1882 = vadd.f32 %v1814, %v1850
      %v1883 = vadd.f32 %v1815, %v1851
      %v1884 = vadd.f32 %v1816, %v1852
      %v1885 = vadd.f32 %v1817, %v1853
      %v1886 = vadd.f32 %v1818, %v1854
      %v1887 = vadd.f32 %v1819, %v1855
      %v1888 = vadd.f32 %v1820, %v1856
      %v1889 = vadd.f32 %v1821, %v1857
      %v1890 = vadd.f32 %v1822, %v1858
      %v1891 = vadd.f32 %v1823, %v1859
      %v1892 = vadd.f32 %v1824, %v1860
      %v1893 = vadd.f32 %v1825, %v1861
      %v1894 = vadd.f32 %v1826, %v1862
      %v1895 = vadd.f32 %v1827, %v1863
      %v1896 = vadd.f32 %v1828, %v1864
      %v1897 = vadd.f32 %v1829, %v1865
      %v1898 = vadd.f32 %v1830, %v1866
      %v1899 = vadd.f32 %v1831, %v1867
      %v1900 = vadd.f32 %v1832, %v1868
      %v1901 = vadd.f32 %v1833, %v1869
      %v1902 = vadd.f32 %v1834, %v1870
      %v1903 = vadd.f32 %v1835, %v1871
      %v1904 = vadd.f32 %v1836, %v1872
      %v1905 = vadd.f32 %v1837, %v1873
      %v1906 = vadd.f32 %v1838, %v1874
      %v1907 = vadd.f32 %v1839, %v1875
      %v1908 = vrot.slane %v642, 1
      %v1909 = vsel %vm1444, %v1504, %v1908
      %v1912 = vsel %vm1444, %v1908, 0.0
      %v1913 = vsel %vm1602, %v1447, 0.0
      %v1914 = vsel %vm1603, %v1449, 0.0
      %v1915 = vsel %vm1604, %v1451, 0.0
      %v1916 = vsel %vm1605, %v1453, 0.0
      %v1917 = vsel %vm1606, %v1455, 0.0
      %v1918 = vsel %vm1607, %v1457, 0.0
      %v1919 = vsel %vm1608, %v1459, 0.0
      %v1920 = vsel %vm1609, %v1461, 0.0
      %v1921 = vsel %vm1610, %v1463, 0.0
      %v1922 = vsel %vm1611, %v1465, 0.0
      %v1923 = vsel %vm1612, %v1467, 0.0
      %v1924 = vsel %vm1613, %v1469, 0.0
      %v1925 = vsel %vm1614, %v1471, 0.0
      %v1926 = vsel %vm1615, %v1473, 0.0
      %v1927 = vsel %vm1616, %v1475, 0.0
      %v1928 = vsel %vm1617, %v1477, 0.0
      %v1929 = vsel %vm1618, %v1479, 0.0
      %v1930 = vsel %vm1619, %v1481, 0.0
      %v1931 = vsel %vm1620, %v1483, 0.0
      %v1932 = vsel %vm1621, %v1485, 0.0
      %v1933 = vsel %vm1622, %v1487, 0.0
      %v1934 = vsel %vm1623, %v1489, 0.0
      %v1935 = vsel %vm1624, %v1491, 0.0
      %v1936 = vsel %vm1625, %v1493, 0.0
      %v1937 = vsel %vm1626, %v1495, 0.0
      %v1938 = vsel %vm1627, %v1497, 0.0
      %v1939 = vsel %vm1628, %v1499, 0.0
      %v1940 = vsel %vm1629, %v1501, 0.0
      %v1941 = vsel %vm1630, %v1503, 0.0
      %v1942 = vsel %vm1631, %v1505, 0.0
      %v1943 = vsel %vm1632, %v1909, 0.0
      %v1944 = vsel %vm1633, %v1912, 0.0
      %v1945 = vlaneseq
      %v1946 = vshrl.u32 %v1945, 7
      %v1947 = vsub.s32 5, %v1946
      %v1948 = vrot.slane %v1062, %v1947
      %v1949 = vmul.f32 %v1913, %v1948
      %v1950 = vmul.f32 %v1914, %v1948
      %v1951 = vmul.f32 %v1915, %v1948
      %v1952 = vmul.f32 %v1916, %v1948
      %v1953 = vmul.f32 %v1917, %v1948
      %v1954 = vmul.f32 %v1918, %v1948
      %v1955 = vmul.f32 %v1919, %v1948
      %v1956 = vmul.f32 %v1920, %v1948
      %v1957 = vmul.f32 %v1921, %v1948
      %v1958 = vmul.f32 %v1922, %v1948
      %v1959 = vmul.f32 %v1923, %v1948
      %v1960 = vmul.f32 %v1924, %v1948
      %v1961 = vmul.f32 %v1925, %v1948
      %v1962 = vmul.f32 %v1926, %v1948
      %v1963 = vmul.f32 %v1927, %v1948
      %v1964 = vmul.f32 %v1928, %v1948
      %v1965 = vmul.f32 %v1929, %v1948
      %v1966 = vmul.f32 %v1930, %v1948
      %v1967 = vmul.f32 %v1931, %v1948
      %v1968 = vmul.f32 %v1932, %v1948
      %v1969 = vmul.f32 %v1933, %v1948
      %v1970 = vmul.f32 %v1934, %v1948
      %v1971 = vmul.f32 %v1935, %v1948
      %v1972 = vmul.f32 %v1936, %v1948
      %v1973 = vmul.f32 %v1937, %v1948
      %v1974 = vmul.f32 %v1938, %v1948
      %v1975 = vmul.f32 %v1939, %v1948
      %v1976 = vmul.f32 %v1940, %v1948
      %v1977 = vmul.f32 %v1941, %v1948
      %v1978 = vmul.f32 %v1942, %v1948
      %v1979 = vmul.f32 %v1943, %v1948
      %v1980 = vmul.f32 %v1944, %v1948
      %v1981 = vadd.f32 %v1876, %v1949
      %v1982 = vadd.f32 %v1877, %v1950
      %v1983 = vadd.f32 %v1878, %v1951
      %v1984 = vadd.f32 %v1879, %v1952
      %v1985 = vadd.f32 %v1880, %v1953
      %v1986 = vadd.f32 %v1881, %v1954
      %v1987 = vadd.f32 %v1882, %v1955
      %v1988 = vadd.f32 %v1883, %v1956
      %v1989 = vadd.f32 %v1884, %v1957
      %v1990 = vadd.f32 %v1885, %v1958
      %v1991 = vadd.f32 %v1886, %v1959
      %v1992 = vadd.f32 %v1887, %v1960
      %v1993 = vadd.f32 %v1888, %v1961
      %v1994 = vadd.f32 %v1889, %v1962
      %v1995 = vadd.f32 %v1890, %v1963
      %v1996 = vadd.f32 %v1891, %v1964
      %v1997 = vadd.f32 %v1892, %v1965
      %v1998 = vadd.f32 %v1893, %v1966
      %v1999 = vadd.f32 %v1894, %v1967
      %v2000 = vadd.f32 %v1895, %v1968
      %v2001 = vadd.f32 %v1896, %v1969
      %v2002 = vadd.f32 %v1897, %v1970
      %v2003 = vadd.f32 %v1898, %v1971
      %v2004 = vadd.f32 %v1899, %v1972
      %v2005 = vadd.f32 %v1900, %v1973
      %v2006 = vadd.f32 %v1901, %v1974
      %v2007 = vadd.f32 %v1902, %v1975
      %v2008 = vadd.f32 %v1903, %v1976
      %v2009 = vadd.f32 %v1904, %v1977
      %v2010 = vadd.f32 %v1905, %v1978
      %v2011 = vadd.f32 %v1906, %v1979
      %v2012 = vadd.f32 %v1907, %v1980
      %v2014 = vsel %vm1094, %v1736, 0.0
      %v2015 = vsel %vm1249, %v1099, 0.0
      %v2016 = vsel %vm1250, %v1101, 0.0
      %v2017 = vsel %vm1251, %v1103, 0.0
      %v2018 = vsel %vm1252, %v1105, 0.0
      %v2019 = vsel %vm1253, %v1107, 0.0
      %v2020 = vsel %vm1254, %v1109, 0.0
      %v2021 = vsel %vm1255, %v1111, 0.0
      %v2022 = vsel %vm1256, %v1113, 0.0
      %v2023 = vsel %vm1257, %v1115, 0.0
      %v2024 = vsel %vm1258, %v1117, 0.0
      %v2025 = vsel %vm1259, %v1119, 0.0
      %v2026 = vsel %vm1260, %v1121, 0.0
      %v2027 = vsel %vm1261, %v1123, 0.0
      %v2028 = vsel %vm1262, %v1125, 0.0
      %v2029 = vsel %vm1263, %v1127, 0.0
      %v2030 = vsel %vm1264, %v1129, 0.0
      %v2031 = vsel %vm1265, %v1131, 0.0
      %v2032 = vsel %vm1266, %v1133, 0.0
      %v2033 = vsel %vm1267, %v1135, 0.0
      %v2034 = vsel %vm1268, %v1137, 0.0
      %v2035 = vsel %vm1269, %v1139, 0.0
      %v2036 = vsel %vm1270, %v1141, 0.0
      %v2037 = vsel %vm1271, %v1143, 0.0
      %v2038 = vsel %vm1272, %v1145, 0.0
      %v2039 = vsel %vm1273, %v1147, 0.0
      %v2040 = vsel %vm1274, %v1149, 0.0
      %v2041 = vsel %vm1275, %v1151, 0.0
      %v2042 = vsel %vm1276, %v1153, 0.0
      %v2043 = vsel %vm1277, %v1735, 0.0
      %v2044 = vsel %vm1278, %v1737, 0.0
      %v2045 = vsel %vm1279, %v2014, 0.0
      %v2046 = vlaneseq
      %v2047 = vshrl.u32 %v2046, 7
      %v2048 = vsub.s32 6, %v2047
      %v2049 = vrot.slane %v1062, %v2048
      %v2050 = vmul.f32 %v2015, %v2049
      %v2051 = vmul.f32 %v2016, %v2049
      %v2052 = vmul.f32 %v2017, %v2049
      %v2053 = vmul.f32 %v2018, %v2049
      %v2054 = vmul.f32 %v2019, %v2049
      %v2055 = vmul.f32 %v2020, %v2049
      %v2056 = vmul.f32 %v2021, %v2049
      %v2057 = vmul.f32 %v2022, %v2049
      %v2058 = vmul.f32 %v2023, %v2049
      %v2059 = vmul.f32 %v2024, %v2049
      %v2060 = vmul.f32 %v2025, %v2049
      %v2061 = vmul.f32 %v2026, %v2049
      %v2062 = vmul.f32 %v2027, %v2049
      %v2063 = vmul.f32 %v2028, %v2049
      %v2064 = vmul.f32 %v2029, %v2049
      %v2065 = vmul.f32 %v2030, %v2049
      %v2066 = vmul.f32 %v2031, %v2049
      %v2067 = vmul.f32 %v2032, %v2049
      %v2068 = vmul.f32 %v2033, %v2049
      %v2069 = vmul.f32 %v2034, %v2049
      %v2070 = vmul.f32 %v2035, %v2049
      %v2071 = vmul.f32 %v2036, %v2049
      %v2072 = vmul.f32 %v2037, %v2049
      %v2073 = vmul.f32 %v2038, %v2049
      %v2074 = vmul.f32 %v2039, %v2049
      %v2075 = vmul.f32 %v2040, %v2049
      %v2076 = vmul.f32 %v2041, %v2049
      %v2077 = vmul.f32 %v2042, %v2049
      %v2078 = vmul.f32 %v2043, %v2049
      %v2079 = vmul.f32 %v2044, %v2049
      %v2080 = vmul.f32 %v2045, %v2049
      %v2081 = vmul.f32 %v2049, 0.0
      %v2082 = vadd.f32 %v1981, %v2050
      %v2083 = vadd.f32 %v1982, %v2051
      %v2084 = vadd.f32 %v1983, %v2052
      %v2085 = vadd.f32 %v1984, %v2053
      %v2086 = vadd.f32 %v1985, %v2054
      %v2087 = vadd.f32 %v1986, %v2055
      %v2088 = vadd.f32 %v1987, %v2056
      %v2089 = vadd.f32 %v1988, %v2057
      %v2090 = vadd.f32 %v1989, %v2058
      %v2091 = vadd.f32 %v1990, %v2059
      %v2092 = vadd.f32 %v1991, %v2060
      %v2093 = vadd.f32 %v1992, %v2061
      %v2094 = vadd.f32 %v1993, %v2062
      %v2095 = vadd.f32 %v1994, %v2063
      %v2096 = vadd.f32 %v1995, %v2064
      %v2097 = vadd.f32 %v1996, %v2065
      %v2098 = vadd.f32 %v1997, %v2066
      %v2099 = vadd.f32 %v1998, %v2067
      %v2100 = vadd.f32 %v1999, %v2068
      %v2101 = vadd.f32 %v2000, %v2069
      %v2102 = vadd.f32 %v2001, %v2070
      %v2103 = vadd.f32 %v2002, %v2071
      %v2104 = vadd.f32 %v2003, %v2072
      %v2105 = vadd.f32 %v2004, %v2073
      %v2106 = vadd.f32 %v2005, %v2074
      %v2107 = vadd.f32 %v2006, %v2075
      %v2108 = vadd.f32 %v2007, %v2076
      %v2109 = vadd.f32 %v2008, %v2077
      %v2110 = vadd.f32 %v2009, %v2078
      %v2111 = vadd.f32 %v2010, %v2079
      %v2112 = vadd.f32 %v2011, %v2080
      %v2113 = vadd.f32 %v2012, %v2081
      %v2114 = vlaneseq
      %v2115 = vshrl.u32 %v2114, 7
      %v2116 = vsub.s32 7, %v2115
      %v2117 = vrot.slane %v1062, %v2116
      %v2118 = vmul.f32 %v497, %v2117
      %v2119 = vmul.f32 %v502, %v2117
      %v2120 = vmul.f32 %v507, %v2117
      %v2121 = vmul.f32 %v512, %v2117
      %v2122 = vmul.f32 %v517, %v2117
      %v2123 = vmul.f32 %v522, %v2117
      %v2124 = vmul.f32 %v527, %v2117
      %v2125 = vmul.f32 %v532, %v2117
      %v2126 = vmul.f32 %v537, %v2117
      %v2127 = vmul.f32 %v542, %v2117
      %v2128 = vmul.f32 %v547, %v2117
      %v2129 = vmul.f32 %v552, %v2117
      %v2130 = vmul.f32 %v557, %v2117
      %v2131 = vmul.f32 %v562, %v2117
      %v2132 = vmul.f32 %v567, %v2117
      %v2133 = vmul.f32 %v572, %v2117
      %v2134 = vmul.f32 %v577, %v2117
      %v2135 = vmul.f32 %v582, %v2117
      %v2136 = vmul.f32 %v587, %v2117
      %v2137 = vmul.f32 %v592, %v2117
      %v2138 = vmul.f32 %v597, %v2117
      %v2139 = vmul.f32 %v602, %v2117
      %v2140 = vmul.f32 %v607, %v2117
      %v2141 = vmul.f32 %v612, %v2117
      %v2142 = vmul.f32 %v617, %v2117
      %v2143 = vmul.f32 %v622, %v2117
      %v2144 = vmul.f32 %v627, %v2117
      %v2145 = vmul.f32 %v632, %v2117
      %v2146 = vmul.f32 %v637, %v2117
      %v2147 = vmul.f32 %v642, %v2117
      %v2148 = vmul.f32 %v2117, 0.0
      %v2149 = vadd.f32 %v2082, %v2118
      %v2150 = vadd.f32 %v2083, %v2119
      %v2151 = vadd.f32 %v2084, %v2120
      %v2152 = vadd.f32 %v2085, %v2121
      %v2153 = vadd.f32 %v2086, %v2122
      %v2154 = vadd.f32 %v2087, %v2123
      %v2155 = vadd.f32 %v2088, %v2124
      %v2156 = vadd.f32 %v2089, %v2125
      %v2157 = vadd.f32 %v2090, %v2126
      %v2158 = vadd.f32 %v2091, %v2127
      %v2159 = vadd.f32 %v2092, %v2128
      %v2160 = vadd.f32 %v2093, %v2129
      %v2161 = vadd.f32 %v2094, %v2130
      %v2162 = vadd.f32 %v2095, %v2131
      %v2163 = vadd.f32 %v2096, %v2132
      %v2164 = vadd.f32 %v2097, %v2133
      %v2165 = vadd.f32 %v2098, %v2134
      %v2166 = vadd.f32 %v2099, %v2135
      %v2167 = vadd.f32 %v2100, %v2136
      %v2168 = vadd.f32 %v2101, %v2137
      %v2169 = vadd.f32 %v2102, %v2138
      %v2170 = vadd.f32 %v2103, %v2139
      %v2171 = vadd.f32 %v2104, %v2140
      %v2172 = vadd.f32 %v2105, %v2141
      %v2173 = vadd.f32 %v2106, %v2142
      %v2174 = vadd.f32 %v2107, %v2143
      %v2175 = vadd.f32 %v2108, %v2144
      %v2176 = vadd.f32 %v2109, %v2145
      %v2177 = vadd.f32 %v2110, %v2146
      %v2178 = vadd.f32 %v2111, %v2147
      %v2179 = vadd.f32 %v2112, %v2148
      %v2180 = vadd.f32 %v2113, %v2148
      %v2181 = vsel %vm1602, %v1451, 0.0
      %v2182 = vsel %vm1603, %v1453, 0.0
      %v2183 = vsel %vm1604, %v1455, 0.0
      %v2184 = vsel %vm1605, %v1457, 0.0
      %v2185 = vsel %vm1606, %v1459, 0.0
      %v2186 = vsel %vm1607, %v1461, 0.0
      %v2187 = vsel %vm1608, %v1463, 0.0
      %v2188 = vsel %vm1609, %v1465, 0.0
      %v2189 = vsel %vm1610, %v1467, 0.0
      %v2190 = vsel %vm1611, %v1469, 0.0
      %v2191 = vsel %vm1612, %v1471, 0.0
      %v2192 = vsel %vm1613, %v1473, 0.0
      %v2193 = vsel %vm1614, %v1475, 0.0
      %v2194 = vsel %vm1615, %v1477, 0.0
      %v2195 = vsel %vm1616, %v1479, 0.0
      %v2196 = vsel %vm1617, %v1481, 0.0
      %v2197 = vsel %vm1618, %v1483, 0.0
      %v2198 = vsel %vm1619, %v1485, 0.0
      %v2199 = vsel %vm1620, %v1487, 0.0
      %v2200 = vsel %vm1621, %v1489, 0.0
      %v2201 = vsel %vm1622, %v1491, 0.0
      %v2202 = vsel %vm1623, %v1493, 0.0
      %v2203 = vsel %vm1624, %v1495, 0.0
      %v2204 = vsel %vm1625, %v1497, 0.0
      %v2205 = vsel %vm1626, %v1499, 0.0
      %v2206 = vsel %vm1627, %v1501, 0.0
      %v2207 = vsel %vm1628, %v1503, 0.0
      %v2208 = vsel %vm1629, %v1505, 0.0
      %v2209 = vsel %vm1630, %v1909, 0.0
      %v2210 = vsel %vm1631, %v1912, 0.0
      %v2211 = vlaneseq
      %v2212 = vshrl.u32 %v2211, 7
      %v2213 = vsub.s32 0, %v2212
      %v2214 = vrot.slane %v1063, %v2213
      %v2215 = vmul.f32 %v2181, %v2214
      %v2216 = vmul.f32 %v2182, %v2214
      %v2217 = vmul.f32 %v2183, %v2214
      %v2218 = vmul.f32 %v2184, %v2214
      %v2219 = vmul.f32 %v2185, %v2214
      %v2220 = vmul.f32 %v2186, %v2214
      %v2221 = vmul.f32 %v2187, %v2214
      %v2222 = vmul.f32 %v2188, %v2214
      %v2223 = vmul.f32 %v2189, %v2214
      %v2224 = vmul.f32 %v2190, %v2214
      %v2225 = vmul.f32 %v2191, %v2214
      %v2226 = vmul.f32 %v2192, %v2214
      %v2227 = vmul.f32 %v2193, %v2214
      %v2228 = vmul.f32 %v2194, %v2214
      %v2229 = vmul.f32 %v2195, %v2214
      %v2230 = vmul.f32 %v2196, %v2214
      %v2231 = vmul.f32 %v2197, %v2214
      %v2232 = vmul.f32 %v2198, %v2214
      %v2233 = vmul.f32 %v2199, %v2214
      %v2234 = vmul.f32 %v2200, %v2214
      %v2235 = vmul.f32 %v2201, %v2214
      %v2236 = vmul.f32 %v2202, %v2214
      %v2237 = vmul.f32 %v2203, %v2214
      %v2238 = vmul.f32 %v2204, %v2214
      %v2239 = vmul.f32 %v2205, %v2214
      %v2240 = vmul.f32 %v2206, %v2214
      %v2241 = vmul.f32 %v2207, %v2214
      %v2242 = vmul.f32 %v2208, %v2214
      %v2243 = vmul.f32 %v2209, %v2214
      %v2244 = vmul.f32 %v2210, %v2214
      %v2245 = vmul.f32 %v2214, 0.0
      %v2246 = vadd.f32 %v2149, %v2215
      %v2247 = vadd.f32 %v2150, %v2216
      %v2248 = vadd.f32 %v2151, %v2217
      %v2249 = vadd.f32 %v2152, %v2218
      %v2250 = vadd.f32 %v2153, %v2219
      %v2251 = vadd.f32 %v2154, %v2220
      %v2252 = vadd.f32 %v2155, %v2221
      %v2253 = vadd.f32 %v2156, %v2222
      %v2254 = vadd.f32 %v2157, %v2223
      %v2255 = vadd.f32 %v2158, %v2224
      %v2256 = vadd.f32 %v2159, %v2225
      %v2257 = vadd.f32 %v2160, %v2226
      %v2258 = vadd.f32 %v2161, %v2227
      %v2259 = vadd.f32 %v2162, %v2228
      %v2260 = vadd.f32 %v2163, %v2229
      %v2261 = vadd.f32 %v2164, %v2230
      %v2262 = vadd.f32 %v2165, %v2231
      %v2263 = vadd.f32 %v2166, %v2232
      %v2264 = vadd.f32 %v2167, %v2233
      %v2265 = vadd.f32 %v2168, %v2234
      %v2266 = vadd.f32 %v2169, %v2235
      %v2267 = vadd.f32 %v2170, %v2236
      %v2268 = vadd.f32 %v2171, %v2237
      %v2269 = vadd.f32 %v2172, %v2238
      %v2270 = vadd.f32 %v2173, %v2239
      %v2271 = vadd.f32 %v2174, %v2240
      %v2272 = vadd.f32 %v2175, %v2241
      %v2273 = vadd.f32 %v2176, %v2242
      %v2274 = vadd.f32 %v2177, %v2243
      %v2275 = vadd.f32 %v2178, %v2244
      %v2276 = vadd.f32 %v2179, %v2245
      %v2277 = vadd.f32 %v2180, %v2245
      %v2278 = vld [vmem:[%s4] sm:$0x1]
      %v2280 = vlaneseq
      %v2281 = vshrl.u32 %v2280, 7
      %v2282 = vsub.s32 0, %v2281
      %v2283 = vrot.slane %v2278, %v2282
      %v2285 = vadd.f32 %v2246, %v2283
      %v2286 = vadd.f32 %v2247, %v2283
      %v2287 = vadd.f32 %v2248, %v2283
      %v2288 = vadd.f32 %v2249, %v2283
      %v2289 = vadd.f32 %v2250, %v2283
      %v2290 = vadd.f32 %v2251, %v2283
      %v2291 = vadd.f32 %v2252, %v2283
      %v2292 = vadd.f32 %v2253, %v2283
      %v2293 = vadd.f32 %v2254, %v2283
      %v2294 = vadd.f32 %v2255, %v2283
      %v2295 = vadd.f32 %v2256, %v2283
      %v2296 = vadd.f32 %v2257, %v2283
      %v2297 = vadd.f32 %v2258, %v2283
      %v2298 = vadd.f32 %v2259, %v2283
      %v2299 = vadd.f32 %v2260, %v2283
      %v2300 = vadd.f32 %v2261, %v2283
      %v2301 = vadd.f32 %v2262, %v2283
      %v2302 = vadd.f32 %v2263, %v2283
      %v2303 = vadd.f32 %v2264, %v2283
      %v2304 = vadd.f32 %v2265, %v2283
      %v2305 = vadd.f32 %v2266, %v2283
      %v2306 = vadd.f32 %v2267, %v2283
      %v2307 = vadd.f32 %v2268, %v2283
      %v2308 = vadd.f32 %v2269, %v2283
      %v2309 = vadd.f32 %v2270, %v2283
      %v2310 = vadd.f32 %v2271, %v2283
      %v2311 = vadd.f32 %v2272, %v2283
      %v2312 = vadd.f32 %v2273, %v2283
      %v2313 = vadd.f32 %v2274, %v2283
      %v2314 = vadd.f32 %v2275, %v2283
      %v2315 = vadd.f32 %v2276, %v2283
      %v2316 = vadd.f32 %v2277, %v2283
      %v2317 = vmul.f32 %v2285, 0.5
      %v2318 = vmul.f32 %v2286, 0.5
      %v2319 = vmul.f32 %v2287, 0.5
      %v2320 = vmul.f32 %v2288, 0.5
      %v2321 = vmul.f32 %v2289, 0.5
      %v2322 = vmul.f32 %v2290, 0.5
      %v2323 = vmul.f32 %v2291, 0.5
      %v2324 = vmul.f32 %v2292, 0.5
      %v2325 = vmul.f32 %v2293, 0.5
      %v2326 = vmul.f32 %v2294, 0.5
      %v2327 = vmul.f32 %v2295, 0.5
      %v2328 = vmul.f32 %v2296, 0.5
      %v2329 = vmul.f32 %v2297, 0.5
      %v2330 = vmul.f32 %v2298, 0.5
      %v2331 = vmul.f32 %v2299, 0.5
      %v2332 = vmul.f32 %v2300, 0.5
      %v2333 = vmul.f32 %v2301, 0.5
      %v2334 = vmul.f32 %v2302, 0.5
      %v2335 = vmul.f32 %v2303, 0.5
      %v2336 = vmul.f32 %v2304, 0.5
      %v2337 = vmul.f32 %v2305, 0.5
      %v2338 = vmul.f32 %v2306, 0.5
      %v2339 = vmul.f32 %v2307, 0.5
      %v2340 = vmul.f32 %v2308, 0.5
      %v2341 = vmul.f32 %v2309, 0.5
      %v2342 = vmul.f32 %v2310, 0.5
      %v2343 = vmul.f32 %v2311, 0.5
      %v2344 = vmul.f32 %v2312, 0.5
      %v2345 = vmul.f32 %v2313, 0.5
      %v2346 = vmul.f32 %v2314, 0.5
      %v2347 = vmul.f32 %v2315, 0.5
      %v2348 = vmul.f32 %v2316, 0.5
      %v2349 = vmul.f32 %v2285, 0.70710677
      %v2350 = vmul.f32 %v2286, 0.70710677
      %v2351 = vmul.f32 %v2287, 0.70710677
      %v2352 = vmul.f32 %v2288, 0.70710677
      %v2353 = vmul.f32 %v2289, 0.70710677
      %v2354 = vmul.f32 %v2290, 0.70710677
      %v2355 = vmul.f32 %v2291, 0.70710677
      %v2356 = vmul.f32 %v2292, 0.70710677
      %v2357 = vmul.f32 %v2293, 0.70710677
      %v2358 = vmul.f32 %v2294, 0.70710677
      %v2359 = vmul.f32 %v2295, 0.70710677
      %v2360 = vmul.f32 %v2296, 0.70710677
      %v2361 = vmul.f32 %v2297, 0.70710677
      %v2362 = vmul.f32 %v2298, 0.70710677
      %v2363 = vmul.f32 %v2299, 0.70710677
      %v2364 = vmul.f32 %v2300, 0.70710677
      %v2365 = vmul.f32 %v2301, 0.70710677
      %v2366 = vmul.f32 %v2302, 0.70710677
      %v2367 = vmul.f32 %v2303, 0.70710677
      %v2368 = vmul.f32 %v2304, 0.70710677
      %v2369 = vmul.f32 %v2305, 0.70710677
      %v2370 = vmul.f32 %v2306, 0.70710677
      %v2371 = vmul.f32 %v2307, 0.70710677
      %v2372 = vmul.f32 %v2308, 0.70710677
      %v2373 = vmul.f32 %v2309, 0.70710677
      %v2374 = vmul.f32 %v2310, 0.70710677
      %v2375 = vmul.f32 %v2311, 0.70710677
      %v2376 = vmul.f32 %v2312, 0.70710677
      %v2377 = vmul.f32 %v2313, 0.70710677
      %v2378 = vmul.f32 %v2314, 0.70710677
      %v2379 = vmul.f32 %v2315, 0.70710677
      %v2380 = vmul.f32 %v2316, 0.70710677
      %v2381 = vand.u32 2147483647, %v2349
      %v2382 = vand.u32 2147483647, %v2350
      %v2383 = vand.u32 2147483647, %v2351
      %v2384 = vand.u32 2147483647, %v2352
      %v2385 = vand.u32 2147483647, %v2353
      %v2386 = vand.u32 2147483647, %v2354
      %v2387 = vand.u32 2147483647, %v2355
      %v2388 = vand.u32 2147483647, %v2356
      %v2389 = vand.u32 2147483647, %v2357
      %v2390 = vand.u32 2147483647, %v2358
      %v2391 = vand.u32 2147483647, %v2359
      %v2392 = vand.u32 2147483647, %v2360
      %v2393 = vand.u32 2147483647, %v2361
      %v2394 = vand.u32 2147483647, %v2362
      %v2395 = vand.u32 2147483647, %v2363
      %v2396 = vand.u32 2147483647, %v2364
      %v2397 = vand.u32 2147483647, %v2365
      %v2398 = vand.u32 2147483647, %v2366
      %v2399 = vand.u32 2147483647, %v2367
      %v2400 = vand.u32 2147483647, %v2368
      %v2401 = vand.u32 2147483647, %v2369
      %v2402 = vand.u32 2147483647, %v2370
      %v2403 = vand.u32 2147483647, %v2371
      %v2404 = vand.u32 2147483647, %v2372
      %v2405 = vand.u32 2147483647, %v2373
      %v2406 = vand.u32 2147483647, %v2374
      %v2407 = vand.u32 2147483647, %v2375
      %v2408 = vand.u32 2147483647, %v2376
      %v2409 = vand.u32 2147483647, %v2377
      %v2410 = vand.u32 2147483647, %v2378
      %v2411 = vand.u32 2147483647, %v2379
      %v2412 = vand.u32 2147483647, %v2380
      %v2413 = vmul.f32 %v2381, 0.3275911
      %v2414 = vmul.f32 %v2382, 0.3275911
      %v2415 = vmul.f32 %v2383, 0.3275911
      %v2416 = vmul.f32 %v2384, 0.3275911
      %v2417 = vmul.f32 %v2385, 0.3275911
      %v2418 = vmul.f32 %v2386, 0.3275911
      %v2419 = vmul.f32 %v2387, 0.3275911
      %v2420 = vmul.f32 %v2388, 0.3275911
      %v2421 = vmul.f32 %v2389, 0.3275911
      %v2422 = vmul.f32 %v2390, 0.3275911
      %v2423 = vmul.f32 %v2391, 0.3275911
      %v2424 = vmul.f32 %v2392, 0.3275911
      %v2425 = vmul.f32 %v2393, 0.3275911
      %v2426 = vmul.f32 %v2394, 0.3275911
      %v2427 = vmul.f32 %v2395, 0.3275911
      %v2428 = vmul.f32 %v2396, 0.3275911
      %v2429 = vmul.f32 %v2397, 0.3275911
      %v2430 = vmul.f32 %v2398, 0.3275911
      %v2431 = vmul.f32 %v2399, 0.3275911
      %v2432 = vmul.f32 %v2400, 0.3275911
      %v2433 = vmul.f32 %v2401, 0.3275911
      %v2434 = vmul.f32 %v2402, 0.3275911
      %v2435 = vmul.f32 %v2403, 0.3275911
      %v2436 = vmul.f32 %v2404, 0.3275911
      %v2437 = vmul.f32 %v2405, 0.3275911
      %v2438 = vmul.f32 %v2406, 0.3275911
      %v2439 = vmul.f32 %v2407, 0.3275911
      %v2440 = vmul.f32 %v2408, 0.3275911
      %v2441 = vmul.f32 %v2409, 0.3275911
      %v2442 = vmul.f32 %v2410, 0.3275911
      %v2443 = vmul.f32 %v2411, 0.3275911
      %v2444 = vmul.f32 %v2412, 0.3275911
      %v2445 = vadd.f32 %v2413, 1.0
      %v2446 = vadd.f32 %v2414, 1.0
      %v2447 = vadd.f32 %v2415, 1.0
      %v2448 = vadd.f32 %v2416, 1.0
      %v2449 = vadd.f32 %v2417, 1.0
      %v2450 = vadd.f32 %v2418, 1.0
      %v2451 = vadd.f32 %v2419, 1.0
      %v2452 = vadd.f32 %v2420, 1.0
      %v2453 = vadd.f32 %v2421, 1.0
      %v2454 = vadd.f32 %v2422, 1.0
      %v2455 = vadd.f32 %v2423, 1.0
      %v2456 = vadd.f32 %v2424, 1.0
      %v2457 = vadd.f32 %v2425, 1.0
      %v2458 = vadd.f32 %v2426, 1.0
      %v2459 = vadd.f32 %v2427, 1.0
      %v2460 = vadd.f32 %v2428, 1.0
      %v2461 = vadd.f32 %v2429, 1.0
      %v2462 = vadd.f32 %v2430, 1.0
      %v2463 = vadd.f32 %v2431, 1.0
      %v2464 = vadd.f32 %v2432, 1.0
      %v2465 = vadd.f32 %v2433, 1.0
      %v2466 = vadd.f32 %v2434, 1.0
      %v2467 = vadd.f32 %v2435, 1.0
      %v2468 = vadd.f32 %v2436, 1.0
      %v2469 = vadd.f32 %v2437, 1.0
      %v2470 = vadd.f32 %v2438, 1.0
      %v2471 = vadd.f32 %v2439, 1.0
      %v2472 = vadd.f32 %v2440, 1.0
      %v2473 = vadd.f32 %v2441, 1.0
      %v2474 = vadd.f32 %v2442, 1.0
      %v2475 = vadd.f32 %v2443, 1.0
      %v2476 = vadd.f32 %v2444, 1.0
      %v2477 = vrcp.pop %v2445
      %v2478 = vrcp.pop %v2446
      %v2479 = vrcp.pop %v2447
      %v2480 = vrcp.pop %v2448
      %v2481 = vrcp.pop %v2449
      %v2482 = vrcp.pop %v2450
      %v2483 = vrcp.pop %v2451
      %v2484 = vrcp.pop %v2452
      %v2485 = vrcp.pop %v2453
      %v2486 = vrcp.pop %v2454
      %v2487 = vrcp.pop %v2455
      %v2488 = vrcp.pop %v2456
      %v2489 = vrcp.pop %v2457
      %v2490 = vrcp.pop %v2458
      %v2491 = vrcp.pop %v2459
      %v2492 = vrcp.pop %v2460
      %v2493 = vrcp.pop %v2461
      %v2494 = vrcp.pop %v2462
      %v2495 = vrcp.pop %v2463
      %v2496 = vrcp.pop %v2464
      %v2497 = vrcp.pop %v2465
      %v2498 = vrcp.pop %v2466
      %v2499 = vrcp.pop %v2467
      %v2500 = vrcp.pop %v2468
      %v2501 = vrcp.pop %v2469
      %v2502 = vrcp.pop %v2470
      %v2503 = vrcp.pop %v2471
      %v2504 = vrcp.pop %v2472
      %v2505 = vrcp.pop %v2473
      %v2506 = vrcp.pop %v2474
      %v2507 = vrcp.pop %v2475
      %v2508 = vrcp.pop %v2476
      %v2509 = vmul.f32 %v2477, 1.0614054
      %v2510 = vmul.f32 %v2478, 1.0614054
      %v2511 = vmul.f32 %v2479, 1.0614054
      %v2512 = vmul.f32 %v2480, 1.0614054
      %v2513 = vmul.f32 %v2481, 1.0614054
      %v2514 = vmul.f32 %v2482, 1.0614054
      %v2515 = vmul.f32 %v2483, 1.0614054
      %v2516 = vmul.f32 %v2484, 1.0614054
      %v2517 = vmul.f32 %v2485, 1.0614054
      %v2518 = vmul.f32 %v2486, 1.0614054
      %v2519 = vmul.f32 %v2487, 1.0614054
      %v2520 = vmul.f32 %v2488, 1.0614054
      %v2521 = vmul.f32 %v2489, 1.0614054
      %v2522 = vmul.f32 %v2490, 1.0614054
      %v2523 = vmul.f32 %v2491, 1.0614054
      %v2524 = vmul.f32 %v2492, 1.0614054
      %v2525 = vmul.f32 %v2493, 1.0614054
      %v2526 = vmul.f32 %v2494, 1.0614054
      %v2527 = vmul.f32 %v2495, 1.0614054
      %v2528 = vmul.f32 %v2496, 1.0614054
      %v2529 = vmul.f32 %v2497, 1.0614054
      %v2530 = vmul.f32 %v2498, 1.0614054
      %v2531 = vmul.f32 %v2499, 1.0614054
      %v2532 = vmul.f32 %v2500, 1.0614054
      %v2533 = vmul.f32 %v2501, 1.0614054
      %v2534 = vmul.f32 %v2502, 1.0614054
      %v2535 = vmul.f32 %v2503, 1.0614054
      %v2536 = vmul.f32 %v2504, 1.0614054
      %v2537 = vmul.f32 %v2505, 1.0614054
      %v2538 = vmul.f32 %v2506, 1.0614054
      %v2539 = vmul.f32 %v2507, 1.0614054
      %v2540 = vmul.f32 %v2508, 1.0614054
      %v2541 = vadd.f32 %v2509, -1.4531521
      %v2542 = vadd.f32 %v2510, -1.4531521
      %v2543 = vadd.f32 %v2511, -1.4531521
      %v2544 = vadd.f32 %v2512, -1.4531521
      %v2545 = vadd.f32 %v2513, -1.4531521
      %v2546 = vadd.f32 %v2514, -1.4531521
      %v2547 = vadd.f32 %v2515, -1.4531521
      %v2548 = vadd.f32 %v2516, -1.4531521
      %v2549 = vadd.f32 %v2517, -1.4531521
      %v2550 = vadd.f32 %v2518, -1.4531521
      %v2551 = vadd.f32 %v2519, -1.4531521
      %v2552 = vadd.f32 %v2520, -1.4531521
      %v2553 = vadd.f32 %v2521, -1.4531521
      %v2554 = vadd.f32 %v2522, -1.4531521
      %v2555 = vadd.f32 %v2523, -1.4531521
      %v2556 = vadd.f32 %v2524, -1.4531521
      %v2557 = vadd.f32 %v2525, -1.4531521
      %v2558 = vadd.f32 %v2526, -1.4531521
      %v2559 = vadd.f32 %v2527, -1.4531521
      %v2560 = vadd.f32 %v2528, -1.4531521
      %v2561 = vadd.f32 %v2529, -1.4531521
      %v2562 = vadd.f32 %v2530, -1.4531521
      %v2563 = vadd.f32 %v2531, -1.4531521
      %v2564 = vadd.f32 %v2532, -1.4531521
      %v2565 = vadd.f32 %v2533, -1.4531521
      %v2566 = vadd.f32 %v2534, -1.4531521
      %v2567 = vadd.f32 %v2535, -1.4531521
      %v2568 = vadd.f32 %v2536, -1.4531521
      %v2569 = vadd.f32 %v2537, -1.4531521
      %v2570 = vadd.f32 %v2538, -1.4531521
      %v2571 = vadd.f32 %v2539, -1.4531521
      %v2572 = vadd.f32 %v2540, -1.4531521
      %v2573 = vmul.f32 %v2477, %v2541
      %v2574 = vmul.f32 %v2478, %v2542
      %v2575 = vmul.f32 %v2479, %v2543
      %v2576 = vmul.f32 %v2480, %v2544
      %v2577 = vmul.f32 %v2481, %v2545
      %v2578 = vmul.f32 %v2482, %v2546
      %v2579 = vmul.f32 %v2483, %v2547
      %v2580 = vmul.f32 %v2484, %v2548
      %v2581 = vmul.f32 %v2485, %v2549
      %v2582 = vmul.f32 %v2486, %v2550
      %v2583 = vmul.f32 %v2487, %v2551
      %v2584 = vmul.f32 %v2488, %v2552
      %v2585 = vmul.f32 %v2489, %v2553
      %v2586 = vmul.f32 %v2490, %v2554
      %v2587 = vmul.f32 %v2491, %v2555
      %v2588 = vmul.f32 %v2492, %v2556
      %v2589 = vmul.f32 %v2493, %v2557
      %v2590 = vmul.f32 %v2494, %v2558
      %v2591 = vmul.f32 %v2495, %v2559
      %v2592 = vmul.f32 %v2496, %v2560
      %v2593 = vmul.f32 %v2497, %v2561
      %v2594 = vmul.f32 %v2498, %v2562
      %v2595 = vmul.f32 %v2499, %v2563
      %v2596 = vmul.f32 %v2500, %v2564
      %v2597 = vmul.f32 %v2501, %v2565
      %v2598 = vmul.f32 %v2502, %v2566
      %v2599 = vmul.f32 %v2503, %v2567
      %v2600 = vmul.f32 %v2504, %v2568
      %v2601 = vmul.f32 %v2505, %v2569
      %v2602 = vmul.f32 %v2506, %v2570
      %v2603 = vmul.f32 %v2507, %v2571
      %v2604 = vmul.f32 %v2508, %v2572
      %v2605 = vadd.f32 %v2573, 1.4214138
      %v2606 = vadd.f32 %v2574, 1.4214138
      %v2607 = vadd.f32 %v2575, 1.4214138
      %v2608 = vadd.f32 %v2576, 1.4214138
      %v2609 = vadd.f32 %v2577, 1.4214138
      %v2610 = vadd.f32 %v2578, 1.4214138
      %v2611 = vadd.f32 %v2579, 1.4214138
      %v2612 = vadd.f32 %v2580, 1.4214138
      %v2613 = vadd.f32 %v2581, 1.4214138
      %v2614 = vadd.f32 %v2582, 1.4214138
      %v2615 = vadd.f32 %v2583, 1.4214138
      %v2616 = vadd.f32 %v2584, 1.4214138
      %v2617 = vadd.f32 %v2585, 1.4214138
      %v2618 = vadd.f32 %v2586, 1.4214138
      %v2619 = vadd.f32 %v2587, 1.4214138
      %v2620 = vadd.f32 %v2588, 1.4214138
      %v2621 = vadd.f32 %v2589, 1.4214138
      %v2622 = vadd.f32 %v2590, 1.4214138
      %v2623 = vadd.f32 %v2591, 1.4214138
      %v2624 = vadd.f32 %v2592, 1.4214138
      %v2625 = vadd.f32 %v2593, 1.4214138
      %v2626 = vadd.f32 %v2594, 1.4214138
      %v2627 = vadd.f32 %v2595, 1.4214138
      %v2628 = vadd.f32 %v2596, 1.4214138
      %v2629 = vadd.f32 %v2597, 1.4214138
      %v2630 = vadd.f32 %v2598, 1.4214138
      %v2631 = vadd.f32 %v2599, 1.4214138
      %v2632 = vadd.f32 %v2600, 1.4214138
      %v2633 = vadd.f32 %v2601, 1.4214138
      %v2634 = vadd.f32 %v2602, 1.4214138
      %v2635 = vadd.f32 %v2603, 1.4214138
      %v2636 = vadd.f32 %v2604, 1.4214138
      %v2637 = vmul.f32 %v2477, %v2605
      %v2638 = vmul.f32 %v2478, %v2606
      %v2639 = vmul.f32 %v2479, %v2607
      %v2640 = vmul.f32 %v2480, %v2608
      %v2641 = vmul.f32 %v2481, %v2609
      %v2642 = vmul.f32 %v2482, %v2610
      %v2643 = vmul.f32 %v2483, %v2611
      %v2644 = vmul.f32 %v2484, %v2612
      %v2645 = vmul.f32 %v2485, %v2613
      %v2646 = vmul.f32 %v2486, %v2614
      %v2647 = vmul.f32 %v2487, %v2615
      %v2648 = vmul.f32 %v2488, %v2616
      %v2649 = vmul.f32 %v2489, %v2617
      %v2650 = vmul.f32 %v2490, %v2618
      %v2651 = vmul.f32 %v2491, %v2619
      %v2652 = vmul.f32 %v2492, %v2620
      %v2653 = vmul.f32 %v2493, %v2621
      %v2654 = vmul.f32 %v2494, %v2622
      %v2655 = vmul.f32 %v2495, %v2623
      %v2656 = vmul.f32 %v2496, %v2624
      %v2657 = vmul.f32 %v2497, %v2625
      %v2658 = vmul.f32 %v2498, %v2626
      %v2659 = vmul.f32 %v2499, %v2627
      %v2660 = vmul.f32 %v2500, %v2628
      %v2661 = vmul.f32 %v2501, %v2629
      %v2662 = vmul.f32 %v2502, %v2630
      %v2663 = vmul.f32 %v2503, %v2631
      %v2664 = vmul.f32 %v2504, %v2632
      %v2665 = vmul.f32 %v2505, %v2633
      %v2666 = vmul.f32 %v2506, %v2634
      %v2667 = vmul.f32 %v2507, %v2635
      %v2668 = vmul.f32 %v2508, %v2636
      %v2669 = vadd.f32 %v2637, -0.28449672
      %v2670 = vadd.f32 %v2638, -0.28449672
      %v2671 = vadd.f32 %v2639, -0.28449672
      %v2672 = vadd.f32 %v2640, -0.28449672
      %v2673 = vadd.f32 %v2641, -0.28449672
      %v2674 = vadd.f32 %v2642, -0.28449672
      %v2675 = vadd.f32 %v2643, -0.28449672
      %v2676 = vadd.f32 %v2644, -0.28449672
      %v2677 = vadd.f32 %v2645, -0.28449672
      %v2678 = vadd.f32 %v2646, -0.28449672
      %v2679 = vadd.f32 %v2647, -0.28449672
      %v2680 = vadd.f32 %v2648, -0.28449672
      %v2681 = vadd.f32 %v2649, -0.28449672
      %v2682 = vadd.f32 %v2650, -0.28449672
      %v2683 = vadd.f32 %v2651, -0.28449672
      %v2684 = vadd.f32 %v2652, -0.28449672
      %v2685 = vadd.f32 %v2653, -0.28449672
      %v2686 = vadd.f32 %v2654, -0.28449672
      %v2687 = vadd.f32 %v2655, -0.28449672
      %v2688 = vadd.f32 %v2656, -0.28449672
      %v2689 = vadd.f32 %v2657, -0.28449672
      %v2690 = vadd.f32 %v2658, -0.28449672
      %v2691 = vadd.f32 %v2659, -0.28449672
      %v2692 = vadd.f32 %v2660, -0.28449672
      %v2693 = vadd.f32 %v2661, -0.28449672
      %v2694 = vadd.f32 %v2662, -0.28449672
      %v2695 = vadd.f32 %v2663, -0.28449672
      %v2696 = vadd.f32 %v2664, -0.28449672
      %v2697 = vadd.f32 %v2665, -0.28449672
      %v2698 = vadd.f32 %v2666, -0.28449672
      %v2699 = vadd.f32 %v2667, -0.28449672
      %v2700 = vadd.f32 %v2668, -0.28449672
      %v2701 = vmul.f32 %v2477, %v2669
      %v2702 = vmul.f32 %v2478, %v2670
      %v2703 = vmul.f32 %v2479, %v2671
      %v2704 = vmul.f32 %v2480, %v2672
      %v2705 = vmul.f32 %v2481, %v2673
      %v2706 = vmul.f32 %v2482, %v2674
      %v2707 = vmul.f32 %v2483, %v2675
      %v2708 = vmul.f32 %v2484, %v2676
      %v2709 = vmul.f32 %v2485, %v2677
      %v2710 = vmul.f32 %v2486, %v2678
      %v2711 = vmul.f32 %v2487, %v2679
      %v2712 = vmul.f32 %v2488, %v2680
      %v2713 = vmul.f32 %v2489, %v2681
      %v2714 = vmul.f32 %v2490, %v2682
      %v2715 = vmul.f32 %v2491, %v2683
      %v2716 = vmul.f32 %v2492, %v2684
      %v2717 = vmul.f32 %v2493, %v2685
      %v2718 = vmul.f32 %v2494, %v2686
      %v2719 = vmul.f32 %v2495, %v2687
      %v2720 = vmul.f32 %v2496, %v2688
      %v2721 = vmul.f32 %v2497, %v2689
      %v2722 = vmul.f32 %v2498, %v2690
      %v2723 = vmul.f32 %v2499, %v2691
      %v2724 = vmul.f32 %v2500, %v2692
      %v2725 = vmul.f32 %v2501, %v2693
      %v2726 = vmul.f32 %v2502, %v2694
      %v2727 = vmul.f32 %v2503, %v2695
      %v2728 = vmul.f32 %v2504, %v2696
      %v2729 = vmul.f32 %v2505, %v2697
      %v2730 = vmul.f32 %v2506, %v2698
      %v2731 = vmul.f32 %v2507, %v2699
      %v2732 = vmul.f32 %v2508, %v2700
      %v2733 = vadd.f32 %v2701, 0.2548296
      %v2734 = vadd.f32 %v2702, 0.2548296
      %v2735 = vadd.f32 %v2703, 0.2548296
      %v2736 = vadd.f32 %v2704, 0.2548296
      %v2737 = vadd.f32 %v2705, 0.2548296
      %v2738 = vadd.f32 %v2706, 0.2548296
      %v2739 = vadd.f32 %v2707, 0.2548296
      %v2740 = vadd.f32 %v2708, 0.2548296
      %v2741 = vadd.f32 %v2709, 0.2548296
      %v2742 = vadd.f32 %v2710, 0.2548296
      %v2743 = vadd.f32 %v2711, 0.2548296
      %v2744 = vadd.f32 %v2712, 0.2548296
      %v2745 = vadd.f32 %v2713, 0.2548296
      %v2746 = vadd.f32 %v2714, 0.2548296
      %v2747 = vadd.f32 %v2715, 0.2548296
      %v2748 = vadd.f32 %v2716, 0.2548296
      %v2749 = vadd.f32 %v2717, 0.2548296
      %v2750 = vadd.f32 %v2718, 0.2548296
      %v2751 = vadd.f32 %v2719, 0.2548296
      %v2752 = vadd.f32 %v2720, 0.2548296
      %v2753 = vadd.f32 %v2721, 0.2548296
      %v2754 = vadd.f32 %v2722, 0.2548296
      %v2755 = vadd.f32 %v2723, 0.2548296
      %v2756 = vadd.f32 %v2724, 0.2548296
      %v2757 = vadd.f32 %v2725, 0.2548296
      %v2758 = vadd.f32 %v2726, 0.2548296
      %v2759 = vadd.f32 %v2727, 0.2548296
      %v2760 = vadd.f32 %v2728, 0.2548296
      %v2761 = vadd.f32 %v2729, 0.2548296
      %v2762 = vadd.f32 %v2730, 0.2548296
      %v2763 = vadd.f32 %v2731, 0.2548296
      %v2764 = vadd.f32 %v2732, 0.2548296
      %v2765 = vmul.f32 %v2477, %v2733
      %v2766 = vmul.f32 %v2478, %v2734
      %v2767 = vmul.f32 %v2479, %v2735
      %v2768 = vmul.f32 %v2480, %v2736
      %v2769 = vmul.f32 %v2481, %v2737
      %v2770 = vmul.f32 %v2482, %v2738
      %v2771 = vmul.f32 %v2483, %v2739
      %v2772 = vmul.f32 %v2484, %v2740
      %v2773 = vmul.f32 %v2485, %v2741
      %v2774 = vmul.f32 %v2486, %v2742
      %v2775 = vmul.f32 %v2487, %v2743
      %v2776 = vmul.f32 %v2488, %v2744
      %v2777 = vmul.f32 %v2489, %v2745
      %v2778 = vmul.f32 %v2490, %v2746
      %v2779 = vmul.f32 %v2491, %v2747
      %v2780 = vmul.f32 %v2492, %v2748
      %v2781 = vmul.f32 %v2493, %v2749
      %v2782 = vmul.f32 %v2494, %v2750
      %v2783 = vmul.f32 %v2495, %v2751
      %v2784 = vmul.f32 %v2496, %v2752
      %v2785 = vmul.f32 %v2497, %v2753
      %v2786 = vmul.f32 %v2498, %v2754
      %v2787 = vmul.f32 %v2499, %v2755
      %v2788 = vmul.f32 %v2500, %v2756
      %v2789 = vmul.f32 %v2501, %v2757
      %v2790 = vmul.f32 %v2502, %v2758
      %v2791 = vmul.f32 %v2503, %v2759
      %v2792 = vmul.f32 %v2504, %v2760
      %v2793 = vmul.f32 %v2505, %v2761
      %v2794 = vmul.f32 %v2506, %v2762
      %v2795 = vmul.f32 %v2507, %v2763
      %v2796 = vmul.f32 %v2508, %v2764
      %v2797 = vsub.f32 0.0, %v2381
      %v2798 = vsub.f32 0.0, %v2382
      %v2799 = vsub.f32 0.0, %v2383
      %v2800 = vsub.f32 0.0, %v2384
      %v2801 = vsub.f32 0.0, %v2385
      %v2802 = vsub.f32 0.0, %v2386
      %v2803 = vsub.f32 0.0, %v2387
      %v2804 = vsub.f32 0.0, %v2388
      %v2805 = vsub.f32 0.0, %v2389
      %v2806 = vsub.f32 0.0, %v2390
      %v2807 = vsub.f32 0.0, %v2391
      %v2808 = vsub.f32 0.0, %v2392
      %v2809 = vsub.f32 0.0, %v2393
      %v2810 = vsub.f32 0.0, %v2394
      %v2811 = vsub.f32 0.0, %v2395
      %v2812 = vsub.f32 0.0, %v2396
      %v2813 = vsub.f32 0.0, %v2397
      %v2814 = vsub.f32 0.0, %v2398
      %v2815 = vsub.f32 0.0, %v2399
      %v2816 = vsub.f32 0.0, %v2400
      %v2817 = vsub.f32 0.0, %v2401
      %v2818 = vsub.f32 0.0, %v2402
      %v2819 = vsub.f32 0.0, %v2403
      %v2820 = vsub.f32 0.0, %v2404
      %v2821 = vsub.f32 0.0, %v2405
      %v2822 = vsub.f32 0.0, %v2406
      %v2823 = vsub.f32 0.0, %v2407
      %v2824 = vsub.f32 0.0, %v2408
      %v2825 = vsub.f32 0.0, %v2409
      %v2826 = vsub.f32 0.0, %v2410
      %v2827 = vsub.f32 0.0, %v2411
      %v2828 = vsub.f32 0.0, %v2412
      %v2829 = vmul.f32 %v2797, %v2381
      %v2830 = vmul.f32 %v2798, %v2382
      %v2831 = vmul.f32 %v2799, %v2383
      %v2832 = vmul.f32 %v2800, %v2384
      %v2833 = vmul.f32 %v2801, %v2385
      %v2834 = vmul.f32 %v2802, %v2386
      %v2835 = vmul.f32 %v2803, %v2387
      %v2836 = vmul.f32 %v2804, %v2388
      %v2837 = vmul.f32 %v2805, %v2389
      %v2838 = vmul.f32 %v2806, %v2390
      %v2839 = vmul.f32 %v2807, %v2391
      %v2840 = vmul.f32 %v2808, %v2392
      %v2841 = vmul.f32 %v2809, %v2393
      %v2842 = vmul.f32 %v2810, %v2394
      %v2843 = vmul.f32 %v2811, %v2395
      %v2844 = vmul.f32 %v2812, %v2396
      %v2845 = vmul.f32 %v2813, %v2397
      %v2846 = vmul.f32 %v2814, %v2398
      %v2847 = vmul.f32 %v2815, %v2399
      %v2848 = vmul.f32 %v2816, %v2400
      %v2849 = vmul.f32 %v2817, %v2401
      %v2850 = vmul.f32 %v2818, %v2402
      %v2851 = vmul.f32 %v2819, %v2403
      %v2852 = vmul.f32 %v2820, %v2404
      %v2853 = vmul.f32 %v2821, %v2405
      %v2854 = vmul.f32 %v2822, %v2406
      %v2855 = vmul.f32 %v2823, %v2407
      %v2856 = vmul.f32 %v2824, %v2408
      %v2857 = vmul.f32 %v2825, %v2409
      %v2858 = vmul.f32 %v2826, %v2410
      %v2859 = vmul.f32 %v2827, %v2411
      %v2860 = vmul.f32 %v2828, %v2412
      %v2861 = vmul.f32 %v2829, 1.442695
      %v2862 = vpow.pop %v2861
      %v2863 = vmul.f32 %v2830, 1.442695
      %v2864 = vpow.pop %v2863
      %v2865 = vmul.f32 %v2831, 1.442695
      %v2866 = vpow.pop %v2865
      %v2867 = vmul.f32 %v2832, 1.442695
      %v2868 = vpow.pop %v2867
      %v2869 = vmul.f32 %v2833, 1.442695
      %v2870 = vpow.pop %v2869
      %v2871 = vmul.f32 %v2834, 1.442695
      %v2872 = vpow.pop %v2871
      %v2873 = vmul.f32 %v2835, 1.442695
      %v2874 = vpow.pop %v2873
      %v2875 = vmul.f32 %v2836, 1.442695
      %v2876 = vpow.pop %v2875
      %v2877 = vmul.f32 %v2837, 1.442695
      %v2878 = vpow.pop %v2877
      %v2879 = vmul.f32 %v2838, 1.442695
      %v2880 = vpow.pop %v2879
      %v2881 = vmul.f32 %v2839, 1.442695
      %v2882 = vpow.pop %v2881
      %v2883 = vmul.f32 %v2840, 1.442695
      %v2884 = vpow.pop %v2883
      %v2885 = vmul.f32 %v2841, 1.442695
      %v2886 = vpow.pop %v2885
      %v2887 = vmul.f32 %v2842, 1.442695
      %v2888 = vpow.pop %v2887
      %v2889 = vmul.f32 %v2843, 1.442695
      %v2890 = vpow.pop %v2889
      %v2891 = vmul.f32 %v2844, 1.442695
      %v2892 = vpow.pop %v2891
      %v2893 = vmul.f32 %v2845, 1.442695
      %v2894 = vpow.pop %v2893
      %v2895 = vmul.f32 %v2846, 1.442695
      %v2896 = vpow.pop %v2895
      %v2897 = vmul.f32 %v2847, 1.442695
      %v2898 = vpow.pop %v2897
      %v2899 = vmul.f32 %v2848, 1.442695
      %v2900 = vpow.pop %v2899
      %v2901 = vmul.f32 %v2849, 1.442695
      %v2902 = vpow.pop %v2901
      %v2903 = vmul.f32 %v2850, 1.442695
      %v2904 = vpow.pop %v2903
      %v2905 = vmul.f32 %v2851, 1.442695
      %v2906 = vpow.pop %v2905
      %v2907 = vmul.f32 %v2852, 1.442695
      %v2908 = vpow.pop %v2907
      %v2909 = vmul.f32 %v2853, 1.442695
      %v2910 = vpow.pop %v2909
      %v2911 = vmul.f32 %v2854, 1.442695
      %v2912 = vpow.pop %v2911
      %v2913 = vmul.f32 %v2855, 1.442695
      %v2914 = vpow.pop %v2913
      %v2915 = vmul.f32 %v2856, 1.442695
      %v2916 = vpow.pop %v2915
      %v2917 = vmul.f32 %v2857, 1.442695
      %v2918 = vpow.pop %v2917
      %v2919 = vmul.f32 %v2858, 1.442695
      %v2920 = vpow.pop %v2919
      %v2921 = vmul.f32 %v2859, 1.442695
      %v2922 = vpow.pop %v2921
      %v2923 = vmul.f32 %v2860, 1.442695
      %v2924 = vpow.pop %v2923
      %v2925 = vmul.f32 %v2765, %v2862
      %v2926 = vmul.f32 %v2766, %v2864
      %v2927 = vmul.f32 %v2767, %v2866
      %v2928 = vmul.f32 %v2768, %v2868
      %v2929 = vmul.f32 %v2769, %v2870
      %v2930 = vmul.f32 %v2770, %v2872
      %v2931 = vmul.f32 %v2771, %v2874
      %v2932 = vmul.f32 %v2772, %v2876
      %v2933 = vmul.f32 %v2773, %v2878
      %v2934 = vmul.f32 %v2774, %v2880
      %v2935 = vmul.f32 %v2775, %v2882
      %v2936 = vmul.f32 %v2776, %v2884
      %v2937 = vmul.f32 %v2777, %v2886
      %v2938 = vmul.f32 %v2778, %v2888
      %v2939 = vmul.f32 %v2779, %v2890
      %v2940 = vmul.f32 %v2780, %v2892
      %v2941 = vmul.f32 %v2781, %v2894
      %v2942 = vmul.f32 %v2782, %v2896
      %v2943 = vmul.f32 %v2783, %v2898
      %v2944 = vmul.f32 %v2784, %v2900
      %v2945 = vmul.f32 %v2785, %v2902
      %v2946 = vmul.f32 %v2786, %v2904
      %v2947 = vmul.f32 %v2787, %v2906
      %v2948 = vmul.f32 %v2788, %v2908
      %v2949 = vmul.f32 %v2789, %v2910
      %v2950 = vmul.f32 %v2790, %v2912
      %v2951 = vmul.f32 %v2791, %v2914
      %v2952 = vmul.f32 %v2792, %v2916
      %v2953 = vmul.f32 %v2793, %v2918
      %v2954 = vmul.f32 %v2794, %v2920
      %v2955 = vmul.f32 %v2795, %v2922
      %v2956 = vmul.f32 %v2796, %v2924
      %v2957 = vsub.f32 1.0, %v2925
      %v2958 = vsub.f32 1.0, %v2926
      %v2959 = vsub.f32 1.0, %v2927
      %v2960 = vsub.f32 1.0, %v2928
      %v2961 = vsub.f32 1.0, %v2929
      %v2962 = vsub.f32 1.0, %v2930
      %v2963 = vsub.f32 1.0, %v2931
      %v2964 = vsub.f32 1.0, %v2932
      %v2965 = vsub.f32 1.0, %v2933
      %v2966 = vsub.f32 1.0, %v2934
      %v2967 = vsub.f32 1.0, %v2935
      %v2968 = vsub.f32 1.0, %v2936
      %v2969 = vsub.f32 1.0, %v2937
      %v2970 = vsub.f32 1.0, %v2938
      %v2971 = vsub.f32 1.0, %v2939
      %v2972 = vsub.f32 1.0, %v2940
      %v2973 = vsub.f32 1.0, %v2941
      %v2974 = vsub.f32 1.0, %v2942
      %v2975 = vsub.f32 1.0, %v2943
      %v2976 = vsub.f32 1.0, %v2944
      %v2977 = vsub.f32 1.0, %v2945
      %v2978 = vsub.f32 1.0, %v2946
      %v2979 = vsub.f32 1.0, %v2947
      %v2980 = vsub.f32 1.0, %v2948
      %v2981 = vsub.f32 1.0, %v2949
      %v2982 = vsub.f32 1.0, %v2950
      %v2983 = vsub.f32 1.0, %v2951
      %v2984 = vsub.f32 1.0, %v2952
      %v2985 = vsub.f32 1.0, %v2953
      %v2986 = vsub.f32 1.0, %v2954
      %v2987 = vsub.f32 1.0, %v2955
      %v2988 = vsub.f32 1.0, %v2956
      %vm2989 = vcmp.lt.f32.partialorder %v2349, 0.0
      %vm2990 = vcmp.lt.f32.partialorder %v2350, 0.0
      %vm2991 = vcmp.lt.f32.partialorder %v2351, 0.0
      %vm2992 = vcmp.lt.f32.partialorder %v2352, 0.0
      %vm2993 = vcmp.lt.f32.partialorder %v2353, 0.0
      %vm2994 = vcmp.lt.f32.partialorder %v2354, 0.0
      %vm2995 = vcmp.lt.f32.partialorder %v2355, 0.0
      %vm2996 = vcmp.lt.f32.partialorder %v2356, 0.0
      %vm2997 = vcmp.lt.f32.partialorder %v2357, 0.0
      %vm2998 = vcmp.lt.f32.partialorder %v2358, 0.0
      %vm2999 = vcmp.lt.f32.partialorder %v2359, 0.0
      %vm3000 = vcmp.lt.f32.partialorder %v2360, 0.0
      %vm3001 = vcmp.lt.f32.partialorder %v2361, 0.0
      %vm3002 = vcmp.lt.f32.partialorder %v2362, 0.0
      %vm3003 = vcmp.lt.f32.partialorder %v2363, 0.0
      %vm3004 = vcmp.lt.f32.partialorder %v2364, 0.0
      %vm3005 = vcmp.lt.f32.partialorder %v2365, 0.0
      %vm3006 = vcmp.lt.f32.partialorder %v2366, 0.0
      %vm3007 = vcmp.lt.f32.partialorder %v2367, 0.0
      %vm3008 = vcmp.lt.f32.partialorder %v2368, 0.0
      %vm3009 = vcmp.lt.f32.partialorder %v2369, 0.0
      %vm3010 = vcmp.lt.f32.partialorder %v2370, 0.0
      %vm3011 = vcmp.lt.f32.partialorder %v2371, 0.0
      %vm3012 = vcmp.lt.f32.partialorder %v2372, 0.0
      %vm3013 = vcmp.lt.f32.partialorder %v2373, 0.0
      %vm3014 = vcmp.lt.f32.partialorder %v2374, 0.0
      %vm3015 = vcmp.lt.f32.partialorder %v2375, 0.0
      %vm3016 = vcmp.lt.f32.partialorder %v2376, 0.0
      %vm3017 = vcmp.lt.f32.partialorder %v2377, 0.0
      %vm3018 = vcmp.lt.f32.partialorder %v2378, 0.0
      %vm3019 = vcmp.lt.f32.partialorder %v2379, 0.0
      %vm3020 = vcmp.lt.f32.partialorder %v2380, 0.0
      %v3021 = vsub.f32 0.0, %v2957
      %v3022 = vsub.f32 0.0, %v2958
      %v3023 = vsub.f32 0.0, %v2959
      %v3024 = vsub.f32 0.0, %v2960
      %v3025 = vsub.f32 0.0, %v2961
      %v3026 = vsub.f32 0.0, %v2962
      %v3027 = vsub.f32 0.0, %v2963
      %v3028 = vsub.f32 0.0, %v2964
      %v3029 = vsub.f32 0.0, %v2965
      %v3030 = vsub.f32 0.0, %v2966
      %v3031 = vsub.f32 0.0, %v2967
      %v3032 = vsub.f32 0.0, %v2968
      %v3033 = vsub.f32 0.0, %v2969
      %v3034 = vsub.f32 0.0, %v2970
      %v3035 = vsub.f32 0.0, %v2971
      %v3036 = vsub.f32 0.0, %v2972
      %v3037 = vsub.f32 0.0, %v2973
      %v3038 = vsub.f32 0.0, %v2974
      %v3039 = vsub.f32 0.0, %v2975
      %v3040 = vsub.f32 0.0, %v2976
      %v3041 = vsub.f32 0.0, %v2977
      %v3042 = vsub.f32 0.0, %v2978
      %v3043 = vsub.f32 0.0, %v2979
      %v3044 = vsub.f32 0.0, %v2980
      %v3045 = vsub.f32 0.0, %v2981
      %v3046 = vsub.f32 0.0, %v2982
      %v3047 = vsub.f32 0.0, %v2983
      %v3048 = vsub.f32 0.0, %v2984
      %v3049 = vsub.f32 0.0, %v2985
      %v3050 = vsub.f32 0.0, %v2986
      %v3051 = vsub.f32 0.0, %v2987
      %v3052 = vsub.f32 0.0, %v2988
      %v3053 = vsel %vm2989, %v3021, %v2957
      %v3054 = vsel %vm2990, %v3022, %v2958
      %v3055 = vsel %vm2991, %v3023, %v2959
      %v3056 = vsel %vm2992, %v3024, %v2960
      %v3057 = vsel %vm2993, %v3025, %v2961
      %v3058 = vsel %vm2994, %v3026, %v2962
      %v3059 = vsel %vm2995, %v3027, %v2963
      %v3060 = vsel %vm2996, %v3028, %v2964
      %v3061 = vsel %vm2997, %v3029, %v2965
      %v3062 = vsel %vm2998, %v3030, %v2966
      %v3063 = vsel %vm2999, %v3031, %v2967
      %v3064 = vsel %vm3000, %v3032, %v2968
      %v3065 = vsel %vm3001, %v3033, %v2969
      %v3066 = vsel %vm3002, %v3034, %v2970
      %v3067 = vsel %vm3003, %v3035, %v2971
      %v3068 = vsel %vm3004, %v3036, %v2972
      %v3069 = vsel %vm3005, %v3037, %v2973
      %v3070 = vsel %vm3006, %v3038, %v2974
      %v3071 = vsel %vm3007, %v3039, %v2975
      %v3072 = vsel %vm3008, %v3040, %v2976
      %v3073 = vsel %vm3009, %v3041, %v2977
      %v3074 = vsel %vm3010, %v3042, %v2978
      %v3075 = vsel %vm3011, %v3043, %v2979
      %v3076 = vsel %vm3012, %v3044, %v2980
      %v3077 = vsel %vm3013, %v3045, %v2981
      %v3078 = vsel %vm3014, %v3046, %v2982
      %v3079 = vsel %vm3015, %v3047, %v2983
      %v3080 = vsel %vm3016, %v3048, %v2984
      %v3081 = vsel %vm3017, %v3049, %v2985
      %v3082 = vsel %vm3018, %v3050, %v2986
      %v3083 = vsel %vm3019, %v3051, %v2987
      %v3084 = vsel %vm3020, %v3052, %v2988
      %v3085 = vadd.f32 %v3053, 1.0
      %v3086 = vadd.f32 %v3054, 1.0
      %v3087 = vadd.f32 %v3055, 1.0
      %v3088 = vadd.f32 %v3056, 1.0
      %v3089 = vadd.f32 %v3057, 1.0
      %v3090 = vadd.f32 %v3058, 1.0
      %v3091 = vadd.f32 %v3059, 1.0
      %v3092 = vadd.f32 %v3060, 1.0
      %v3093 = vadd.f32 %v3061, 1.0
      %v3094 = vadd.f32 %v3062, 1.0
      %v3095 = vadd.f32 %v3063, 1.0
      %v3096 = vadd.f32 %v3064, 1.0
      %v3097 = vadd.f32 %v3065, 1.0
      %v3098 = vadd.f32 %v3066, 1.0
      %v3099 = vadd.f32 %v3067, 1.0
      %v3100 = vadd.f32 %v3068, 1.0
      %v3101 = vadd.f32 %v3069, 1.0
      %v3102 = vadd.f32 %v3070, 1.0
      %v3103 = vadd.f32 %v3071, 1.0
      %v3104 = vadd.f32 %v3072, 1.0
      %v3105 = vadd.f32 %v3073, 1.0
      %v3106 = vadd.f32 %v3074, 1.0
      %v3107 = vadd.f32 %v3075, 1.0
      %v3108 = vadd.f32 %v3076, 1.0
      %v3109 = vadd.f32 %v3077, 1.0
      %v3110 = vadd.f32 %v3078, 1.0
      %v3111 = vadd.f32 %v3079, 1.0
      %v3112 = vadd.f32 %v3080, 1.0
      %v3113 = vadd.f32 %v3081, 1.0
      %v3114 = vadd.f32 %v3082, 1.0
      %v3115 = vadd.f32 %v3083, 1.0
      %v3116 = vadd.f32 %v3084, 1.0
      %v3117 = vmul.f32 %v2317, %v3085
      %v3118 = vmul.f32 %v2318, %v3086
      %v3119 = vmul.f32 %v2319, %v3087
      %v3120 = vmul.f32 %v2320, %v3088
      %v3121 = vmul.f32 %v2321, %v3089
      %v3122 = vmul.f32 %v2322, %v3090
      %v3123 = vmul.f32 %v2323, %v3091
      %v3124 = vmul.f32 %v2324, %v3092
      %v3125 = vmul.f32 %v2325, %v3093
      %v3126 = vmul.f32 %v2326, %v3094
      %v3127 = vmul.f32 %v2327, %v3095
      %v3128 = vmul.f32 %v2328, %v3096
      %v3129 = vmul.f32 %v2329, %v3097
      %v3130 = vmul.f32 %v2330, %v3098
      %v3131 = vmul.f32 %v2331, %v3099
      %v3132 = vmul.f32 %v2332, %v3100
      %v3133 = vmul.f32 %v2333, %v3101
      %v3134 = vmul.f32 %v2334, %v3102
      %v3135 = vmul.f32 %v2335, %v3103
      %v3136 = vmul.f32 %v2336, %v3104
      %v3137 = vmul.f32 %v2337, %v3105
      %v3138 = vmul.f32 %v2338, %v3106
      %v3139 = vmul.f32 %v2339, %v3107
      %v3140 = vmul.f32 %v2340, %v3108
      %v3141 = vmul.f32 %v2341, %v3109
      %v3142 = vmul.f32 %v2342, %v3110
      %v3143 = vmul.f32 %v2343, %v3111
      %v3144 = vmul.f32 %v2344, %v3112
      %v3145 = vmul.f32 %v2345, %v3113
      %v3146 = vmul.f32 %v2346, %v3114
      %v3147 = vmul.f32 %v2347, %v3115
      %v3148 = vmul.f32 %v2348, %v3116
      %3181 = vrot.lane.b32.xlu0 %v2285, 120
      %v3182 = vpop.permute.xlu0 %3181
      %3183 = vrot.lane.b32.xlu0 %v2286, 120
      %v3184 = vpop.permute.xlu0 %3183
      %3185 = vrot.lane.b32.xlu0 %v2287, 120
      %v3186 = vpop.permute.xlu0 %3185
      %3187 = vrot.lane.b32.xlu0 %v2288, 120
      %v3188 = vpop.permute.xlu0 %3187
      %3189 = vrot.lane.b32.xlu0 %v2289, 120
      %v3190 = vpop.permute.xlu0 %3189
      %3191 = vrot.lane.b32.xlu0 %v2290, 120
      %v3192 = vpop.permute.xlu0 %3191
      %3193 = vrot.lane.b32.xlu0 %v2291, 120
      %v3194 = vpop.permute.xlu0 %3193
      %3195 = vrot.lane.b32.xlu0 %v2292, 120
      %v3196 = vpop.permute.xlu0 %3195
      %3197 = vrot.lane.b32.xlu0 %v2293, 120
      %v3198 = vpop.permute.xlu0 %3197
      %3199 = vrot.lane.b32.xlu0 %v2294, 120
      %v3200 = vpop.permute.xlu0 %3199
      %3201 = vrot.lane.b32.xlu0 %v2295, 120
      %v3202 = vpop.permute.xlu0 %3201
      %3203 = vrot.lane.b32.xlu0 %v2296, 120
      %v3204 = vpop.permute.xlu0 %3203
      %3205 = vrot.lane.b32.xlu0 %v2297, 120
      %v3206 = vpop.permute.xlu0 %3205
      %3207 = vrot.lane.b32.xlu0 %v2298, 120
      %v3208 = vpop.permute.xlu0 %3207
      %3209 = vrot.lane.b32.xlu0 %v2299, 120
      %v3210 = vpop.permute.xlu0 %3209
      %3211 = vrot.lane.b32.xlu0 %v2300, 120
      %v3212 = vpop.permute.xlu0 %3211
      %3213 = vrot.lane.b32.xlu0 %v2301, 120
      %v3214 = vpop.permute.xlu0 %3213
      %3215 = vrot.lane.b32.xlu0 %v2302, 120
      %v3216 = vpop.permute.xlu0 %3215
      %3217 = vrot.lane.b32.xlu0 %v2303, 120
      %v3218 = vpop.permute.xlu0 %3217
      %3219 = vrot.lane.b32.xlu0 %v2304, 120
      %v3220 = vpop.permute.xlu0 %3219
      %3221 = vrot.lane.b32.xlu0 %v2305, 120
      %v3222 = vpop.permute.xlu0 %3221
      %3223 = vrot.lane.b32.xlu0 %v2306, 120
      %v3224 = vpop.permute.xlu0 %3223
      %3225 = vrot.lane.b32.xlu0 %v2307, 120
      %v3226 = vpop.permute.xlu0 %3225
      %3227 = vrot.lane.b32.xlu0 %v2308, 120
      %v3228 = vpop.permute.xlu0 %3227
      %3229 = vrot.lane.b32.xlu0 %v2309, 120
      %v3230 = vpop.permute.xlu0 %3229
      %3231 = vrot.lane.b32.xlu0 %v2310, 120
      %v3232 = vpop.permute.xlu0 %3231
      %3233 = vrot.lane.b32.xlu0 %v2311, 120
      %v3234 = vpop.permute.xlu0 %3233
      %3235 = vrot.lane.b32.xlu0 %v2312, 120
      %v3236 = vpop.permute.xlu0 %3235
      %3237 = vrot.lane.b32.xlu0 %v2313, 120
      %v3238 = vpop.permute.xlu0 %3237
      %3239 = vrot.lane.b32.xlu0 %v2314, 120
      %v3240 = vpop.permute.xlu0 %3239
      %3241 = vrot.lane.b32.xlu0 %v2315, 120
      %v3242 = vpop.permute.xlu0 %3241
      %3243 = vrot.lane.b32.xlu0 %v2316, 120
      %v3244 = vpop.permute.xlu0 %3243
      %v3277 = vmul.f32 %v3117, %v3182
      %v3278 = vmul.f32 %v3118, %v3184
      %v3279 = vmul.f32 %v3119, %v3186
      %v3280 = vmul.f32 %v3120, %v3188
      %v3281 = vmul.f32 %v3121, %v3190
      %v3282 = vmul.f32 %v3122, %v3192
      %v3283 = vmul.f32 %v3123, %v3194
      %v3284 = vmul.f32 %v3124, %v3196
      %v3285 = vmul.f32 %v3125, %v3198
      %v3286 = vmul.f32 %v3126, %v3200
      %v3287 = vmul.f32 %v3127, %v3202
      %v3288 = vmul.f32 %v3128, %v3204
      %v3289 = vmul.f32 %v3129, %v3206
      %v3290 = vmul.f32 %v3130, %v3208
      %v3291 = vmul.f32 %v3131, %v3210
      %v3292 = vmul.f32 %v3132, %v3212
      %v3293 = vmul.f32 %v3133, %v3214
      %v3294 = vmul.f32 %v3134, %v3216
      %v3295 = vmul.f32 %v3135, %v3218
      %v3296 = vmul.f32 %v3136, %v3220
      %v3297 = vmul.f32 %v3137, %v3222
      %v3298 = vmul.f32 %v3138, %v3224
      %v3299 = vmul.f32 %v3139, %v3226
      %v3300 = vmul.f32 %v3140, %v3228
      %v3301 = vmul.f32 %v3141, %v3230
      %v3302 = vmul.f32 %v3142, %v3232
      %v3303 = vmul.f32 %v3143, %v3234
      %v3304 = vmul.f32 %v3144, %v3236
      %v3305 = vmul.f32 %v3145, %v3238
      %v3306 = vmul.f32 %v3146, %v3240
      %v3307 = vmul.f32 %v3147, %v3242
      %v3308 = vmul.f32 %v3148, %v3244
      %v3309 = vld [vmem:[%s5] sm:$0xff]
      %v3310 = vld [vmem:[%s6] sm:$0x1]
      %v3312 = vlaneseq
      %v3313 = vshrl.u32 %v3312, 7
      %v3314 = vsub.s32 0, %v3313
      %v3315 = vrot.slane %v3310, %v3314
      %vm3317 = vcmask 64512
      %v3319 = vsel %vm3317, %v3277, 0
      %v3322 = vsel %vm3317, %v3278, 0
      %v3325 = vsel %vm3317, %v3279, 0
      %v3328 = vsel %vm3317, %v3280, 0
      %v3331 = vsel %vm3317, %v3281, 0
      %v3334 = vsel %vm3317, %v3282, 0
      %v3337 = vsel %vm3317, %v3283, 0
      %v3340 = vsel %vm3317, %v3284, 0
      %v3343 = vsel %vm3317, %v3285, 0
      %v3346 = vsel %vm3317, %v3286, 0
      %v3349 = vsel %vm3317, %v3287, 0
      %v3352 = vsel %vm3317, %v3288, 0
      %v3355 = vsel %vm3317, %v3289, 0
      %v3358 = vsel %vm3317, %v3290, 0
      %v3361 = vsel %vm3317, %v3291, 0
      %v3364 = vsel %vm3317, %v3292, 0
      %v3367 = vsel %vm3317, %v3293, 0
      %v3370 = vsel %vm3317, %v3294, 0
      %v3373 = vsel %vm3317, %v3295, 0
      %v3376 = vsel %vm3317, %v3296, 0
      %v3379 = vsel %vm3317, %v3297, 0
      %v3382 = vsel %vm3317, %v3298, 0
      %v3385 = vsel %vm3317, %v3299, 0
      %v3388 = vsel %vm3317, %v3300, 0
      %v3391 = vsel %vm3317, %v3301, 0
      %v3394 = vsel %vm3317, %v3302, 0
      %v3397 = vsel %vm3317, %v3303, 0
      %v3400 = vsel %vm3317, %v3304, 0
      %v3403 = vsel %vm3317, %v3305, 0
      %v3406 = vsel %vm3317, %v3306, 0
      %v3409 = vsel %vm3317, %v3307, 0
      %v3412 = vsel %vm3317, %v3308, 0
      %3414 = vmatprep.subr.mxu0 0.0
      %3415 = vmatpush1.msra.mxu0 0.0
      %3416 = vmatprep.subr.mxu0 0.0
      %3417 = vmatpush1.msra.mxu0 0.0
      %3418 = vmatprep.subr.mxu0 0.0
      %3419 = vmatpush1.msra.mxu0 0.0
      %3420 = vmatprep.subr.mxu0 0.0
      %3421 = vmatpush1.msra.mxu0 0.0
      %3422 = vmatprep.subr.mxu0 0.0
      %3423 = vmatpush1.msra.mxu0 0.0
      %3424 = vmatprep.subr.mxu0 0.0
      %3425 = vmatpush1.msra.mxu0 0.0
      %3426 = vmatprep.subr.mxu0 0.0
      %3427 = vmatpush1.msra.mxu0 0.0
      %3428 = vmatprep.subr.mxu0 0.0
      %3429 = vmatpush1.msra.mxu0 0.0
      %3430 = vmatprep.subr.mxu0 0.0
      %3431 = vmatpush1.msra.mxu0 0.0
      %3432 = vmatprep.subr.mxu0 0.0
      %3433 = vmatpush1.msra.mxu0 0.0
      %3434 = vmatprep.subr.mxu0 0.0
      %3435 = vmatpush1.msra.mxu0 0.0
      %3436 = vmatprep.subr.mxu0 0.0
      %3437 = vmatpush1.msra.mxu0 0.0
      %3438 = vmatprep.subr.mxu0 0.0
      %3439 = vmatpush1.msra.mxu0 0.0
      %3440 = vmatprep.subr.mxu0 0.0
      %3441 = vmatpush1.msra.mxu0 0.0
      %3442 = vmatprep.subr.mxu0 0.0
      %3443 = vmatpush1.msra.mxu0 0.0
      %3444 = vmatprep.subr.mxu0 0.0
      %3445 = vmatpush1.msra.mxu0 %v3309
      %3446 = vmatprep.subr.mxu0 0.0
      %3447 = vmatpush2.msra.mxu0 0.0
      %3448 = vmatprep.subr.mxu0 0.0
      %3449 = vmatpush2.msra.mxu0 0.0
      %3450 = vmatprep.subr.mxu0 0.0
      %3451 = vmatpush2.msra.mxu0 0.0
      %3452 = vmatprep.subr.mxu0 0.0
      %3453 = vmatpush2.msra.mxu0 0.0
      %3454 = vmatprep.subr.mxu0 0.0
      %3455 = vmatpush2.msra.mxu0 0.0
      %3456 = vmatprep.subr.mxu0 0.0
      %3457 = vmatpush2.msra.mxu0 0.0
      %3458 = vmatprep.subr.mxu0 0.0
      %3459 = vmatpush2.msra.mxu0 0.0
      %3460 = vmatprep.subr.mxu0 0.0
      %3461 = vmatpush2.msra.mxu0 0.0
      %3462 = vmatprep.subr.mxu0 0.0
      %3463 = vmatpush2.msra.mxu0 0.0
      %3464 = vmatprep.subr.mxu0 0.0
      %3465 = vmatpush2.msra.mxu0 0.0
      %3466 = vmatprep.subr.mxu0 0.0
      %3467 = vmatpush2.msra.mxu0 0.0
      %3468 = vmatprep.subr.mxu0 0.0
      %3469 = vmatpush2.msra.mxu0 0.0
      %3470 = vmatprep.subr.mxu0 0.0
      %3471 = vmatpush2.msra.mxu0 0.0
      %3472 = vmatprep.subr.mxu0 0.0
      %3473 = vmatpush2.msra.mxu0 0.0
      %3474 = vmatprep.subr.mxu0 0.0
      %3475 = vmatpush2.msra.mxu0 0.0
      %3476 = vmatprep.subr.mxu0 0.0
      %3477 = vmatpush2.msra.mxu0 0.0
      %3478 = vmatprep.mubr.f32.mxu0 0.0
      %3479 = vmatmul.mubr.f32.gmra.mxu0 %v3319
      %v3480 = vpop.f32.mrf.mxu0
      %v3481 = vadd.f32 %v3315, %v3480
      %v3482 = vpop.f32.mrf.mxu0
      %3483 = vmatprep.mubr.f32.mxu0 0.0
      %3484 = vmatmul.mubr.f32.gmra.mxu0 %v3322
      %v3485 = vpop.f32.mrf.mxu0
      %v3486 = vadd.f32 %v3315, %v3485
      %v3487 = vpop.f32.mrf.mxu0
      %3488 = vmatprep.mubr.f32.mxu0 0.0
      %3489 = vmatmul.mubr.f32.gmra.mxu0 %v3325
      %v3490 = vpop.f32.mrf.mxu0
      %v3491 = vadd.f32 %v3315, %v3490
      %v3492 = vpop.f32.mrf.mxu0
      %3493 = vmatprep.mubr.f32.mxu0 0.0
      %3494 = vmatmul.mubr.f32.gmra.mxu0 %v3328
      %v3495 = vpop.f32.mrf.mxu0
      %v3496 = vadd.f32 %v3315, %v3495
      %v3497 = vpop.f32.mrf.mxu0
      %3498 = vmatprep.mubr.f32.mxu0 0.0
      %3499 = vmatmul.mubr.f32.gmra.mxu0 %v3331
      %v3500 = vpop.f32.mrf.mxu0
      %v3501 = vadd.f32 %v3315, %v3500
      %v3502 = vpop.f32.mrf.mxu0
      %3503 = vmatprep.mubr.f32.mxu0 0.0
      %3504 = vmatmul.mubr.f32.gmra.mxu0 %v3334
      %v3505 = vpop.f32.mrf.mxu0
      %v3506 = vadd.f32 %v3315, %v3505
      %v3507 = vpop.f32.mrf.mxu0
      %3508 = vmatprep.mubr.f32.mxu0 0.0
      %3509 = vmatmul.mubr.f32.gmra.mxu0 %v3337
      %v3510 = vpop.f32.mrf.mxu0
      %v3511 = vadd.f32 %v3315, %v3510
      %v3512 = vpop.f32.mrf.mxu0
      %3513 = vmatprep.mubr.f32.mxu0 0.0
      %3514 = vmatmul.mubr.f32.gmra.mxu0 %v3340
      %v3515 = vpop.f32.mrf.mxu0
      %v3516 = vadd.f32 %v3315, %v3515
      %v3517 = vpop.f32.mrf.mxu0
      %3518 = vmatprep.mubr.f32.mxu0 0.0
      %3519 = vmatmul.mubr.f32.gmra.mxu0 %v3343
      %v3520 = vpop.f32.mrf.mxu0
      %v3521 = vadd.f32 %v3315, %v3520
      %v3522 = vpop.f32.mrf.mxu0
      %3523 = vmatprep.mubr.f32.mxu0 0.0
      %3524 = vmatmul.mubr.f32.gmra.mxu0 %v3346
      %v3525 = vpop.f32.mrf.mxu0
      %v3526 = vadd.f32 %v3315, %v3525
      %v3527 = vpop.f32.mrf.mxu0
      %3528 = vmatprep.mubr.f32.mxu0 0.0
      %3529 = vmatmul.mubr.f32.gmra.mxu0 %v3349
      %v3530 = vpop.f32.mrf.mxu0
      %v3531 = vadd.f32 %v3315, %v3530
      %v3532 = vpop.f32.mrf.mxu0
      %3533 = vmatprep.mubr.f32.mxu0 0.0
      %3534 = vmatmul.mubr.f32.gmra.mxu0 %v3352
      %v3535 = vpop.f32.mrf.mxu0
      %v3536 = vadd.f32 %v3315, %v3535
      %v3537 = vpop.f32.mrf.mxu0
      %3538 = vmatprep.mubr.f32.mxu0 0.0
      %3539 = vmatmul.mubr.f32.gmra.mxu0 %v3355
      %v3540 = vpop.f32.mrf.mxu0
      %v3541 = vadd.f32 %v3315, %v3540
      %v3542 = vpop.f32.mrf.mxu0
      %3543 = vmatprep.mubr.f32.mxu0 0.0
      %3544 = vmatmul.mubr.f32.gmra.mxu0 %v3358
      %v3545 = vpop.f32.mrf.mxu0
      %v3546 = vadd.f32 %v3315, %v3545
      %v3547 = vpop.f32.mrf.mxu0
      %3548 = vmatprep.mubr.f32.mxu0 0.0
      %3549 = vmatmul.mubr.f32.gmra.mxu0 %v3361
      %v3550 = vpop.f32.mrf.mxu0
      %v3551 = vadd.f32 %v3315, %v3550
      %v3552 = vpop.f32.mrf.mxu0
      %3553 = vmatprep.mubr.f32.mxu0 0.0
      %3554 = vmatmul.mubr.f32.gmra.mxu0 %v3364
      %v3555 = vpop.f32.mrf.mxu0
      %v3556 = vadd.f32 %v3315, %v3555
      %v3557 = vpop.f32.mrf.mxu0
      %3558 = vmatprep.mubr.f32.mxu0 0.0
      %3559 = vmatmul.mubr.f32.gmra.mxu0 %v3367
      %v3560 = vpop.f32.mrf.mxu0
      %v3561 = vadd.f32 %v3315, %v3560
      %v3562 = vpop.f32.mrf.mxu0
      %3563 = vmatprep.mubr.f32.mxu0 0.0
      %3564 = vmatmul.mubr.f32.gmra.mxu0 %v3370
      %v3565 = vpop.f32.mrf.mxu0
      %v3566 = vadd.f32 %v3315, %v3565
      %v3567 = vpop.f32.mrf.mxu0
      %3568 = vmatprep.mubr.f32.mxu0 0.0
      %3569 = vmatmul.mubr.f32.gmra.mxu0 %v3373
      %v3570 = vpop.f32.mrf.mxu0
      %v3571 = vadd.f32 %v3315, %v3570
      %v3572 = vpop.f32.mrf.mxu0
      %3573 = vmatprep.mubr.f32.mxu0 0.0
      %3574 = vmatmul.mubr.f32.gmra.mxu0 %v3376
      %v3575 = vpop.f32.mrf.mxu0
      %v3576 = vadd.f32 %v3315, %v3575
      %v3577 = vpop.f32.mrf.mxu0
      %3578 = vmatprep.mubr.f32.mxu0 0.0
      %3579 = vmatmul.mubr.f32.gmra.mxu0 %v3379
      %v3580 = vpop.f32.mrf.mxu0
      %v3581 = vadd.f32 %v3315, %v3580
      %v3582 = vpop.f32.mrf.mxu0
      %3583 = vmatprep.mubr.f32.mxu0 0.0
      %3584 = vmatmul.mubr.f32.gmra.mxu0 %v3382
      %v3585 = vpop.f32.mrf.mxu0
      %v3586 = vadd.f32 %v3315, %v3585
      %v3587 = vpop.f32.mrf.mxu0
      %3588 = vmatprep.mubr.f32.mxu0 0.0
      %3589 = vmatmul.mubr.f32.gmra.mxu0 %v3385
      %v3590 = vpop.f32.mrf.mxu0
      %v3591 = vadd.f32 %v3315, %v3590
      %v3592 = vpop.f32.mrf.mxu0
      %3593 = vmatprep.mubr.f32.mxu0 0.0
      %3594 = vmatmul.mubr.f32.gmra.mxu0 %v3388
      %v3595 = vpop.f32.mrf.mxu0
      %v3596 = vadd.f32 %v3315, %v3595
      %v3597 = vpop.f32.mrf.mxu0
      %3598 = vmatprep.mubr.f32.mxu0 0.0
      %3599 = vmatmul.mubr.f32.gmra.mxu0 %v3391
      %v3600 = vpop.f32.mrf.mxu0
      %v3601 = vadd.f32 %v3315, %v3600
      %v3602 = vpop.f32.mrf.mxu0
      %3603 = vmatprep.mubr.f32.mxu0 0.0
      %3604 = vmatmul.mubr.f32.gmra.mxu0 %v3394
      %v3605 = vpop.f32.mrf.mxu0
      %v3606 = vadd.f32 %v3315, %v3605
      %v3607 = vpop.f32.mrf.mxu0
      %3608 = vmatprep.mubr.f32.mxu0 0.0
      %3609 = vmatmul.mubr.f32.gmra.mxu0 %v3397
      %v3610 = vpop.f32.mrf.mxu0
      %v3611 = vadd.f32 %v3315, %v3610
      %v3612 = vpop.f32.mrf.mxu0
      %3613 = vmatprep.mubr.f32.mxu0 0.0
      %3614 = vmatmul.mubr.f32.gmra.mxu0 %v3400
      %v3615 = vpop.f32.mrf.mxu0
      %v3616 = vadd.f32 %v3315, %v3615
      %v3617 = vpop.f32.mrf.mxu0
      %3618 = vmatprep.mubr.f32.mxu0 0.0
      %3619 = vmatmul.mubr.f32.gmra.mxu0 %v3403
      %v3620 = vpop.f32.mrf.mxu0
      %v3621 = vadd.f32 %v3315, %v3620
      %v3622 = vpop.f32.mrf.mxu0
      %3623 = vmatprep.mubr.f32.mxu0 0.0
      %3624 = vmatmul.mubr.f32.gmra.mxu0 %v3406
      %v3625 = vpop.f32.mrf.mxu0
      %v3626 = vadd.f32 %v3315, %v3625
      %v3627 = vpop.f32.mrf.mxu0
      %3628 = vmatprep.mubr.f32.mxu0 0.0
      %3629 = vmatmul.mubr.f32.gmra.mxu0 %v3409
      %v3630 = vpop.f32.mrf.mxu0
      %v3631 = vadd.f32 %v3315, %v3630
      %v3632 = vpop.f32.mrf.mxu0
      %3633 = vmatprep.mubr.f32.mxu0 0.0
      %3634 = vmatmul.mubr.f32.gmra.mxu0 %v3412
      %v3635 = vpop.f32.mrf.mxu0
      %v3636 = vadd.f32 %v3315, %v3635
      %v3637 = vpop.f32.mrf.mxu0
      %3638 = vdwg.mxu0
      %3639 = vst.msk [vmem:[%s278] sm:$0xff] %vm319, %v3481
      %3640 = vst.msk [vmem:[%s278 + $0x8] sm:$0xff] %vm319, %v3486
      %3641 = vst.msk [vmem:[%s278 + $0x10] sm:$0xff] %vm319, %v3491
      %3642 = vst.msk [vmem:[%s278 + $0x18] sm:$0xff] %vm319, %v3496
      %3643 = vst.msk [vmem:[%s278 + $0x20] sm:$0xff] %vm319, %v3501
      %3644 = vst.msk [vmem:[%s278 + $0x28] sm:$0xff] %vm319, %v3506
      %3645 = vst.msk [vmem:[%s278 + $0x30] sm:$0xff] %vm319, %v3511
      %3646 = vst.msk [vmem:[%s278 + $0x38] sm:$0xff] %vm319, %v3516
      %3647 = vst.msk [vmem:[%s278 + $0x40] sm:$0xff] %vm319, %v3521
      %3648 = vst.msk [vmem:[%s278 + $0x48] sm:$0xff] %vm319, %v3526
      %3649 = vst.msk [vmem:[%s278 + $0x50] sm:$0xff] %vm319, %v3531
      %3650 = vst.msk [vmem:[%s278 + $0x58] sm:$0xff] %vm319, %v3536
      %3651 = vst.msk [vmem:[%s278 + $0x60] sm:$0xff] %vm319, %v3541
      %3652 = vst.msk [vmem:[%s278 + $0x68] sm:$0xff] %vm319, %v3546
      %3653 = vst.msk [vmem:[%s278 + $0x70] sm:$0xff] %vm319, %v3551
      %3654 = vst.msk [vmem:[%s278 + $0x78] sm:$0xff] %vm319, %v3556
      %3655 = vst.msk [vmem:[%s278 + $0x80] sm:$0xff] %vm319, %v3561
      %3656 = vst.msk [vmem:[%s278 + $0x88] sm:$0xff] %vm319, %v3566
      %3657 = vst.msk [vmem:[%s278 + $0x90] sm:$0xff] %vm319, %v3571
      %3658 = vst.msk [vmem:[%s278 + $0x98] sm:$0xff] %vm319, %v3576
      %3659 = vst.msk [vmem:[%s278 + $0xa0] sm:$0xff] %vm319, %v3581
      %3660 = vst.msk [vmem:[%s278 + $0xa8] sm:$0xff] %vm319, %v3586
      %3661 = vst.msk [vmem:[%s278 + $0xb0] sm:$0xff] %vm319, %v3591
      %3662 = vst.msk [vmem:[%s278 + $0xb8] sm:$0xff] %vm319, %v3596
      %3663 = vst.msk [vmem:[%s278 + $0xc0] sm:$0xff] %vm319, %v3601
      %3664 = vst.msk [vmem:[%s278 + $0xc8] sm:$0xff] %vm319, %v3606
      %3665 = vst.msk [vmem:[%s278 + $0xd0] sm:$0xff] %vm319, %v3611
      %3666 = vst.msk [vmem:[%s278 + $0xd8] sm:$0xff] %vm319, %v3616
      %3667 = vst.msk [vmem:[%s278 + $0xe0] sm:$0xff] %vm319, %v3621
      %3668 = vst.msk [vmem:[%s278 + $0xe8] sm:$0xff] %vm319, %v3626
      %3669 = vst.msk [vmem:[%s278 + $0xf0] sm:$0xff] %vm319, %v3631
      %3670 = vst.msk [vmem:[%s278 + $0xf8] sm:$0xff] %vm319, %v3636
      %p3671 = scmp.lt.s32.totalorder %s18, 1
      %s3672 = scalar_select %p3671, %s18, 1
      %s3673 = smul.addr %s3672, 32
      %s3674 = smul.addr %s3673, 8
      %s3675 = scalar_lea.vmem %s7, %s3674
      // Predicated region
      $region49: #{tpu_custom_call.1} parent=47 // pred_check
        %p3676 = pneg %p188
      $region50: #{tpu_custom_call.1} parent=47 // pred_check_branch
        %3678 = sbr.rel (%p3676) target = $region52
      $region51: #{tpu_custom_call.1} parent=47 // pred_region
        _
      $region52: #{tpu_custom_call.1} parent=47 // pred_fallthru
        _
    $region48: #{tpu_custom_call.1} parent=5 // pred_fallthru
      _
    %p3679 = scmp.le.s32.totalorder 2, %s13
    // Predicated region
    $region53: #{tpu_custom_call.1} parent=5 // pred_check
      %p3680 = pneg %p3679
    $region54: #{tpu_custom_call.1} parent=5 // pred_check_branch
      %3682 = sbr.rel (%p3680) target = $region56
    $region55: #{tpu_custom_call.1} parent=5 // pred_region
      %s3683 = ssub.s32 %s13, 2
      // Predicated region
      $region57: #{tpu_custom_call.1} parent=55 // pred_check
        %p3684 = pneg %p194
      $region58: #{tpu_custom_call.1} parent=55 // pred_check_branch
        %3686 = sbr.rel (%p3684) target = $region60
      $region59: #{tpu_custom_call.1} parent=55 // pred_region
        %p3687 = scmp.lt.s32.totalorder %s19, 1
        %s3688 = scalar_select %p3687, %s19, 1
        %s3689 = smul.addr %s3688, 32
        %s3690 = smul.addr %s3689, 8
        %s3691 = scalar_lea.vmem %s7, %s3690
      $region60: #{tpu_custom_call.1} parent=55 // pred_fallthru
        _
    $region56: #{tpu_custom_call.1} parent=5 // pred_fallthru
      _
  $region6: #{tpu_custom_call.1} parent=0 // loop_footer
    %s17 = sadd.s32 1, %s13
  $region7: #{tpu_custom_call.1} parent=0 // loop_footer_branch
    %12 = sbr.rel target = $region3
  $region8: #{tpu_custom_call.1} parent=0 // loop_exit
    _

</llo_original>
